<compile_context>
chip_gen: v5e
topology: v5e:2x2
jax: 0.10.0
libtpu: 0.0.40
codegen_flags: <defaults>
</compile_context>

<pallas_src>
import functools

import jax
import jax.numpy as jnp
from jax.experimental import pallas as pl
from jax.experimental.pallas import tpu as pltpu

EPS = 1e-5
LANE = 128


def _round_up(v, m):
    return (v + m - 1) // m * m


def _vmem_limit_bytes():
    """Generation-dependent VMEM cap (v5e/v6e: 128 MiB physical, v7x: 64 MiB)."""
    cap = 128 * 1024 * 1024
    try:
        cap = int(getattr(pltpu.get_tpu_info(), "vmem_capacity_bytes", cap))
    except Exception:
        pass
    return min(cap * 3 // 4, 100 * 1024 * 1024)


# --------------------------------------------------------------------------
# Kernel 1: conv1 as one lane-dense long-K matmul (im2col built in wrapper)
#           + masked per-image channel sum / sum-of-squares for BN1.
# --------------------------------------------------------------------------
def _conv1_stats_kernel(mask_ref, p_ref, w_ref, raw_ref, stats_ref):
    """mask_ref : (Mp, 1) f32    1.0 for valid pixels, 0.0 for junk columns
       p_ref    : (1, Mp, K1p)   conv1 im2col patches, compute dtype
       w_ref    : (K1p, Cpo)     conv1 im2col weight, compute dtype
       raw_ref  : (1, Mp, Cpo)   raw conv1 output (pre-BN), compute dtype
       stats_ref: (1, 2, Cpo) f32  [sum, sum_sq] over valid pixels of this image
    """
    acc = jnp.dot(p_ref[0], w_ref[...], preferred_element_type=jnp.float32)
    raw_ref[0] = acc.astype(raw_ref.dtype)
    masked = acc * mask_ref[...]                       # zero junk-column rows
    stats_ref[0, 0:1, :] = jnp.sum(masked, axis=0, keepdims=True)
    stats_ref[0, 1:2, :] = jnp.sum(masked * acc, axis=0, keepdims=True)


# --------------------------------------------------------------------------
# Kernel 2: apply BN1 + ReLU, then conv2 via a flat padded-width im2col slab
#           (9 contiguous slices, one long-K dot) + masked BN2 partial stats.
# --------------------------------------------------------------------------
def _bnrelu_conv2_stats_kernel(Wp, mask_ref, raw1_ref, s_ref, b_ref, w_ref,
                               raw2_ref, stats_ref, yflat_ref, patch_ref):
    """mask_ref : (Mp, 1) f32
       raw1_ref : (1, Mp, C)  compute dtype, Mp = H*(W+2) (2 junk cols per row)
       s_ref/b_ref : (1, C) f32   folded BN1 scale / shift
       w_ref    : (9*C, C)    conv2 im2col weight, compute dtype
       raw2_ref : (1, Mp, C)  compute dtype
       stats_ref: (1, 2, C) f32
       yflat_ref: (NROWS, C)  VMEM scratch: flat zero-padded activation
       patch_ref: (Mp, 9*C)   VMEM scratch: im2col slab
    """
    Mp, C = raw1_ref.shape[1], raw1_ref.shape[2]
    nrows = yflat_ref.shape[0]

    # BN1 + ReLU in f32; junk columns forced to 0 (they become conv2's
    # horizontal zero padding in the flat layout below).
    y = jnp.maximum(raw1_ref[0].astype(jnp.float32) * s_ref[...] + b_ref[...], 0.0)
    y = y * mask_ref[...]

    # Flat padded activation: yflat[r*Wp + c] == ypad(r, c) of the usual
    # (H+2, W+2) zero-padded activation, so tap (ky, kx) of output pixel m
    # lives at yflat[m + ky*Wp + kx].  One contiguous interior store.
    yflat_ref[0:Wp + 1, :] = jnp.zeros((Wp + 1, C), yflat_ref.dtype)
    yflat_ref[Wp + 1:Wp + 1 + Mp, :] = y.astype(yflat_ref.dtype)
    yflat_ref[Wp + 1 + Mp:nrows, :] = jnp.zeros((nrows - Wp - 1 - Mp, C),
                                                yflat_ref.dtype)

    # im2col: 9 contiguous sublane-offset slices (no strided repacks).
    for t in range(9):
        ky, kx = divmod(t, 3)
        off = ky * Wp + kx
        patch_ref[:, t * C:(t + 1) * C] = yflat_ref[off:off + Mp, :]

    # One long-K MXU matmul, f32 accumulation.
    acc = jnp.dot(patch_ref[...], w_ref[...], preferred_element_type=jnp.float32)

    raw2_ref[0] = acc.astype(raw2_ref.dtype)
    masked = acc * mask_ref[...]
    stats_ref[0, 0:1, :] = jnp.sum(masked, axis=0, keepdims=True)
    stats_ref[0, 1:2, :] = jnp.sum(masked * acc, axis=0, keepdims=True)


# --------------------------------------------------------------------------
# Wrapper
# --------------------------------------------------------------------------
def _finalize_bn(stats, gamma_pad, beta_pad, m_total):
    """Fold global batch stats + affine params into per-channel scale/shift."""
    total = jnp.sum(stats.astype(jnp.float32), axis=0)          # (2, Cp)
    mean = total[0] / m_total
    var = jnp.maximum(total[1] / m_total - mean * mean, 0.0)     # one-pass variance
    inv = jax.lax.rsqrt(var + EPS)
    scale = gamma_pad[0] * inv
    shift = beta_pad[0] - mean * scale
    return scale.reshape(1, -1), shift.reshape(1, -1)


@functools.partial(jax.jit, static_argnames=("compute_dtype",))
def double_conv_pallas(x_nchw, params, compute_dtype=jnp.bfloat16):
    """DoubleConv forward.  x_nchw: (N, Cin, H, W) float32 (PyTorch layout).

    compute_dtype is the MXU / intermediate-storage dtype (bf16 by default);
    accumulation and all BatchNorm math stay in float32.
    """
    w1, b1, g1, bt1, w2, b2, g2, bt2 = params
    del b1, b2  # conv bias cancels exactly under training-mode BatchNorm
    N, Cin, H, W = x_nchw.shape
    Cout = w1.shape[0]

    Wp = W + 2                       # padded row width (2 junk cols per row)
    Mp = H * Wp                      # flat rows per image
    K1 = 9 * Cin
    K1p = _round_up(K1, LANE)        # conv1 K: fold taps first, then lane-pad
    Cpo = _round_up(Cout, LANE)
    nrows = _round_up((H + 2) * Wp + 2, 8)
    m_total = float(N * H * W)       # junk columns are masked out of the stats

    # ---- conv1 im2col in the wrapper (tiny Cin: no per-tap 128 padding) -----
    x = jnp.transpose(x_nchw, (0, 2, 3, 1)).astype(jnp.float32)   # NHWC
    x = jnp.pad(x, ((0, 0), (1, 1), (1, 3), (0, 0)))              # rows +1/+1, cols +1/+3
    taps = [x[:, ky:ky + H, kx:kx + Wp, :] for ky in range(3) for kx in range(3)]
    patches = jnp.concatenate(taps, axis=-1).reshape(N, Mp, K1)
    patches = jnp.pad(patches, ((0, 0), (0, 0), (0, K1p - K1))).astype(compute_dtype)
    # TODO(synk): for large Cin (deeper UNet blocks) conv1 should reuse conv2's
    # in-kernel flat-slab path instead of a 9x-inflated HBM patch tensor.

    # ---- weights -> im2col layout, lane-padded ------------------------------
    w1m = jnp.transpose(w1, (2, 3, 1, 0)).reshape(K1, Cout).astype(jnp.float32)
    w1m = jnp.pad(w1m, ((0, K1p - K1), (0, Cpo - Cout))).astype(compute_dtype)

    w2k = jnp.transpose(w2, (2, 3, 1, 0)).astype(jnp.float32)     # (3,3,Cout,Cout)
    w2k = jnp.pad(w2k, ((0, 0), (0, 0), (0, Cpo - Cout), (0, Cpo - Cout)))
    w2m = w2k.reshape(9 * Cpo, Cpo).astype(compute_dtype)

    def pad_vec(v, fill):
        return jnp.pad(v.astype(jnp.float32), (0, Cpo - Cout),
                       constant_values=fill).reshape(1, Cpo)

    g1p, bt1p = pad_vec(g1, 1.0), pad_vec(bt1, 0.0)
    g2p, bt2p = pad_vec(g2, 1.0), pad_vec(bt2, 0.0)

    # valid-pixel mask over the padded-width rows (1.0 real, 0.0 junk column)
    mask = ((jnp.arange(Mp, dtype=jnp.int32) % Wp) < W).astype(jnp.float32)
    mask = mask.reshape(Mp, 1)

    cparams = pltpu.CompilerParams(
        dimension_semantics=("parallel",),            # megacore over the batch
        vmem_limit_bytes=_vmem_limit_bytes())         # generation-dependent

    mask_spec = pl.BlockSpec((Mp, 1), lambda n: (0, 0))
    vec_spec = pl.BlockSpec((1, Cpo), lambda n: (0, 0))
    img_spec = pl.BlockSpec((1, Mp, Cpo), lambda n: (n, 0, 0))
    stat_spec = pl.BlockSpec((1, 2, Cpo), lambda n: (n, 0, 0))

    # ------------------ conv1 + per-image BN1 partial stats ------------------
    raw1, st1 = pl.pallas_call(
        _conv1_stats_kernel,
        grid=(N,),
        in_specs=[mask_spec,
                  pl.BlockSpec((1, Mp, K1p), lambda n: (n, 0, 0)),
                  pl.BlockSpec((K1p, Cpo), lambda n: (0, 0))],
        out_specs=[img_spec, stat_spec],
        out_shape=[jax.ShapeDtypeStruct((N, Mp, Cpo), compute_dtype),
                   jax.ShapeDtypeStruct((N, 2, Cpo), jnp.float32)],
        compiler_params=cparams,
    )(mask, patches, w1m)

    scale1, shift1 = _finalize_bn(st1, g1p, bt1p, m_total)

    # --------- BN1 apply + ReLU + conv2 + per-image BN2 partial stats --------
    raw2, st2 = pl.pallas_call(
        functools.partial(_bnrelu_conv2_stats_kernel, Wp),
        grid=(N,),
        in_specs=[mask_spec, img_spec, vec_spec, vec_spec,
                  pl.BlockSpec((9 * Cpo, Cpo), lambda n: (0, 0))],
        out_specs=[img_spec, stat_spec],
        out_shape=[jax.ShapeDtypeStruct((N, Mp, Cpo), compute_dtype),
                   jax.ShapeDtypeStruct((N, 2, Cpo), jnp.float32)],
        scratch_shapes=[pltpu.VMEM((nrows, Cpo), compute_dtype),
                        pltpu.VMEM((Mp, 9 * Cpo), compute_dtype)],
        compiler_params=cparams,
    )(mask, raw1, scale1, shift1, w2m)
    # TODO(synk): at large H*W (v7x, 64 MiB VMEM) this kernel needs a row-tiled
    # halo grid and/or a 3-way K split of the patch slab; whole-image blocks
    # comfortably fit VMEM at UNet-block sizes like these.

    scale2, shift2 = _finalize_bn(st2, g2p, bt2p, m_total)

    # ---- fused XLA epilogue: BN2 + ReLU + crop + NCHW transpose (one pass) ---
    y2 = raw2.reshape(N, H, Wp, Cpo)[:, :, :W, :Cout].astype(jnp.float32)
    y2 = jnp.maximum(y2 * scale2[0, :Cout] + shift2[0, :Cout], 0.0)
    return jnp.transpose(y2, (0, 3, 1, 2))


# --------------------------------------------------------------------------
# Pure-JAX reference (mirrors PyTorch training-mode forward).
# --------------------------------------------------------------------------
def double_conv_reference(x_nchw, params, compute_dtype=jnp.float32):
    w1, b1, g1, bt1, w2, b2, g2, bt2 = params
    prec = (jax.lax.Precision.HIGHEST if compute_dtype == jnp.float32
            else jax.lax.Precision.DEFAULT)

    def conv(x, w, b):
        y = jax.lax.conv_general_dilated(
            x.astype(compute_dtype), w.astype(compute_dtype),
            window_strides=(1, 1), padding="SAME",
            dimension_numbers=("NCHW", "OIHW", "NCHW"),
            precision=prec, preferred_element_type=jnp.float32)
        return y + b[None, :, None, None].astype(jnp.float32)

    def bn_relu(x, g, bt):
        mean = jnp.mean(x, axis=(0, 2, 3), keepdims=True)
        var = jnp.mean((x - mean) ** 2, axis=(0, 2, 3), keepdims=True)
        y = (x - mean) * jax.lax.rsqrt(var + EPS)
        y = y * g[None, :, None, None] + bt[None, :, None, None]
        return jnp.maximum(y, 0.0)

    y = bn_relu(conv(x_nchw, w1, b1), g1, bt1)
    return bn_relu(conv(y, w2, b2), g2, bt2)


def init_params(key, in_ch, out_ch):
    ks = jax.random.split(key, 8)
    s1 = 1.0 / jnp.sqrt(in_ch * 9.0)
    s2 = 1.0 / jnp.sqrt(out_ch * 9.0)
    w1 = jax.random.uniform(ks[0], (out_ch, in_ch, 3, 3), jnp.float32, -s1, s1)
    b1 = jax.random.uniform(ks[1], (out_ch,), jnp.float32, -s1, s1)
    w2 = jax.random.uniform(ks[2], (out_ch, out_ch, 3, 3), jnp.float32, -s2, s2)
    b2 = jax.random.uniform(ks[3], (out_ch,), jnp.float32, -s2, s2)
    g1 = 1.0 + 0.1 * jax.random.normal(ks[4], (out_ch,), jnp.float32)
    bt1 = 0.1 * jax.random.normal(ks[5], (out_ch,), jnp.float32)
    g2 = 1.0 + 0.1 * jax.random.normal(ks[6], (out_ch,), jnp.float32)
    bt2 = 0.1 * jax.random.normal(ks[7], (out_ch,), jnp.float32)
    return (w1, b1, g1, bt1, w2, b2, g2, bt2)


if __name__ == "__main__":
    key = jax.random.PRNGKey(0)
    k_x, k_p = jax.random.split(key)

    N, Cin, Cout, H, W = 2, 4, 8, 16, 16
    x = jax.random.normal(k_x, (N, Cin, H, W), jnp.float32)
    params = init_params(k_p, Cin, Cout)

    # f32 path: strict structural check (tap offsets, masking, BN folding).
    out_f32 = jax.block_until_ready(
        double_conv_pallas(x, params, compute_dtype=jnp.float32))
    ref_f32 = jax.block_until_ready(
        double_conv_reference(x, params, compute_dtype=jnp.float32))
    assert out_f32.shape == (N, Cout, H, W), out_f32.shape
    err_f32 = float(jnp.max(jnp.abs(out_f32 - ref_f32)))
    assert err_f32 < 2e-2, f"f32 path max abs err {err_f32}"

    # Default bf16 path (bf16 MXU inputs AND bf16 intermediates) vs a
    # bf16-input / f32-accumulate reference: loose tolerance.
    out_bf16 = jax.block_until_ready(double_conv_pallas(x, params))
    ref_bf16 = jax.block_until_ready(
        double_conv_reference(x, params, compute_dtype=jnp.bfloat16))
    err_bf16 = float(jnp.max(jnp.abs(out_bf16 - ref_bf16)))
    assert err_bf16 < 1e-1, f"bf16 path max abs err {err_bf16}"

    print("KERNEL_OK")
</pallas_src>

<mosaic_0001>
module attributes {stable_mosaic.version = 11 : i64} {
  func.func @_conv1_stats_kernel(%arg0: i32, %arg1: memref<288x1xf32, #tpu.memory_space<vmem>>, %arg2: memref<1x288x128xf32, #tpu.memory_space<vmem>>, %arg3: memref<128x128xf32, #tpu.memory_space<vmem>>, %arg4: memref<1x288x128xf32, #tpu.memory_space<vmem>>, %arg5: memref<1x2x128xf32, #tpu.memory_space<vmem>>) attributes {dimension_semantics = [#tpu.dimension_semantics<parallel>], iteration_bounds = array<i64: 2>, scalar_prefetch = 0 : i64, scratch_operands = 0 : i64, tpu.core_type = #tpu.core_type<tc>, window_params = [{pipeline_mode = #tpu.pipeline_mode<synchronous>, transform_indices = @transform_0, window_bounds = array<i64: 288, 1>}, {transform_indices = @transform_1, window_bounds = array<i64: 1, 288, 128>}, {pipeline_mode = #tpu.pipeline_mode<synchronous>, transform_indices = @transform_2, window_bounds = array<i64: 128, 128>}, {transform_indices = @transform_3, window_bounds = array<i64: 1, 288, 128>}, {transform_indices = @transform_4, window_bounds = array<i64: 1, 2, 128>}]} {
    %c0 = arith.constant 0 : index
    %c0_0 = arith.constant 0 : index
    %c0_1 = arith.constant 0 : index
    %0 = vector.load %arg2[%c0, %c0_0, %c0_1] : memref<1x288x128xf32, #tpu.memory_space<vmem>>, vector<1x288x128xf32>
    %1 = vector.shape_cast %0 : vector<1x288x128xf32> to vector<288x128xf32>
    %c0_2 = arith.constant 0 : index
    %c0_3 = arith.constant 0 : index
    %2 = vector.load %arg3[%c0_2, %c0_3] : memref<128x128xf32, #tpu.memory_space<vmem>>, vector<128x128xf32>
    %cst = arith.constant dense<0.000000e+00> : vector<288x128xf32>
    %3 = tpu.matmul %1, %2, %cst {dimension_numbers = #tpu.dot_dimension_numbers<[1], [0], [0], [1], [0, 0, 1, 1], [], []>} : vector<288x128xf32>, vector<128x128xf32>, vector<288x128xf32> -> vector<288x128xf32>
    %c0_4 = arith.constant 0 : index
    %c0_5 = arith.constant 0 : index
    %c0_6 = arith.constant 0 : index
    %4 = vector.load %arg4[%c0_4, %c0_5, %c0_6] : memref<1x288x128xf32, #tpu.memory_space<vmem>>, vector<1x288x128xf32>
    %5 = vector.shape_cast %4 : vector<1x288x128xf32> to vector<288x128xf32>
    %6 = vector.shape_cast %3 : vector<288x128xf32> to vector<1x288x128xf32>
    tpu.vector_store %arg4[%c0_4, %c0_5, %c0_6], %6 {strides = array<i32>} : memref<1x288x128xf32, #tpu.memory_space<vmem>>, vector<1x288x128xf32>,
    %c0_7 = arith.constant 0 : index
    %c0_8 = arith.constant 0 : index
    %7 = vector.load %arg1[%c0_7, %c0_8] : memref<288x1xf32, #tpu.memory_space<vmem>>, vector<288x1xf32>
    %8 = vector.broadcast %7 : vector<288x1xf32> to vector<288x128xf32>
    %9 = arith.mulf %3, %8 : vector<288x128xf32>
    %cst_9 = arith.constant dense<0.000000e+00> : vector<128xf32>
    %10 = vector.multi_reduction <add>, %9, %cst_9 [0] : vector<288x128xf32> to vector<128xf32>
    %11 = vector.shape_cast %10 : vector<128xf32> to vector<1x128xf32>
    %c0_10 = arith.constant 0 : index
    %c0_11 = arith.constant 0 : index
    %c0_12 = arith.constant 0 : index
    %12 = vector.load %arg5[%c0_10, %c0_11, %c0_12] : memref<1x2x128xf32, #tpu.memory_space<vmem>>, vector<1x1x128xf32>
    %13 = vector.shape_cast %12 : vector<1x1x128xf32> to vector<1x128xf32>
    %14 = vector.shape_cast %11 : vector<1x128xf32> to vector<1x1x128xf32>
    tpu.vector_store %arg5[%c0_10, %c0_11, %c0_12], %14 {strides = array<i32>} : memref<1x2x128xf32, #tpu.memory_space<vmem>>, vector<1x1x128xf32>,
    %15 = arith.mulf %9, %3 : vector<288x128xf32>
    %cst_13 = arith.constant dense<0.000000e+00> : vector<128xf32>
    %16 = vector.multi_reduction <add>, %15, %cst_13 [0] : vector<288x128xf32> to vector<128xf32>
    %17 = vector.shape_cast %16 : vector<128xf32> to vector<1x128xf32>
    %c0_14 = arith.constant 0 : index
    %c1 = arith.constant 1 : index
    %c0_15 = arith.constant 0 : index
    %18 = vector.load %arg5[%c0_14, %c1, %c0_15] : memref<1x2x128xf32, #tpu.memory_space<vmem>>, vector<1x1x128xf32>
    %19 = vector.shape_cast %18 : vector<1x1x128xf32> to vector<1x128xf32>
    %20 = vector.shape_cast %17 : vector<1x128xf32> to vector<1x1x128xf32>
    tpu.vector_store %arg5[%c0_14, %c1, %c0_15], %20 {strides = array<i32>} : memref<1x2x128xf32, #tpu.memory_space<vmem>>, vector<1x1x128xf32>,
    return
  }
  func.func @transform_0(%arg0: i32) -> (i32, i32) {
    %c0_i32 = arith.constant 0 : i32
    %c0_i32_0 = arith.constant 0 : i32
    %c0_i32_1 = arith.constant 0 : i32
    return %c0_i32, %c0_i32_0 : i32, i32
  }
  func.func @transform_1(%arg0: i32) -> (i32, i32, i32) {
    %c0_i32 = arith.constant 0 : i32
    %c0_i32_0 = arith.constant 0 : i32
    %c0_i32_1 = arith.constant 0 : i32
    return %arg0, %c0_i32, %c0_i32_0 : i32, i32, i32
  }
  func.func @transform_2(%arg0: i32) -> (i32, i32) {
    %c0_i32 = arith.constant 0 : i32
    %c0_i32_0 = arith.constant 0 : i32
    %c0_i32_1 = arith.constant 0 : i32
    return %c0_i32, %c0_i32_0 : i32, i32
  }
  func.func @transform_3(%arg0: i32) -> (i32, i32, i32) {
    %c0_i32 = arith.constant 0 : i32
    %c0_i32_0 = arith.constant 0 : i32
    %c0_i32_1 = arith.constant 0 : i32
    return %arg0, %c0_i32, %c0_i32_0 : i32, i32, i32
  }
  func.func @transform_4(%arg0: i32) -> (i32, i32, i32) {
    %c0_i32 = arith.constant 0 : i32
    %c0_i32_0 = arith.constant 0 : i32
    %c0_i32_1 = arith.constant 0 : i32
    return %arg0, %c0_i32, %c0_i32_0 : i32, i32, i32
  }
}

module attributes {stable_mosaic.version = 11 : i64} {
  func.func @_bnrelu_conv2_stats_kernel(%arg0: i32, %arg1: memref<288x1xf32, #tpu.memory_space<vmem>>, %arg2: memref<1x288x128xf32, #tpu.memory_space<vmem>>, %arg3: memref<1x128xf32, #tpu.memory_space<vmem>>, %arg4: memref<1x128xf32, #tpu.memory_space<vmem>>, %arg5: memref<1152x128xf32, #tpu.memory_space<vmem>>, %arg6: memref<1x288x128xf32, #tpu.memory_space<vmem>>, %arg7: memref<1x2x128xf32, #tpu.memory_space<vmem>>, %arg8: memref<328x128xf32, #tpu.memory_space<vmem>>, %arg9: memref<288x1152xf32, #tpu.memory_space<vmem>>) attributes {dimension_semantics = [#tpu.dimension_semantics<parallel>], iteration_bounds = array<i64: 2>, scalar_prefetch = 0 : i64, scratch_operands = 2 : i64, tpu.core_type = #tpu.core_type<tc>, window_params = [{pipeline_mode = #tpu.pipeline_mode<synchronous>, transform_indices = @transform_0, window_bounds = array<i64: 288, 1>}, {transform_indices = @transform_1, window_bounds = array<i64: 1, 288, 128>}, {pipeline_mode = #tpu.pipeline_mode<synchronous>, transform_indices = @transform_2, window_bounds = array<i64: 1, 128>}, {pipeline_mode = #tpu.pipeline_mode<synchronous>, transform_indices = @transform_3, window_bounds = array<i64: 1, 128>}, {pipeline_mode = #tpu.pipeline_mode<synchronous>, transform_indices = @transform_4, window_bounds = array<i64: 1152, 128>}, {transform_indices = @transform_5, window_bounds = array<i64: 1, 288, 128>}, {transform_indices = @transform_6, window_bounds = array<i64: 1, 2, 128>}]} {
    %c0 = arith.constant 0 : index
    %c0_0 = arith.constant 0 : index
    %c0_1 = arith.constant 0 : index
    %0 = vector.load %arg2[%c0, %c0_0, %c0_1] : memref<1x288x128xf32, #tpu.memory_space<vmem>>, vector<1x288x128xf32>
    %1 = vector.shape_cast %0 : vector<1x288x128xf32> to vector<288x128xf32>
    %c0_2 = arith.constant 0 : index
    %c0_3 = arith.constant 0 : index
    %2 = vector.load %arg3[%c0_2, %c0_3] : memref<1x128xf32, #tpu.memory_space<vmem>>, vector<1x128xf32>
    %3 = vector.broadcast %2 : vector<1x128xf32> to vector<288x128xf32>
    %4 = arith.mulf %1, %3 : vector<288x128xf32>
    %c0_4 = arith.constant 0 : index
    %c0_5 = arith.constant 0 : index
    %5 = vector.load %arg4[%c0_4, %c0_5] : memref<1x128xf32, #tpu.memory_space<vmem>>, vector<1x128xf32>
    %6 = vector.broadcast %5 : vector<1x128xf32> to vector<288x128xf32>
    %7 = arith.addf %4, %6 : vector<288x128xf32>
    %cst = arith.constant 0.000000e+00 : f32
    %8 = vector.broadcast %cst : f32 to vector<288x128xf32>
    %9 = arith.maximumf %7, %8 : vector<288x128xf32>
    %c0_6 = arith.constant 0 : index
    %c0_7 = arith.constant 0 : index
    %10 = vector.load %arg1[%c0_6, %c0_7] : memref<288x1xf32, #tpu.memory_space<vmem>>, vector<288x1xf32>
    %11 = vector.broadcast %10 : vector<288x1xf32> to vector<288x128xf32>
    %12 = arith.mulf %9, %11 : vector<288x128xf32>
    %cst_8 = arith.constant 0.000000e+00 : f32
    %13 = vector.broadcast %cst_8 : f32 to vector<19x128xf32>
    %c0_9 = arith.constant 0 : index
    %c0_10 = arith.constant 0 : index
    %14 = vector.load %arg8[%c0_9, %c0_10] : memref<328x128xf32, #tpu.memory_space<vmem>>, vector<19x128xf32>
    tpu.vector_store %arg8[%c0_9, %c0_10], %13 {strides = array<i32>} : memref<328x128xf32, #tpu.memory_space<vmem>>, vector<19x128xf32>,
    %c19 = arith.constant 19 : index
    %c0_11 = arith.constant 0 : index
    %15 = vector.load %arg8[%c19, %c0_11] : memref<328x128xf32, #tpu.memory_space<vmem>>, vector<288x128xf32>
    tpu.vector_store %arg8[%c19, %c0_11], %12 {strides = array<i32>} : memref<328x128xf32, #tpu.memory_space<vmem>>, vector<288x128xf32>,
    %cst_12 = arith.constant 0.000000e+00 : f32
    %16 = vector.broadcast %cst_12 : f32 to vector<21x128xf32>
    %c307 = arith.constant 307 : index
    %c0_13 = arith.constant 0 : index
    %17 = vector.load %arg8[%c307, %c0_13] : memref<328x128xf32, #tpu.memory_space<vmem>>, vector<21x128xf32>
    tpu.vector_store %arg8[%c307, %c0_13], %16 {strides = array<i32>} : memref<328x128xf32, #tpu.memory_space<vmem>>, vector<21x128xf32>,
    %c0_14 = arith.constant 0 : index
    %c0_15 = arith.constant 0 : index
    %18 = vector.load %arg8[%c0_14, %c0_15] : memref<328x128xf32, #tpu.memory_space<vmem>>, vector<288x128xf32>
    %c0_16 = arith.constant 0 : index
    %c0_17 = arith.constant 0 : index
    %19 = vector.load %arg9[%c0_16, %c0_17] : memref<288x1152xf32, #tpu.memory_space<vmem>>, vector<288x128xf32>
    tpu.vector_store %arg9[%c0_16, %c0_17], %18 {strides = array<i32>} : memref<288x1152xf32, #tpu.memory_space<vmem>>, vector<288x128xf32>,
    %c1 = arith.constant 1 : index
    %c0_18 = arith.constant 0 : index
    %20 = vector.load %arg8[%c1, %c0_18] : memref<328x128xf32, #tpu.memory_space<vmem>>, vector<288x128xf32>
    %c0_19 = arith.constant 0 : index
    %c128 = arith.constant 128 : index
    %21 = vector.load %arg9[%c0_19, %c128] : memref<288x1152xf32, #tpu.memory_space<vmem>>, vector<288x128xf32>
    tpu.vector_store %arg9[%c0_19, %c128], %20 {strides = array<i32>} : memref<288x1152xf32, #tpu.memory_space<vmem>>, vector<288x128xf32>,
    %c2 = arith.constant 2 : index
    %c0_20 = arith.constant 0 : index
    %22 = vector.load %arg8[%c2, %c0_20] : memref<328x128xf32, #tpu.memory_space<vmem>>, vector<288x128xf32>
    %c0_21 = arith.constant 0 : index
    %c256 = arith.constant 256 : index
    %23 = vector.load %arg9[%c0_21, %c256] : memref<288x1152xf32, #tpu.memory_space<vmem>>, vector<288x128xf32>
    tpu.vector_store %arg9[%c0_21, %c256], %22 {strides = array<i32>} : memref<288x1152xf32, #tpu.memory_space<vmem>>, vector<288x128xf32>,
    %c18 = arith.constant 18 : index
    %c0_22 = arith.constant 0 : index
    %24 = vector.load %arg8[%c18, %c0_22] : memref<328x128xf32, #tpu.memory_space<vmem>>, vector<288x128xf32>
    %c0_23 = arith.constant 0 : index
    %c384 = arith.constant 384 : index
    %25 = vector.load %arg9[%c0_23, %c384] : memref<288x1152xf32, #tpu.memory_space<vmem>>, vector<288x128xf32>
    tpu.vector_store %arg9[%c0_23, %c384], %24 {strides = array<i32>} : memref<288x1152xf32, #tpu.memory_space<vmem>>, vector<288x128xf32>,
    %c19_24 = arith.constant 19 : index
    %c0_25 = arith.constant 0 : index
    %26 = vector.load %arg8[%c19_24, %c0_25] : memref<328x128xf32, #tpu.memory_space<vmem>>, vector<288x128xf32>
    %c0_26 = arith.constant 0 : index
    %c512 = arith.constant 512 : index
    %27 = vector.load %arg9[%c0_26, %c512] : memref<288x1152xf32, #tpu.memory_space<vmem>>, vector<288x128xf32>
    tpu.vector_store %arg9[%c0_26, %c512], %26 {strides = array<i32>} : memref<288x1152xf32, #tpu.memory_space<vmem>>, vector<288x128xf32>,
    %c20 = arith.constant 20 : index
    %c0_27 = arith.constant 0 : index
    %28 = vector.load %arg8[%c20, %c0_27] : memref<328x128xf32, #tpu.memory_space<vmem>>, vector<288x128xf32>
    %c0_28 = arith.constant 0 : index
    %c640 = arith.constant 640 : index
    %29 = vector.load %arg9[%c0_28, %c640] : memref<288x1152xf32, #tpu.memory_space<vmem>>, vector<288x128xf32>
    tpu.vector_store %arg9[%c0_28, %c640], %28 {strides = array<i32>} : memref<288x1152xf32, #tpu.memory_space<vmem>>, vector<288x128xf32>,
    %c36 = arith.constant 36 : index
    %c0_29 = arith.constant 0 : index
    %30 = vector.load %arg8[%c36, %c0_29] : memref<328x128xf32, #tpu.memory_space<vmem>>, vector<288x128xf32>
    %c0_30 = arith.constant 0 : index
    %c768 = arith.constant 768 : index
    %31 = vector.load %arg9[%c0_30, %c768] : memref<288x1152xf32, #tpu.memory_space<vmem>>, vector<288x128xf32>
    tpu.vector_store %arg9[%c0_30, %c768], %30 {strides = array<i32>} : memref<288x1152xf32, #tpu.memory_space<vmem>>, vector<288x128xf32>,
    %c37 = arith.constant 37 : index
    %c0_31 = arith.constant 0 : index
    %32 = vector.load %arg8[%c37, %c0_31] : memref<328x128xf32, #tpu.memory_space<vmem>>, vector<288x128xf32>
    %c0_32 = arith.constant 0 : index
    %c896 = arith.constant 896 : index
    %33 = vector.load %arg9[%c0_32, %c896] : memref<288x1152xf32, #tpu.memory_space<vmem>>, vector<288x128xf32>
    tpu.vector_store %arg9[%c0_32, %c896], %32 {strides = array<i32>} : memref<288x1152xf32, #tpu.memory_space<vmem>>, vector<288x128xf32>,
    %c38 = arith.constant 38 : index
    %c0_33 = arith.constant 0 : index
    %34 = vector.load %arg8[%c38, %c0_33] : memref<328x128xf32, #tpu.memory_space<vmem>>, vector<288x128xf32>
    %c0_34 = arith.constant 0 : index
    %c1024 = arith.constant 1024 : index
    %35 = vector.load %arg9[%c0_34, %c1024] : memref<288x1152xf32, #tpu.memory_space<vmem>>, vector<288x128xf32>
    tpu.vector_store %arg9[%c0_34, %c1024], %34 {strides = array<i32>} : memref<288x1152xf32, #tpu.memory_space<vmem>>, vector<288x128xf32>,
    %c0_35 = arith.constant 0 : index
    %c0_36 = arith.constant 0 : index
    %36 = vector.load %arg9[%c0_35, %c0_36] : memref<288x1152xf32, #tpu.memory_space<vmem>>, vector<288x1152xf32>
    %c0_37 = arith.constant 0 : index
    %c0_38 = arith.constant 0 : index
    %37 = vector.load %arg5[%c0_37, %c0_38] : memref<1152x128xf32, #tpu.memory_space<vmem>>, vector<1152x128xf32>
    %cst_39 = arith.constant dense<0.000000e+00> : vector<288x128xf32>
    %38 = tpu.matmul %36, %37, %cst_39 {dimension_numbers = #tpu.dot_dimension_numbers<[1], [0], [0], [1], [0, 0, 1, 1], [], []>} : vector<288x1152xf32>, vector<1152x128xf32>, vector<288x128xf32> -> vector<288x128xf32>
    %c0_40 = arith.constant 0 : index
    %c0_41 = arith.constant 0 : index
    %c0_42 = arith.constant 0 : index
    %39 = vector.load %arg6[%c0_40, %c0_41, %c0_42] : memref<1x288x128xf32, #tpu.memory_space<vmem>>, vector<1x288x128xf32>
    %40 = vector.shape_cast %39 : vector<1x288x128xf32> to vector<288x128xf32>
    %41 = vector.shape_cast %38 : vector<288x128xf32> to vector<1x288x128xf32>
    tpu.vector_store %arg6[%c0_40, %c0_41, %c0_42], %41 {strides = array<i32>} : memref<1x288x128xf32, #tpu.memory_space<vmem>>, vector<1x288x128xf32>,
    %c0_43 = arith.constant 0 : index
    %c0_44 = arith.constant 0 : index
    %42 = vector.load %arg1[%c0_43, %c0_44] : memref<288x1xf32, #tpu.memory_space<vmem>>, vector<288x1xf32>
    %43 = vector.broadcast %42 : vector<288x1xf32> to vector<288x128xf32>
    %44 = arith.mulf %38, %43 : vector<288x128xf32>
    %cst_45 = arith.constant dense<0.000000e+00> : vector<128xf32>
    %45 = vector.multi_reduction <add>, %44, %cst_45 [0] : vector<288x128xf32> to vector<128xf32>
    %46 = vector.shape_cast %45 : vector<128xf32> to vector<1x128xf32>
    %c0_46 = arith.constant 0 : index
    %c0_47 = arith.constant 0 : index
    %c0_48 = arith.constant 0 : index
    %47 = vector.load %arg7[%c0_46, %c0_47, %c0_48] : memref<1x2x128xf32, #tpu.memory_space<vmem>>, vector<1x1x128xf32>
    %48 = vector.shape_cast %47 : vector<1x1x128xf32> to vector<1x128xf32>
    %49 = vector.shape_cast %46 : vector<1x128xf32> to vector<1x1x128xf32>
    tpu.vector_store %arg7[%c0_46, %c0_47, %c0_48], %49 {strides = array<i32>} : memref<1x2x128xf32, #tpu.memory_space<vmem>>, vector<1x1x128xf32>,
    %50 = arith.mulf %44, %38 : vector<288x128xf32>
    %cst_49 = arith.constant dense<0.000000e+00> : vector<128xf32>
    %51 = vector.multi_reduction <add>, %50, %cst_49 [0] : vector<288x128xf32> to vector<128xf32>
    %52 = vector.shape_cast %51 : vector<128xf32> to vector<1x128xf32>
    %c0_50 = arith.constant 0 : index
    %c1_51 = arith.constant 1 : index
    %c0_52 = arith.constant 0 : index
    %53 = vector.load %arg7[%c0_50, %c1_51, %c0_52] : memref<1x2x128xf32, #tpu.memory_space<vmem>>, vector<1x1x128xf32>
    %54 = vector.shape_cast %53 : vector<1x1x128xf32> to vector<1x128xf32>
    %55 = vector.shape_cast %52 : vector<1x128xf32> to vector<1x1x128xf32>
    tpu.vector_store %arg7[%c0_50, %c1_51, %c0_52], %55 {strides = array<i32>} : memref<1x2x128xf32, #tpu.memory_space<vmem>>, vector<1x1x128xf32>,
    return
  }
  func.func @transform_0(%arg0: i32) -> (i32, i32) {
    %c0_i32 = arith.constant 0 : i32
    %c0_i32_0 = arith.constant 0 : i32
    %c0_i32_1 = arith.constant 0 : i32
    return %c0_i32, %c0_i32_0 : i32, i32
  }
  func.func @transform_1(%arg0: i32) -> (i32, i32, i32) {
    %c0_i32 = arith.constant 0 : i32
    %c0_i32_0 = arith.constant 0 : i32
    %c0_i32_1 = arith.constant 0 : i32
    return %arg0, %c0_i32, %c0_i32_0 : i32, i32, i32
  }
  func.func @transform_2(%arg0: i32) -> (i32, i32) {
    %c0_i32 = arith.constant 0 : i32
    %c0_i32_0 = arith.constant 0 : i32
    %c0_i32_1 = arith.constant 0 : i32
    return %c0_i32, %c0_i32_0 : i32, i32
  }
  func.func @transform_3(%arg0: i32) -> (i32, i32) {
    %c0_i32 = arith.constant 0 : i32
    %c0_i32_0 = arith.constant 0 : i32
    %c0_i32_1 = arith.constant 0 : i32
    return %c0_i32, %c0_i32_0 : i32, i32
  }
  func.func @transform_4(%arg0: i32) -> (i32, i32) {
    %c0_i32 = arith.constant 0 : i32
    %c0_i32_0 = arith.constant 0 : i32
    %c0_i32_1 = arith.constant 0 : i32
    return %c0_i32, %c0_i32_0 : i32, i32
  }
  func.func @transform_5(%arg0: i32) -> (i32, i32, i32) {
    %c0_i32 = arith.constant 0 : i32
    %c0_i32_0 = arith.constant 0 : i32
    %c0_i32_1 = arith.constant 0 : i32
    return %arg0, %c0_i32, %c0_i32_0 : i32, i32, i32
  }
  func.func @transform_6(%arg0: i32) -> (i32, i32, i32) {
    %c0_i32 = arith.constant 0 : i32
    %c0_i32_0 = arith.constant 0 : i32
    %c0_i32_1 = arith.constant 0 : i32
    return %arg0, %c0_i32, %c0_i32_0 : i32, i32, i32
  }
}

</mosaic_0001>

<llo_original>
// kernel: double_conv_pallas.2
$region0: #{double_conv_pallas.2}
  #allocation0 [shape = 'u32[]', space=smem, size = 0x4, offset = 0x4, fixed_abs, tag = 'smem constant byte address 0x4 - core index']
  #allocation1 [shape = 'u32[72,128]{1,0:T(1,128)}', space=vmem, size = 0x9000, scoped, tag = 'internal scratch']
  %s0 = inlined_call_operand.vmem [shape: f32[288,1], index: 0, kind: input, shape index: {}]
  %s1 = inlined_call_operand.vmem [shape: f32[2,288,128], index: 1, kind: input, shape index: {}]
  %s2 = inlined_call_operand.vmem [shape: f32[128,128], index: 2, kind: input, shape index: {}]
  %s3 = inlined_call_operand.vmem [shape: f32[2,288,128], index: 3, kind: output, shape index: {0}]
  %s4 = inlined_call_operand.vmem [shape: f32[2,2,128], index: 4, kind: output, shape index: {1}]
  %5 = xla_tuple %s3, %s4
  %s6 = sld [smem:[#allocation0]]
  $region53: #{double_conv_pallas.2} parent=0
    _
  %s8 = ssub.s32 1, %s6
  %s9 = scalar_select 0, %s8, %s6
  loop: start=0, step=1, limit=4
  $region2: #{double_conv_pallas.2} parent=0 // loop_pre_header
    _
  $region3: #{double_conv_pallas.2} parent=0 // loop_header
    %s11 = sphi 0, %s15
    %p12 = scmp.ge.s32.totalorder %s11, 4
    %s19 = sphi 0, %s19
    %s21 = sphi 0, %s19
    %s22 = sphi 0, %s21
    %s36 = sphi 0, %s22
    %s42 = sphi 0, %s44
    %s45 = sphi 0, %s42
    %s46 = sphi 0, %s45
    %s62 = sphi 0, %s46
    %s66 = sphi 0, %s66
    %s68 = sphi 0, %s66
    %s69 = sphi 0, %s68
    %s83 = sphi 0, %s69
    %s89 = sphi 0, %s91
    %s92 = sphi 0, %s89
    %s93 = sphi 0, %s92
    %s109 = sphi 0, %s93
    %s115 = sphi 0, %s117
    %s118 = sphi 0, %s115
    %s119 = sphi 0, %s118
    %s135 = sphi 0, %s119
  $region4: #{double_conv_pallas.2} parent=0 // loop_header_branch
    %14 = sbr.rel (%p12) target = $region8
  $region5: #{double_conv_pallas.2} parent=0 // loop_body
    %s16 = ssub.s32 %s11, 1
    %s17 = ssub.s32 %s11, 2
    %s18 = sadd.s32 %s11, 1
    %s20 = sadd.s32 %s19, 1
    %p23 = scmp.eq.s32.totalorder %s11, 1
    %p24 = scmp.ne.s32.totalorder %s19, %s21
    %p25 = scmp.eq.s32.totalorder %s11, 0
    %p26 = por %p24, %p25
    %p27 = scmp.ne.s32.totalorder %s19, %s21
    %p28 = scmp.eq.s32.totalorder %s16, 1
    %p29 = por %p27, %p28
    %p30 = scmp.ne.s32.totalorder %s21, %s22
    %p31 = scmp.eq.s32.totalorder %s16, 0
    %p32 = por %p30, %p31
    %p33 = scmp.ne.s32.totalorder %s21, %s22
    %p34 = scmp.eq.s32.totalorder %s17, 1
    %p35 = por %p33, %p34
    %p37 = scmp.ne.s32.totalorder %s22, %s36
    %p38 = scmp.eq.s32.totalorder %s17, 0
    %p39 = por %p37, %p38
    %s40 = ssub.s32 %s11, %s18
    %p41 = scmp.eq.s32.totalorder %s40, 0
    %s43 = sadd.s32 %s42, 1
    %s44 = scalar_select %p41, %s42, %s43
    %p47 = pneg %p41
    %p48 = scmp.eq.s32.totalorder %s11, 1
    %p49 = por %p47, %p48
    %p50 = scmp.ne.s32.totalorder %s42, %s45
    %p51 = scmp.eq.s32.totalorder %s11, 0
    %p52 = por %p50, %p51
    %p53 = scmp.ne.s32.totalorder %s42, %s45
    %p54 = scmp.eq.s32.totalorder %s16, 1
    %p55 = por %p53, %p54
    %p56 = scmp.ne.s32.totalorder %s45, %s46
    %p57 = scmp.eq.s32.totalorder %s16, 0
    %p58 = por %p56, %p57
    %p59 = scmp.ne.s32.totalorder %s45, %s46
    %p60 = scmp.eq.s32.totalorder %s17, 1
    %p61 = por %p59, %p60
    %p63 = scmp.ne.s32.totalorder %s46, %s62
    %p64 = scmp.eq.s32.totalorder %s17, 0
    %p65 = por %p63, %p64
    %s67 = sadd.s32 %s66, 1
    %p70 = scmp.eq.s32.totalorder %s11, 1
    %p71 = scmp.ne.s32.totalorder %s66, %s68
    %p72 = scmp.eq.s32.totalorder %s11, 0
    %p73 = por %p71, %p72
    %p74 = scmp.ne.s32.totalorder %s66, %s68
    %p75 = scmp.eq.s32.totalorder %s16, 1
    %p76 = por %p74, %p75
    %p77 = scmp.ne.s32.totalorder %s68, %s69
    %p78 = scmp.eq.s32.totalorder %s16, 0
    %p79 = por %p77, %p78
    %p80 = scmp.ne.s32.totalorder %s68, %s69
    %p81 = scmp.eq.s32.totalorder %s17, 1
    %p82 = por %p80, %p81
    %p84 = scmp.ne.s32.totalorder %s69, %s83
    %p85 = scmp.eq.s32.totalorder %s17, 0
    %p86 = por %p84, %p85
    %s87 = ssub.s32 %s11, %s18
    %p88 = scmp.eq.s32.totalorder %s87, 0
    %s90 = sadd.s32 %s89, 1
    %s91 = scalar_select %p88, %s89, %s90
    %p94 = pneg %p88
    %p95 = scmp.eq.s32.totalorder %s11, 1
    %p96 = por %p94, %p95
    %p97 = scmp.ne.s32.totalorder %s89, %s92
    %p98 = scmp.eq.s32.totalorder %s11, 0
    %p99 = por %p97, %p98
    %p100 = scmp.ne.s32.totalorder %s89, %s92
    %p101 = scmp.eq.s32.totalorder %s16, 1
    %p102 = por %p100, %p101
    %p103 = scmp.ne.s32.totalorder %s92, %s93
    %p104 = scmp.eq.s32.totalorder %s16, 0
    %p105 = por %p103, %p104
    %p106 = scmp.ne.s32.totalorder %s92, %s93
    %p107 = scmp.eq.s32.totalorder %s17, 1
    %p108 = por %p106, %p107
    %p110 = scmp.ne.s32.totalorder %s93, %s109
    %p111 = scmp.eq.s32.totalorder %s17, 0
    %p112 = por %p110, %p111
    %s113 = ssub.s32 %s11, %s18
    %p114 = scmp.eq.s32.totalorder %s113, 0
    %s116 = sadd.s32 %s115, 1
    %s117 = scalar_select %p114, %s115, %s116
    %p120 = pneg %p114
    %p121 = scmp.eq.s32.totalorder %s11, 1
    %p122 = por %p120, %p121
    %p123 = scmp.ne.s32.totalorder %s115, %s118
    %p124 = scmp.eq.s32.totalorder %s11, 0
    %p125 = por %p123, %p124
    %p126 = scmp.ne.s32.totalorder %s115, %s118
    %p127 = scmp.eq.s32.totalorder %s16, 1
    %p128 = por %p126, %p127
    %p129 = scmp.ne.s32.totalorder %s118, %s119
    %p130 = scmp.eq.s32.totalorder %s16, 0
    %p131 = por %p129, %p130
    %p132 = scmp.ne.s32.totalorder %s118, %s119
    %p133 = scmp.eq.s32.totalorder %s17, 1
    %p134 = por %p132, %p133
    %p136 = scmp.ne.s32.totalorder %s119, %s135
    %p137 = scmp.eq.s32.totalorder %s17, 0
    %p138 = por %p136, %p137
    %p139 = scmp.le.s32.totalorder 1, %s11
    %p140 = scmp.lt.s32.totalorder %s11, 3
    %p141 = pnand %p139, %p140
    %p142 = pneg %p141
    // Predicated region
    $region9: #{double_conv_pallas.2} parent=5 // pred_check
      _
    $region10: #{double_conv_pallas.2} parent=5 // pred_check_branch
      %144 = sbr.rel (%p141) target = $region12
    $region11: #{double_conv_pallas.2} parent=5 // pred_region
      %s145 = ssub.s32 %s11, 1
      // Predicated region
      $region13: #{double_conv_pallas.2} parent=11 // pred_check
        %p146 = pneg %p32
      $region14: #{double_conv_pallas.2} parent=11 // pred_check_branch
        %148 = sbr.rel (%p146) target = $region16
      $region15: #{double_conv_pallas.2} parent=11 // pred_region
        _
      $region16: #{double_conv_pallas.2} parent=11 // pred_fallthru
        _
      // Predicated region
      $region17: #{double_conv_pallas.2} parent=11 // pred_check
        %p149 = pneg %p79
      $region18: #{double_conv_pallas.2} parent=11 // pred_check_branch
        %151 = sbr.rel (%p149) target = $region20
      $region19: #{double_conv_pallas.2} parent=11 // pred_region
        _
      $region20: #{double_conv_pallas.2} parent=11 // pred_fallthru
        _
    $region12: #{double_conv_pallas.2} parent=5 // pred_fallthru
      _
    %p152 = scmp.lt.s32.totalorder %s11, 2
    // Predicated region
    $region21: #{double_conv_pallas.2} parent=5 // pred_check
      %p153 = pneg %p152
    $region22: #{double_conv_pallas.2} parent=5 // pred_check_branch
      %155 = sbr.rel (%p153) target = $region24
    $region23: #{double_conv_pallas.2} parent=5 // pred_region
      // Predicated region
      $region25: #{double_conv_pallas.2} parent=23 // pred_check
        %p156 = pneg %p52
      $region26: #{double_conv_pallas.2} parent=23 // pred_check_branch
        %158 = sbr.rel (%p156) target = $region28
      $region27: #{double_conv_pallas.2} parent=23 // pred_region
        %p159 = scmp.lt.s32.totalorder %s11, 1
        %s160 = scalar_select %p159, %s11, 1
        %s161 = smul.addr %s160, 36
        %s162 = smul.addr %s161, 8
        %s163 = scalar_lea.vmem %s1, %s162
      $region28: #{double_conv_pallas.2} parent=23 // pred_fallthru
        _
    $region24: #{double_conv_pallas.2} parent=5 // pred_fallthru
      _
    %p164 = scmp.le.s32.totalorder 1, %s11
    %p165 = scmp.lt.s32.totalorder %s11, 3
    %p166 = pnand %p164, %p165
    %p167 = pneg %p166
    // Predicated region
    $region29: #{double_conv_pallas.2} parent=5 // pred_check
      _
    $region30: #{double_conv_pallas.2} parent=5 // pred_check_branch
      %169 = sbr.rel (%p166) target = $region32
    $region31: #{double_conv_pallas.2} parent=5 // pred_region
      %s170 = ssub.s32 %s11, 1
      %p171 = pneg %p32
      %p172 = pneg %p29
      %p173 = scmp.lt.s32.totalorder %s16, 1
      %s174 = scalar_select %p173, %s16, 1
      %s175 = smul.addr %s174, 36
      %s176 = smul.addr %s175, 8
      %s177 = scalar_lea.vmem %s1, %s176
      %p178 = pneg %p58
      %p179 = pneg %p55
      %p180 = pneg %p79
      %p181 = pneg %p76
      %p182 = pneg %p105
      %p183 = pneg %p102
      %p184 = scmp.lt.s32.totalorder %s16, 1
      %s185 = scalar_select %p184, %s16, 1
      %s186 = smul.addr %s185, 36
      %s187 = smul.addr %s186, 8
      %s188 = scalar_lea.vmem %s3, %s187
      %p189 = pneg %p131
      %p190 = pneg %p128
      %p191 = scmp.lt.s32.totalorder %s16, 1
      %s192 = scalar_select %p191, %s16, 1
      %s193 = smul.addr %s192, 2
      %s194 = scalar_lea.vmem %s4, %s193
      %p195 = scmp.lt.s32.totalorder %s16, 1
      %s196 = scalar_select %p195, %s16, 1
      %s197 = smul.addr %s196, 36
      %s198 = smul.addr %s197, 8
      %s199 = scalar_lea.vmem %s1, %s198
      %p200 = scmp.lt.s32.totalorder %s16, 1
      %s201 = scalar_select %p200, %s16, 1
      %s202 = smul.addr %s201, 36
      %s203 = smul.addr %s202, 8
      %s204 = scalar_lea.vmem %s3, %s203
      %p205 = scmp.lt.s32.totalorder %s16, 1
      %s206 = scalar_select %p205, %s16, 1
      %s207 = smul.addr %s206, 2
      %s208 = scalar_lea.vmem %s4, %s207
      %v209 = vld [vmem:[%s199] sm:$0xff]
      %v210 = vld [vmem:[%s199 + $0x8] sm:$0xff]
      %v211 = vld [vmem:[%s199 + $0x10] sm:$0xff]
      %v212 = vld [vmem:[%s199 + $0x18] sm:$0xff]
      %v213 = vld [vmem:[%s199 + $0x20] sm:$0xff]
      %v214 = vld [vmem:[%s199 + $0x28] sm:$0xff]
      %v215 = vld [vmem:[%s199 + $0x30] sm:$0xff]
      %v216 = vld [vmem:[%s199 + $0x38] sm:$0xff]
      %v217 = vld [vmem:[%s199 + $0x40] sm:$0xff]
      %v218 = vld [vmem:[%s199 + $0x48] sm:$0xff]
      %v219 = vld [vmem:[%s199 + $0x50] sm:$0xff]
      %v220 = vld [vmem:[%s199 + $0x58] sm:$0xff]
      %v221 = vld [vmem:[%s199 + $0x60] sm:$0xff]
      %v222 = vld [vmem:[%s199 + $0x68] sm:$0xff]
      %v223 = vld [vmem:[%s199 + $0x70] sm:$0xff]
      %v224 = vld [vmem:[%s199 + $0x78] sm:$0xff]
      %v225 = vld [vmem:[%s199 + $0x80] sm:$0xff]
      %v226 = vld [vmem:[%s199 + $0x88] sm:$0xff]
      %v227 = vld [vmem:[%s199 + $0x90] sm:$0xff]
      %v228 = vld [vmem:[%s199 + $0x98] sm:$0xff]
      %v229 = vld [vmem:[%s199 + $0xa0] sm:$0xff]
      %v230 = vld [vmem:[%s199 + $0xa8] sm:$0xff]
      %v231 = vld [vmem:[%s199 + $0xb0] sm:$0xff]
      %v232 = vld [vmem:[%s199 + $0xb8] sm:$0xff]
      %v233 = vld [vmem:[%s199 + $0xc0] sm:$0xff]
      %v234 = vld [vmem:[%s199 + $0xc8] sm:$0xff]
      %v235 = vld [vmem:[%s199 + $0xd0] sm:$0xff]
      %v236 = vld [vmem:[%s199 + $0xd8] sm:$0xff]
      %v237 = vld [vmem:[%s199 + $0xe0] sm:$0xff]
      %v238 = vld [vmem:[%s199 + $0xe8] sm:$0xff]
      %v239 = vld [vmem:[%s199 + $0xf0] sm:$0xff]
      %v240 = vld [vmem:[%s199 + $0xf8] sm:$0xff]
      %v241 = vld [vmem:[%s199 + $0x100] sm:$0xff]
      %v242 = vld [vmem:[%s199 + $0x108] sm:$0xff]
      %v243 = vld [vmem:[%s199 + $0x110] sm:$0xff]
      %v244 = vld [vmem:[%s199 + $0x118] sm:$0xff]
      %v245 = vld [vmem:[%s2] sm:$0xff]
      %v246 = vld [vmem:[%s2 + $0x8] sm:$0xff]
      %v247 = vld [vmem:[%s2 + $0x10] sm:$0xff]
      %v248 = vld [vmem:[%s2 + $0x18] sm:$0xff]
      %v249 = vld [vmem:[%s2 + $0x20] sm:$0xff]
      %v250 = vld [vmem:[%s2 + $0x28] sm:$0xff]
      %v251 = vld [vmem:[%s2 + $0x30] sm:$0xff]
      %v252 = vld [vmem:[%s2 + $0x38] sm:$0xff]
      %v253 = vld [vmem:[%s2 + $0x40] sm:$0xff]
      %v254 = vld [vmem:[%s2 + $0x48] sm:$0xff]
      %v255 = vld [vmem:[%s2 + $0x50] sm:$0xff]
      %v256 = vld [vmem:[%s2 + $0x58] sm:$0xff]
      %v257 = vld [vmem:[%s2 + $0x60] sm:$0xff]
      %v258 = vld [vmem:[%s2 + $0x68] sm:$0xff]
      %v259 = vld [vmem:[%s2 + $0x70] sm:$0xff]
      %v260 = vld [vmem:[%s2 + $0x78] sm:$0xff]
      %261 = vmatpush.msra.mxu0 %v260
      %262 = vmatpush.msra.mxu0 %v259
      %263 = vmatpush.msra.mxu0 %v258
      %264 = vmatpush.msra.mxu0 %v257
      %265 = vmatpush.msra.mxu0 %v256
      %266 = vmatpush.msra.mxu0 %v255
      %267 = vmatpush.msra.mxu0 %v254
      %268 = vmatpush.msra.mxu0 %v253
      %269 = vmatpush.msra.mxu0 %v252
      %270 = vmatpush.msra.mxu0 %v251
      %271 = vmatpush.msra.mxu0 %v250
      %272 = vmatpush.msra.mxu0 %v249
      %273 = vmatpush.msra.mxu0 %v248
      %274 = vmatpush.msra.mxu0 %v247
      %275 = vmatpush.msra.mxu0 %v246
      %276 = vmatpush.msra.mxu0 %v245
      %277 = vmatmul.f32.gmra.mxu0 %v209
      %v278 = vpop.f32.mrf.mxu0
      %v279 = vadd.f32 0.0, %v278
      %280 = vmatmul.f32.gmra.mxu0 %v210
      %v281 = vpop.f32.mrf.mxu0
      %v282 = vadd.f32 0.0, %v281
      %283 = vmatmul.f32.gmra.mxu0 %v211
      %v284 = vpop.f32.mrf.mxu0
      %v285 = vadd.f32 0.0, %v284
      %286 = vmatmul.f32.gmra.mxu0 %v212
      %v287 = vpop.f32.mrf.mxu0
      %v288 = vadd.f32 0.0, %v287
      %289 = vmatmul.f32.gmra.mxu0 %v213
      %v290 = vpop.f32.mrf.mxu0
      %v291 = vadd.f32 0.0, %v290
      %292 = vmatmul.f32.gmra.mxu0 %v214
      %v293 = vpop.f32.mrf.mxu0
      %v294 = vadd.f32 0.0, %v293
      %295 = vmatmul.f32.gmra.mxu0 %v215
      %v296 = vpop.f32.mrf.mxu0
      %v297 = vadd.f32 0.0, %v296
      %298 = vmatmul.f32.gmra.mxu0 %v216
      %v299 = vpop.f32.mrf.mxu0
      %v300 = vadd.f32 0.0, %v299
      %301 = vmatmul.f32.gmra.mxu0 %v217
      %v302 = vpop.f32.mrf.mxu0
      %v303 = vadd.f32 0.0, %v302
      %304 = vmatmul.f32.gmra.mxu0 %v218
      %v305 = vpop.f32.mrf.mxu0
      %v306 = vadd.f32 0.0, %v305
      %307 = vmatmul.f32.gmra.mxu0 %v219
      %v308 = vpop.f32.mrf.mxu0
      %v309 = vadd.f32 0.0, %v308
      %310 = vmatmul.f32.gmra.mxu0 %v220
      %v311 = vpop.f32.mrf.mxu0
      %v312 = vadd.f32 0.0, %v311
      %313 = vmatmul.f32.gmra.mxu0 %v221
      %v314 = vpop.f32.mrf.mxu0
      %v315 = vadd.f32 0.0, %v314
      %316 = vmatmul.f32.gmra.mxu0 %v222
      %v317 = vpop.f32.mrf.mxu0
      %v318 = vadd.f32 0.0, %v317
      %319 = vmatmul.f32.gmra.mxu0 %v223
      %v320 = vpop.f32.mrf.mxu0
      %v321 = vadd.f32 0.0, %v320
      %322 = vmatmul.f32.gmra.mxu0 %v224
      %v323 = vpop.f32.mrf.mxu0
      %v324 = vadd.f32 0.0, %v323
      %325 = vmatmul.f32.gmra.mxu0 %v225
      %v326 = vpop.f32.mrf.mxu0
      %v327 = vadd.f32 0.0, %v326
      %328 = vmatmul.f32.gmra.mxu0 %v226
      %v329 = vpop.f32.mrf.mxu0
      %v330 = vadd.f32 0.0, %v329
      %331 = vmatmul.f32.gmra.mxu0 %v227
      %v332 = vpop.f32.mrf.mxu0
      %v333 = vadd.f32 0.0, %v332
      %334 = vmatmul.f32.gmra.mxu0 %v228
      %v335 = vpop.f32.mrf.mxu0
      %v336 = vadd.f32 0.0, %v335
      %337 = vmatmul.f32.gmra.mxu0 %v229
      %v338 = vpop.f32.mrf.mxu0
      %v339 = vadd.f32 0.0, %v338
      %340 = vmatmul.f32.gmra.mxu0 %v230
      %v341 = vpop.f32.mrf.mxu0
      %v342 = vadd.f32 0.0, %v341
      %343 = vmatmul.f32.gmra.mxu0 %v231
      %v344 = vpop.f32.mrf.mxu0
      %v345 = vadd.f32 0.0, %v344
      %346 = vmatmul.f32.gmra.mxu0 %v232
      %v347 = vpop.f32.mrf.mxu0
      %v348 = vadd.f32 0.0, %v347
      %349 = vmatmul.f32.gmra.mxu0 %v233
      %v350 = vpop.f32.mrf.mxu0
      %v351 = vadd.f32 0.0, %v350
      %352 = vmatmul.f32.gmra.mxu0 %v234
      %v353 = vpop.f32.mrf.mxu0
      %v354 = vadd.f32 0.0, %v353
      %355 = vmatmul.f32.gmra.mxu0 %v235
      %v356 = vpop.f32.mrf.mxu0
      %v357 = vadd.f32 0.0, %v356
      %358 = vmatmul.f32.gmra.mxu0 %v236
      %v359 = vpop.f32.mrf.mxu0
      %v360 = vadd.f32 0.0, %v359
      %361 = vmatmul.f32.gmra.mxu0 %v237
      %v362 = vpop.f32.mrf.mxu0
      %v363 = vadd.f32 0.0, %v362
      %364 = vmatmul.f32.gmra.mxu0 %v238
      %v365 = vpop.f32.mrf.mxu0
      %v366 = vadd.f32 0.0, %v365
      %367 = vmatmul.f32.gmra.mxu0 %v239
      %v368 = vpop.f32.mrf.mxu0
      %v369 = vadd.f32 0.0, %v368
      %370 = vmatmul.f32.gmra.mxu0 %v240
      %v371 = vpop.f32.mrf.mxu0
      %v372 = vadd.f32 0.0, %v371
      %373 = vmatmul.f32.gmra.mxu0 %v241
      %v374 = vpop.f32.mrf.mxu0
      %v375 = vadd.f32 0.0, %v374
      %376 = vmatmul.f32.gmra.mxu0 %v242
      %v377 = vpop.f32.mrf.mxu0
      %v378 = vadd.f32 0.0, %v377
      %379 = vmatmul.f32.gmra.mxu0 %v243
      %v380 = vpop.f32.mrf.mxu0
      %v381 = vadd.f32 0.0, %v380
      %382 = vmatmul.f32.gmra.mxu0 %v244
      %v383 = vpop.f32.mrf.mxu0
      %v384 = vadd.f32 0.0, %v383
      %385 = vdwg.mxu0
      %386 = vst [vmem:[%s204] sm:$0xff] %v279
      %387 = vst [vmem:[%s204 + $0x8] sm:$0xff] %v282
      %388 = vst [vmem:[%s204 + $0x10] sm:$0xff] %v285
      %389 = vst [vmem:[%s204 + $0x18] sm:$0xff] %v288
      %390 = vst [vmem:[%s204 + $0x20] sm:$0xff] %v291
      %391 = vst [vmem:[%s204 + $0x28] sm:$0xff] %v294
      %392 = vst [vmem:[%s204 + $0x30] sm:$0xff] %v297
      %393 = vst [vmem:[%s204 + $0x38] sm:$0xff] %v300
      %394 = vst [vmem:[%s204 + $0x40] sm:$0xff] %v303
      %395 = vst [vmem:[%s204 + $0x48] sm:$0xff] %v306
      %396 = vst [vmem:[%s204 + $0x50] sm:$0xff] %v309
      %397 = vst [vmem:[%s204 + $0x58] sm:$0xff] %v312
      %398 = vst [vmem:[%s204 + $0x60] sm:$0xff] %v315
      %399 = vst [vmem:[%s204 + $0x68] sm:$0xff] %v318
      %400 = vst [vmem:[%s204 + $0x70] sm:$0xff] %v321
      %401 = vst [vmem:[%s204 + $0x78] sm:$0xff] %v324
      %402 = vst [vmem:[%s204 + $0x80] sm:$0xff] %v327
      %403 = vst [vmem:[%s204 + $0x88] sm:$0xff] %v330
      %404 = vst [vmem:[%s204 + $0x90] sm:$0xff] %v333
      %405 = vst [vmem:[%s204 + $0x98] sm:$0xff] %v336
      %406 = vst [vmem:[%s204 + $0xa0] sm:$0xff] %v339
      %407 = vst [vmem:[%s204 + $0xa8] sm:$0xff] %v342
      %408 = vst [vmem:[%s204 + $0xb0] sm:$0xff] %v345
      %409 = vst [vmem:[%s204 + $0xb8] sm:$0xff] %v348
      %410 = vst [vmem:[%s204 + $0xc0] sm:$0xff] %v351
      %411 = vst [vmem:[%s204 + $0xc8] sm:$0xff] %v354
      %412 = vst [vmem:[%s204 + $0xd0] sm:$0xff] %v357
      %413 = vst [vmem:[%s204 + $0xd8] sm:$0xff] %v360
      %414 = vst [vmem:[%s204 + $0xe0] sm:$0xff] %v363
      %415 = vst [vmem:[%s204 + $0xe8] sm:$0xff] %v366
      %416 = vst [vmem:[%s204 + $0xf0] sm:$0xff] %v369
      %417 = vst [vmem:[%s204 + $0xf8] sm:$0xff] %v372
      %418 = vst [vmem:[%s204 + $0x100] sm:$0xff] %v375
      %419 = vst [vmem:[%s204 + $0x108] sm:$0xff] %v378
      %420 = vst [vmem:[%s204 + $0x110] sm:$0xff] %v381
      %421 = vst [vmem:[%s204 + $0x118] sm:$0xff] %v384
      %v422 = vld [vmem:[%s0] sm:$0xff]
      %v423 = vld [vmem:[%s0 + $0x8] sm:$0xff]
      %v424 = vld [vmem:[%s0 + $0x10] sm:$0xff]
      %v425 = vld [vmem:[%s0 + $0x18] sm:$0xff]
      %v426 = vld [vmem:[%s0 + $0x20] sm:$0xff]
      %v427 = vld [vmem:[%s0 + $0x28] sm:$0xff]
      %v428 = vld [vmem:[%s0 + $0x30] sm:$0xff]
      %v429 = vld [vmem:[%s0 + $0x38] sm:$0xff]
      %v430 = vld [vmem:[%s0 + $0x40] sm:$0xff]
      %v431 = vld [vmem:[%s0 + $0x48] sm:$0xff]
      %v432 = vld [vmem:[%s0 + $0x50] sm:$0xff]
      %v433 = vld [vmem:[%s0 + $0x58] sm:$0xff]
      %v434 = vld [vmem:[%s0 + $0x60] sm:$0xff]
      %v435 = vld [vmem:[%s0 + $0x68] sm:$0xff]
      %v436 = vld [vmem:[%s0 + $0x70] sm:$0xff]
      %v437 = vld [vmem:[%s0 + $0x78] sm:$0xff]
      %v438 = vld [vmem:[%s0 + $0x80] sm:$0xff]
      %v439 = vld [vmem:[%s0 + $0x88] sm:$0xff]
      %v440 = vld [vmem:[%s0 + $0x90] sm:$0xff]
      %v441 = vld [vmem:[%s0 + $0x98] sm:$0xff]
      %v442 = vld [vmem:[%s0 + $0xa0] sm:$0xff]
      %v443 = vld [vmem:[%s0 + $0xa8] sm:$0xff]
      %v444 = vld [vmem:[%s0 + $0xb0] sm:$0xff]
      %v445 = vld [vmem:[%s0 + $0xb8] sm:$0xff]
      %v446 = vld [vmem:[%s0 + $0xc0] sm:$0xff]
      %v447 = vld [vmem:[%s0 + $0xc8] sm:$0xff]
      %v448 = vld [vmem:[%s0 + $0xd0] sm:$0xff]
      %v449 = vld [vmem:[%s0 + $0xd8] sm:$0xff]
      %v450 = vld [vmem:[%s0 + $0xe0] sm:$0xff]
      %v451 = vld [vmem:[%s0 + $0xe8] sm:$0xff]
      %v452 = vld [vmem:[%s0 + $0xf0] sm:$0xff]
      %v453 = vld [vmem:[%s0 + $0xf8] sm:$0xff]
      %v454 = vld [vmem:[%s0 + $0x100] sm:$0xff]
      %v455 = vld [vmem:[%s0 + $0x108] sm:$0xff]
      %v456 = vld [vmem:[%s0 + $0x110] sm:$0xff]
      %v457 = vld [vmem:[%s0 + $0x118] sm:$0xff]
      %459 = vset.pattern.permute.xlu0 0
      %460 = vperm.xlu0 %459, %v422
      %v461 = vpop.permute.xlu0 %460
      %464 = vset.pattern.permute.xlu0 0
      %465 = vperm.xlu0 %464, %v423
      %v466 = vpop.permute.xlu0 %465
      %469 = vset.pattern.permute.xlu0 0
      %470 = vperm.xlu0 %469, %v424
      %v471 = vpop.permute.xlu0 %470
      %474 = vset.pattern.permute.xlu0 0
      %475 = vperm.xlu0 %474, %v425
      %v476 = vpop.permute.xlu0 %475
      %479 = vset.pattern.permute.xlu0 0
      %480 = vperm.xlu0 %479, %v426
      %v481 = vpop.permute.xlu0 %480
      %484 = vset.pattern.permute.xlu0 0
      %485 = vperm.xlu0 %484, %v427
      %v486 = vpop.permute.xlu0 %485
      %489 = vset.pattern.permute.xlu0 0
      %490 = vperm.xlu0 %489, %v428
      %v491 = vpop.permute.xlu0 %490
      %494 = vset.pattern.permute.xlu0 0
      %495 = vperm.xlu0 %494, %v429
      %v496 = vpop.permute.xlu0 %495
      %499 = vset.pattern.permute.xlu0 0
      %500 = vperm.xlu0 %499, %v430
      %v501 = vpop.permute.xlu0 %500
      %504 = vset.pattern.permute.xlu0 0
      %505 = vperm.xlu0 %504, %v431
      %v506 = vpop.permute.xlu0 %505
      %509 = vset.pattern.permute.xlu0 0
      %510 = vperm.xlu0 %509, %v432
      %v511 = vpop.permute.xlu0 %510
      %514 = vset.pattern.permute.xlu0 0
      %515 = vperm.xlu0 %514, %v433
      %v516 = vpop.permute.xlu0 %515
      %519 = vset.pattern.permute.xlu0 0
      %520 = vperm.xlu0 %519, %v434
      %v521 = vpop.permute.xlu0 %520
      %524 = vset.pattern.permute.xlu0 0
      %525 = vperm.xlu0 %524, %v435
      %v526 = vpop.permute.xlu0 %525
      %529 = vset.pattern.permute.xlu0 0
      %530 = vperm.xlu0 %529, %v436
      %v531 = vpop.permute.xlu0 %530
      %534 = vset.pattern.permute.xlu0 0
      %535 = vperm.xlu0 %534, %v437
      %v536 = vpop.permute.xlu0 %535
      %539 = vset.pattern.permute.xlu0 0
      %540 = vperm.xlu0 %539, %v438
      %v541 = vpop.permute.xlu0 %540
      %544 = vset.pattern.permute.xlu0 0
      %545 = vperm.xlu0 %544, %v439
      %v546 = vpop.permute.xlu0 %545
      %549 = vset.pattern.permute.xlu0 0
      %550 = vperm.xlu0 %549, %v440
      %v551 = vpop.permute.xlu0 %550
      %554 = vset.pattern.permute.xlu0 0
      %555 = vperm.xlu0 %554, %v441
      %v556 = vpop.permute.xlu0 %555
      %559 = vset.pattern.permute.xlu0 0
      %560 = vperm.xlu0 %559, %v442
      %v561 = vpop.permute.xlu0 %560
      %564 = vset.pattern.permute.xlu0 0
      %565 = vperm.xlu0 %564, %v443
      %v566 = vpop.permute.xlu0 %565
      %569 = vset.pattern.permute.xlu0 0
      %570 = vperm.xlu0 %569, %v444
      %v571 = vpop.permute.xlu0 %570
      %574 = vset.pattern.permute.xlu0 0
      %575 = vperm.xlu0 %574, %v445
      %v576 = vpop.permute.xlu0 %575
      %579 = vset.pattern.permute.xlu0 0
      %580 = vperm.xlu0 %579, %v446
      %v581 = vpop.permute.xlu0 %580
      %584 = vset.pattern.permute.xlu0 0
      %585 = vperm.xlu0 %584, %v447
      %v586 = vpop.permute.xlu0 %585
      %589 = vset.pattern.permute.xlu0 0
      %590 = vperm.xlu0 %589, %v448
      %v591 = vpop.permute.xlu0 %590
      %594 = vset.pattern.permute.xlu0 0
      %595 = vperm.xlu0 %594, %v449
      %v596 = vpop.permute.xlu0 %595
      %599 = vset.pattern.permute.xlu0 0
      %600 = vperm.xlu0 %599, %v450
      %v601 = vpop.permute.xlu0 %600
      %604 = vset.pattern.permute.xlu0 0
      %605 = vperm.xlu0 %604, %v451
      %v606 = vpop.permute.xlu0 %605
      %609 = vset.pattern.permute.xlu0 0
      %610 = vperm.xlu0 %609, %v452
      %v611 = vpop.permute.xlu0 %610
      %614 = vset.pattern.permute.xlu0 0
      %615 = vperm.xlu0 %614, %v453
      %v616 = vpop.permute.xlu0 %615
      %619 = vset.pattern.permute.xlu0 0
      %620 = vperm.xlu0 %619, %v454
      %v621 = vpop.permute.xlu0 %620
      %624 = vset.pattern.permute.xlu0 0
      %625 = vperm.xlu0 %624, %v455
      %v626 = vpop.permute.xlu0 %625
      %629 = vset.pattern.permute.xlu0 0
      %630 = vperm.xlu0 %629, %v456
      %v631 = vpop.permute.xlu0 %630
      %634 = vset.pattern.permute.xlu0 0
      %635 = vperm.xlu0 %634, %v457
      %v636 = vpop.permute.xlu0 %635
      %v638 = vmul.f32 %v279, %v461
      %v639 = vmul.f32 %v282, %v466
      %v640 = vmul.f32 %v285, %v471
      %v641 = vmul.f32 %v288, %v476
      %v642 = vmul.f32 %v291, %v481
      %v643 = vmul.f32 %v294, %v486
      %v644 = vmul.f32 %v297, %v491
      %v645 = vmul.f32 %v300, %v496
      %v646 = vmul.f32 %v303, %v501
      %v647 = vmul.f32 %v306, %v506
      %v648 = vmul.f32 %v309, %v511
      %v649 = vmul.f32 %v312, %v516
      %v650 = vmul.f32 %v315, %v521
      %v651 = vmul.f32 %v318, %v526
      %v652 = vmul.f32 %v321, %v531
      %v653 = vmul.f32 %v324, %v536
      %v654 = vmul.f32 %v327, %v541
      %v655 = vmul.f32 %v330, %v546
      %v656 = vmul.f32 %v333, %v551
      %v657 = vmul.f32 %v336, %v556
      %v658 = vmul.f32 %v339, %v561
      %v659 = vmul.f32 %v342, %v566
      %v660 = vmul.f32 %v345, %v571
      %v661 = vmul.f32 %v348, %v576
      %v662 = vmul.f32 %v351, %v581
      %v663 = vmul.f32 %v354, %v586
      %v664 = vmul.f32 %v357, %v591
      %v665 = vmul.f32 %v360, %v596
      %v666 = vmul.f32 %v363, %v601
      %v667 = vmul.f32 %v366, %v606
      %v668 = vmul.f32 %v369, %v611
      %v669 = vmul.f32 %v372, %v616
      %v670 = vmul.f32 %v375, %v621
      %v671 = vmul.f32 %v378, %v626
      %v672 = vmul.f32 %v381, %v631
      %v673 = vmul.f32 %v384, %v636
      %v674 = vadd.f32 %v638, %v639
      %v675 = vadd.f32 %v674, %v640
      %v676 = vadd.f32 %v675, %v641
      %v677 = vadd.f32 %v676, %v642
      %v678 = vadd.f32 %v677, %v643
      %v679 = vadd.f32 %v678, %v644
      %v680 = vadd.f32 %v679, %v645
      %v681 = vadd.f32 %v680, %v646
      %v682 = vadd.f32 %v681, %v647
      %v683 = vadd.f32 %v682, %v648
      %v684 = vadd.f32 %v683, %v649
      %v685 = vadd.f32 %v684, %v650
      %v686 = vadd.f32 %v685, %v651
      %v687 = vadd.f32 %v686, %v652
      %v688 = vadd.f32 %v687, %v653
      %v689 = vadd.f32 %v688, %v654
      %v690 = vadd.f32 %v689, %v655
      %v691 = vadd.f32 %v690, %v656
      %v692 = vadd.f32 %v691, %v657
      %v693 = vadd.f32 %v692, %v658
      %v694 = vadd.f32 %v693, %v659
      %v695 = vadd.f32 %v694, %v660
      %v696 = vadd.f32 %v695, %v661
      %v697 = vadd.f32 %v696, %v662
      %v698 = vadd.f32 %v697, %v663
      %v699 = vadd.f32 %v698, %v664
      %v700 = vadd.f32 %v699, %v665
      %v701 = vadd.f32 %v700, %v666
      %v702 = vadd.f32 %v701, %v667
      %v703 = vadd.f32 %v702, %v668
      %v704 = vadd.f32 %v703, %v669
      %v705 = vadd.f32 %v704, %v670
      %v706 = vadd.f32 %v705, %v671
      %v707 = vadd.f32 %v706, %v672
      %v708 = vadd.f32 %v707, %v673
      %v709 = vrot.slane %v708, 4
      %v710 = vadd.f32 %v708, %v709
      %v711 = vrot.slane %v710, 2
      %v712 = vadd.f32 %v710, %v711
      %v713 = vrot.slane %v712, 1
      %v714 = vadd.f32 %v712, %v713
      %715 = vst [vmem:[%s208] sm:$0x1] %v714
      %v716 = vmul.f32 %v638, %v279
      %v717 = vmul.f32 %v639, %v282
      %v718 = vmul.f32 %v640, %v285
      %v719 = vmul.f32 %v641, %v288
      %v720 = vmul.f32 %v642, %v291
      %v721 = vmul.f32 %v643, %v294
      %v722 = vmul.f32 %v644, %v297
      %v723 = vmul.f32 %v645, %v300
      %v724 = vmul.f32 %v646, %v303
      %v725 = vmul.f32 %v647, %v306
      %v726 = vmul.f32 %v648, %v309
      %v727 = vmul.f32 %v649, %v312
      %v728 = vmul.f32 %v650, %v315
      %v729 = vmul.f32 %v651, %v318
      %v730 = vmul.f32 %v652, %v321
      %v731 = vmul.f32 %v653, %v324
      %v732 = vmul.f32 %v654, %v327
      %v733 = vmul.f32 %v655, %v330
      %v734 = vmul.f32 %v656, %v333
      %v735 = vmul.f32 %v657, %v336
      %v736 = vmul.f32 %v658, %v339
      %v737 = vmul.f32 %v659, %v342
      %v738 = vmul.f32 %v660, %v345
      %v739 = vmul.f32 %v661, %v348
      %v740 = vmul.f32 %v662, %v351
      %v741 = vmul.f32 %v663, %v354
      %v742 = vmul.f32 %v664, %v357
      %v743 = vmul.f32 %v665, %v360
      %v744 = vmul.f32 %v666, %v363
      %v745 = vmul.f32 %v667, %v366
      %v746 = vmul.f32 %v668, %v369
      %v747 = vmul.f32 %v669, %v372
      %v748 = vmul.f32 %v670, %v375
      %v749 = vmul.f32 %v671, %v378
      %v750 = vmul.f32 %v672, %v381
      %v751 = vmul.f32 %v673, %v384
      %v752 = vadd.f32 %v716, %v717
      %v753 = vadd.f32 %v752, %v718
      %v754 = vadd.f32 %v753, %v719
      %v755 = vadd.f32 %v754, %v720
      %v756 = vadd.f32 %v755, %v721
      %v757 = vadd.f32 %v756, %v722
      %v758 = vadd.f32 %v757, %v723
      %v759 = vadd.f32 %v758, %v724
      %v760 = vadd.f32 %v759, %v725
      %v761 = vadd.f32 %v760, %v726
      %v762 = vadd.f32 %v761, %v727
      %v763 = vadd.f32 %v762, %v728
      %v764 = vadd.f32 %v763, %v729
      %v765 = vadd.f32 %v764, %v730
      %v766 = vadd.f32 %v765, %v731
      %v767 = vadd.f32 %v766, %v732
      %v768 = vadd.f32 %v767, %v733
      %v769 = vadd.f32 %v768, %v734
      %v770 = vadd.f32 %v769, %v735
      %v771 = vadd.f32 %v770, %v736
      %v772 = vadd.f32 %v771, %v737
      %v773 = vadd.f32 %v772, %v738
      %v774 = vadd.f32 %v773, %v739
      %v775 = vadd.f32 %v774, %v740
      %v776 = vadd.f32 %v775, %v741
      %v777 = vadd.f32 %v776, %v742
      %v778 = vadd.f32 %v777, %v743
      %v779 = vadd.f32 %v778, %v744
      %v780 = vadd.f32 %v779, %v745
      %v781 = vadd.f32 %v780, %v746
      %v782 = vadd.f32 %v781, %v747
      %v783 = vadd.f32 %v782, %v748
      %v784 = vadd.f32 %v783, %v749
      %v785 = vadd.f32 %v784, %v750
      %v786 = vadd.f32 %v785, %v751
      %v787 = vrot.slane %v786, 4
      %v788 = vadd.f32 %v786, %v787
      %v789 = vrot.slane %v788, 2
      %v790 = vadd.f32 %v788, %v789
      %v791 = vrot.slane %v790, 1
      %v792 = vadd.f32 %v790, %v791
      %793 = vst [vmem:[%s208 + $0x1] sm:$0x1] %v792
      %p794 = scmp.lt.s32.totalorder %s16, 1
      %s795 = scalar_select %p794, %s16, 1
      %s796 = smul.addr %s795, 36
      %s797 = smul.addr %s796, 8
      %s798 = scalar_lea.vmem %s3, %s797
      %p799 = scmp.lt.s32.totalorder %s16, 1
      %s800 = scalar_select %p799, %s16, 1
      %s801 = smul.addr %s800, 2
      %s802 = scalar_lea.vmem %s4, %s801
      // Predicated region
      $region33: #{double_conv_pallas.2} parent=31 // pred_check
        %p803 = pneg %p102
      $region34: #{double_conv_pallas.2} parent=31 // pred_check_branch
        %805 = sbr.rel (%p803) target = $region36
      $region35: #{double_conv_pallas.2} parent=31 // pred_region
        _
      $region36: #{double_conv_pallas.2} parent=31 // pred_fallthru
        _
      // Predicated region
      $region37: #{double_conv_pallas.2} parent=31 // pred_check
        %p806 = pneg %p128
      $region38: #{double_conv_pallas.2} parent=31 // pred_check_branch
        %808 = sbr.rel (%p806) target = $region40
      $region39: #{double_conv_pallas.2} parent=31 // pred_region
        _
      $region40: #{double_conv_pallas.2} parent=31 // pred_fallthru
        _
    $region32: #{double_conv_pallas.2} parent=5 // pred_fallthru
      _
    %p809 = scmp.le.s32.totalorder 2, %s11
    // Predicated region
    $region41: #{double_conv_pallas.2} parent=5 // pred_check
      %p810 = pneg %p809
    $region42: #{double_conv_pallas.2} parent=5 // pred_check_branch
      %812 = sbr.rel (%p810) target = $region44
    $region43: #{double_conv_pallas.2} parent=5 // pred_region
      %s813 = ssub.s32 %s11, 2
      // Predicated region
      $region45: #{double_conv_pallas.2} parent=43 // pred_check
        %p814 = pneg %p108
      $region46: #{double_conv_pallas.2} parent=43 // pred_check_branch
        %816 = sbr.rel (%p814) target = $region48
      $region47: #{double_conv_pallas.2} parent=43 // pred_region
        %p817 = scmp.lt.s32.totalorder %s17, 1
        %s818 = scalar_select %p817, %s17, 1
        %s819 = smul.addr %s818, 36
        %s820 = smul.addr %s819, 8
        %s821 = scalar_lea.vmem %s3, %s820
      $region48: #{double_conv_pallas.2} parent=43 // pred_fallthru
        _
      // Predicated region
      $region49: #{double_conv_pallas.2} parent=43 // pred_check
        %p822 = pneg %p134
      $region50: #{double_conv_pallas.2} parent=43 // pred_check_branch
        %824 = sbr.rel (%p822) target = $region52
      $region51: #{double_conv_pallas.2} parent=43 // pred_region
        %p825 = scmp.lt.s32.totalorder %s17, 1
        %s826 = scalar_select %p825, %s17, 1
        %s827 = smul.addr %s826, 2
        %s828 = scalar_lea.vmem %s4, %s827
      $region52: #{double_conv_pallas.2} parent=43 // pred_fallthru
        _
    $region44: #{double_conv_pallas.2} parent=5 // pred_fallthru
      _
  $region6: #{double_conv_pallas.2} parent=0 // loop_footer
    %s15 = sadd.s32 1, %s11
  $region7: #{double_conv_pallas.2} parent=0 // loop_footer_branch
    %10 = sbr.rel target = $region3
  $region8: #{double_conv_pallas.2} parent=0 // loop_exit
    _

// kernel: double_conv_pallas.3
$region0: #{double_conv_pallas.3}
  #allocation0 [shape = 'u32[]', space=smem, size = 0x4, offset = 0x4, fixed_abs, tag = 'smem constant byte address 0x4 - core index']
  #allocation1 [shape = 'u32[72,128]{1,0:T(1,128)}', space=vmem, size = 0x9000, scoped, tag = 'internal scratch']
  #allocation2 [shape = 'f32[328,128]{1,0:T(8,128)}', space=vmem, size = 0x29000, scoped, tag = 'scratch operand']
  #allocation3 [shape = 'f32[288,1152]{1,0:T(8,128)}', space=vmem, size = 0x144000, scoped, tag = 'scratch operand']
  %s0 = inlined_call_operand.vmem [shape: f32[288,1], index: 0, kind: input, shape index: {}]
  %s1 = inlined_call_operand.vmem [shape: f32[2,288,128], index: 1, kind: input, shape index: {}]
  %s2 = inlined_call_operand.vmem [shape: f32[1,128], index: 2, kind: input, shape index: {}]
  %s3 = inlined_call_operand.vmem [shape: f32[1,128], index: 3, kind: input, shape index: {}]
  %s4 = inlined_call_operand.vmem [shape: f32[1152,128], index: 4, kind: input, shape index: {}]
  %s5 = inlined_call_operand.vmem [shape: f32[2,288,128], index: 5, kind: output, shape index: {0}]
  %s6 = inlined_call_operand.vmem [shape: f32[2,2,128], index: 6, kind: output, shape index: {1}]
  %7 = xla_tuple %s5, %s6
  %s8 = sld [smem:[#allocation0]]
  $region61: #{double_conv_pallas.3} parent=0
    _
  %s10 = ssub.s32 1, %s8
  %s11 = scalar_select 0, %s10, %s8
  loop: start=0, step=1, limit=4
  $region2: #{double_conv_pallas.3} parent=0 // loop_pre_header
    _
  $region3: #{double_conv_pallas.3} parent=0 // loop_header
    %s13 = sphi 0, %s17
    %p14 = scmp.ge.s32.totalorder %s13, 4
    %s21 = sphi 0, %s21
    %s23 = sphi 0, %s21
    %s24 = sphi 0, %s23
    %s38 = sphi 0, %s24
    %s44 = sphi 0, %s46
    %s47 = sphi 0, %s44
    %s48 = sphi 0, %s47
    %s64 = sphi 0, %s48
    %s68 = sphi 0, %s68
    %s70 = sphi 0, %s68
    %s71 = sphi 0, %s70
    %s85 = sphi 0, %s71
    %s89 = sphi 0, %s89
    %s91 = sphi 0, %s89
    %s92 = sphi 0, %s91
    %s106 = sphi 0, %s92
    %s110 = sphi 0, %s110
    %s112 = sphi 0, %s110
    %s113 = sphi 0, %s112
    %s127 = sphi 0, %s113
    %s133 = sphi 0, %s135
    %s136 = sphi 0, %s133
    %s137 = sphi 0, %s136
    %s153 = sphi 0, %s137
    %s159 = sphi 0, %s161
    %s162 = sphi 0, %s159
    %s163 = sphi 0, %s162
    %s179 = sphi 0, %s163
  $region4: #{double_conv_pallas.3} parent=0 // loop_header_branch
    %16 = sbr.rel (%p14) target = $region8
  $region5: #{double_conv_pallas.3} parent=0 // loop_body
    %s18 = ssub.s32 %s13, 1
    %s19 = ssub.s32 %s13, 2
    %s20 = sadd.s32 %s13, 1
    %s22 = sadd.s32 %s21, 1
    %p25 = scmp.eq.s32.totalorder %s13, 1
    %p26 = scmp.ne.s32.totalorder %s21, %s23
    %p27 = scmp.eq.s32.totalorder %s13, 0
    %p28 = por %p26, %p27
    %p29 = scmp.ne.s32.totalorder %s21, %s23
    %p30 = scmp.eq.s32.totalorder %s18, 1
    %p31 = por %p29, %p30
    %p32 = scmp.ne.s32.totalorder %s23, %s24
    %p33 = scmp.eq.s32.totalorder %s18, 0
    %p34 = por %p32, %p33
    %p35 = scmp.ne.s32.totalorder %s23, %s24
    %p36 = scmp.eq.s32.totalorder %s19, 1
    %p37 = por %p35, %p36
    %p39 = scmp.ne.s32.totalorder %s24, %s38
    %p40 = scmp.eq.s32.totalorder %s19, 0
    %p41 = por %p39, %p40
    %s42 = ssub.s32 %s13, %s20
    %p43 = scmp.eq.s32.totalorder %s42, 0
    %s45 = sadd.s32 %s44, 1
    %s46 = scalar_select %p43, %s44, %s45
    %p49 = pneg %p43
    %p50 = scmp.eq.s32.totalorder %s13, 1
    %p51 = por %p49, %p50
    %p52 = scmp.ne.s32.totalorder %s44, %s47
    %p53 = scmp.eq.s32.totalorder %s13, 0
    %p54 = por %p52, %p53
    %p55 = scmp.ne.s32.totalorder %s44, %s47
    %p56 = scmp.eq.s32.totalorder %s18, 1
    %p57 = por %p55, %p56
    %p58 = scmp.ne.s32.totalorder %s47, %s48
    %p59 = scmp.eq.s32.totalorder %s18, 0
    %p60 = por %p58, %p59
    %p61 = scmp.ne.s32.totalorder %s47, %s48
    %p62 = scmp.eq.s32.totalorder %s19, 1
    %p63 = por %p61, %p62
    %p65 = scmp.ne.s32.totalorder %s48, %s64
    %p66 = scmp.eq.s32.totalorder %s19, 0
    %p67 = por %p65, %p66
    %s69 = sadd.s32 %s68, 1
    %p72 = scmp.eq.s32.totalorder %s13, 1
    %p73 = scmp.ne.s32.totalorder %s68, %s70
    %p74 = scmp.eq.s32.totalorder %s13, 0
    %p75 = por %p73, %p74
    %p76 = scmp.ne.s32.totalorder %s68, %s70
    %p77 = scmp.eq.s32.totalorder %s18, 1
    %p78 = por %p76, %p77
    %p79 = scmp.ne.s32.totalorder %s70, %s71
    %p80 = scmp.eq.s32.totalorder %s18, 0
    %p81 = por %p79, %p80
    %p82 = scmp.ne.s32.totalorder %s70, %s71
    %p83 = scmp.eq.s32.totalorder %s19, 1
    %p84 = por %p82, %p83
    %p86 = scmp.ne.s32.totalorder %s71, %s85
    %p87 = scmp.eq.s32.totalorder %s19, 0
    %p88 = por %p86, %p87
    %s90 = sadd.s32 %s89, 1
    %p93 = scmp.eq.s32.totalorder %s13, 1
    %p94 = scmp.ne.s32.totalorder %s89, %s91
    %p95 = scmp.eq.s32.totalorder %s13, 0
    %p96 = por %p94, %p95
    %p97 = scmp.ne.s32.totalorder %s89, %s91
    %p98 = scmp.eq.s32.totalorder %s18, 1
    %p99 = por %p97, %p98
    %p100 = scmp.ne.s32.totalorder %s91, %s92
    %p101 = scmp.eq.s32.totalorder %s18, 0
    %p102 = por %p100, %p101
    %p103 = scmp.ne.s32.totalorder %s91, %s92
    %p104 = scmp.eq.s32.totalorder %s19, 1
    %p105 = por %p103, %p104
    %p107 = scmp.ne.s32.totalorder %s92, %s106
    %p108 = scmp.eq.s32.totalorder %s19, 0
    %p109 = por %p107, %p108
    %s111 = sadd.s32 %s110, 1
    %p114 = scmp.eq.s32.totalorder %s13, 1
    %p115 = scmp.ne.s32.totalorder %s110, %s112
    %p116 = scmp.eq.s32.totalorder %s13, 0
    %p117 = por %p115, %p116
    %p118 = scmp.ne.s32.totalorder %s110, %s112
    %p119 = scmp.eq.s32.totalorder %s18, 1
    %p120 = por %p118, %p119
    %p121 = scmp.ne.s32.totalorder %s112, %s113
    %p122 = scmp.eq.s32.totalorder %s18, 0
    %p123 = por %p121, %p122
    %p124 = scmp.ne.s32.totalorder %s112, %s113
    %p125 = scmp.eq.s32.totalorder %s19, 1
    %p126 = por %p124, %p125
    %p128 = scmp.ne.s32.totalorder %s113, %s127
    %p129 = scmp.eq.s32.totalorder %s19, 0
    %p130 = por %p128, %p129
    %s131 = ssub.s32 %s13, %s20
    %p132 = scmp.eq.s32.totalorder %s131, 0
    %s134 = sadd.s32 %s133, 1
    %s135 = scalar_select %p132, %s133, %s134
    %p138 = pneg %p132
    %p139 = scmp.eq.s32.totalorder %s13, 1
    %p140 = por %p138, %p139
    %p141 = scmp.ne.s32.totalorder %s133, %s136
    %p142 = scmp.eq.s32.totalorder %s13, 0
    %p143 = por %p141, %p142
    %p144 = scmp.ne.s32.totalorder %s133, %s136
    %p145 = scmp.eq.s32.totalorder %s18, 1
    %p146 = por %p144, %p145
    %p147 = scmp.ne.s32.totalorder %s136, %s137
    %p148 = scmp.eq.s32.totalorder %s18, 0
    %p149 = por %p147, %p148
    %p150 = scmp.ne.s32.totalorder %s136, %s137
    %p151 = scmp.eq.s32.totalorder %s19, 1
    %p152 = por %p150, %p151
    %p154 = scmp.ne.s32.totalorder %s137, %s153
    %p155 = scmp.eq.s32.totalorder %s19, 0
    %p156 = por %p154, %p155
    %s157 = ssub.s32 %s13, %s20
    %p158 = scmp.eq.s32.totalorder %s157, 0
    %s160 = sadd.s32 %s159, 1
    %s161 = scalar_select %p158, %s159, %s160
    %p164 = pneg %p158
    %p165 = scmp.eq.s32.totalorder %s13, 1
    %p166 = por %p164, %p165
    %p167 = scmp.ne.s32.totalorder %s159, %s162
    %p168 = scmp.eq.s32.totalorder %s13, 0
    %p169 = por %p167, %p168
    %p170 = scmp.ne.s32.totalorder %s159, %s162
    %p171 = scmp.eq.s32.totalorder %s18, 1
    %p172 = por %p170, %p171
    %p173 = scmp.ne.s32.totalorder %s162, %s163
    %p174 = scmp.eq.s32.totalorder %s18, 0
    %p175 = por %p173, %p174
    %p176 = scmp.ne.s32.totalorder %s162, %s163
    %p177 = scmp.eq.s32.totalorder %s19, 1
    %p178 = por %p176, %p177
    %p180 = scmp.ne.s32.totalorder %s163, %s179
    %p181 = scmp.eq.s32.totalorder %s19, 0
    %p182 = por %p180, %p181
    %p183 = scmp.le.s32.totalorder 1, %s13
    %p184 = scmp.lt.s32.totalorder %s13, 3
    %p185 = pnand %p183, %p184
    %p186 = pneg %p185
    // Predicated region
    $region9: #{double_conv_pallas.3} parent=5 // pred_check
      _
    $region10: #{double_conv_pallas.3} parent=5 // pred_check_branch
      %188 = sbr.rel (%p185) target = $region12
    $region11: #{double_conv_pallas.3} parent=5 // pred_region
      %s189 = ssub.s32 %s13, 1
      // Predicated region
      $region13: #{double_conv_pallas.3} parent=11 // pred_check
        %p190 = pneg %p34
      $region14: #{double_conv_pallas.3} parent=11 // pred_check_branch
        %192 = sbr.rel (%p190) target = $region16
      $region15: #{double_conv_pallas.3} parent=11 // pred_region
        _
      $region16: #{double_conv_pallas.3} parent=11 // pred_fallthru
        _
      // Predicated region
      $region17: #{double_conv_pallas.3} parent=11 // pred_check
        %p193 = pneg %p81
      $region18: #{double_conv_pallas.3} parent=11 // pred_check_branch
        %195 = sbr.rel (%p193) target = $region20
      $region19: #{double_conv_pallas.3} parent=11 // pred_region
        _
      $region20: #{double_conv_pallas.3} parent=11 // pred_fallthru
        _
      // Predicated region
      $region21: #{double_conv_pallas.3} parent=11 // pred_check
        %p196 = pneg %p102
      $region22: #{double_conv_pallas.3} parent=11 // pred_check_branch
        %198 = sbr.rel (%p196) target = $region24
      $region23: #{double_conv_pallas.3} parent=11 // pred_region
        _
      $region24: #{double_conv_pallas.3} parent=11 // pred_fallthru
        _
      // Predicated region
      $region25: #{double_conv_pallas.3} parent=11 // pred_check
        %p199 = pneg %p123
      $region26: #{double_conv_pallas.3} parent=11 // pred_check_branch
        %201 = sbr.rel (%p199) target = $region28
      $region27: #{double_conv_pallas.3} parent=11 // pred_region
        _
      $region28: #{double_conv_pallas.3} parent=11 // pred_fallthru
        _
    $region12: #{double_conv_pallas.3} parent=5 // pred_fallthru
      _
    %p202 = scmp.lt.s32.totalorder %s13, 2
    // Predicated region
    $region29: #{double_conv_pallas.3} parent=5 // pred_check
      %p203 = pneg %p202
    $region30: #{double_conv_pallas.3} parent=5 // pred_check_branch
      %205 = sbr.rel (%p203) target = $region32
    $region31: #{double_conv_pallas.3} parent=5 // pred_region
      // Predicated region
      $region33: #{double_conv_pallas.3} parent=31 // pred_check
        %p206 = pneg %p54
      $region34: #{double_conv_pallas.3} parent=31 // pred_check_branch
        %208 = sbr.rel (%p206) target = $region36
      $region35: #{double_conv_pallas.3} parent=31 // pred_region
        %p209 = scmp.lt.s32.totalorder %s13, 1
        %s210 = scalar_select %p209, %s13, 1
        %s211 = smul.addr %s210, 36
        %s212 = smul.addr %s211, 8
        %s213 = scalar_lea.vmem %s1, %s212
      $region36: #{double_conv_pallas.3} parent=31 // pred_fallthru
        _
    $region32: #{double_conv_pallas.3} parent=5 // pred_fallthru
      _
    %p214 = scmp.le.s32.totalorder 1, %s13
    %p215 = scmp.lt.s32.totalorder %s13, 3
    %p216 = pnand %p214, %p215
    %p217 = pneg %p216
    // Predicated region
    $region37: #{double_conv_pallas.3} parent=5 // pred_check
      _
    $region38: #{double_conv_pallas.3} parent=5 // pred_check_branch
      %219 = sbr.rel (%p216) target = $region40
    $region39: #{double_conv_pallas.3} parent=5 // pred_region
      %s220 = ssub.s32 %s13, 1
      %p221 = pneg %p34
      %p222 = pneg %p31
      %p223 = scmp.lt.s32.totalorder %s18, 1
      %s224 = scalar_select %p223, %s18, 1
      %s225 = smul.addr %s224, 36
      %s226 = smul.addr %s225, 8
      %s227 = scalar_lea.vmem %s1, %s226
      %p228 = pneg %p60
      %p229 = pneg %p57
      %p230 = pneg %p81
      %p231 = pneg %p78
      %p232 = pneg %p102
      %p233 = pneg %p99
      %p234 = pneg %p123
      %p235 = pneg %p120
      %p236 = pneg %p149
      %p237 = pneg %p146
      %p238 = scmp.lt.s32.totalorder %s18, 1
      %s239 = scalar_select %p238, %s18, 1
      %s240 = smul.addr %s239, 36
      %s241 = smul.addr %s240, 8
      %s242 = scalar_lea.vmem %s5, %s241
      %p243 = pneg %p175
      %p244 = pneg %p172
      %p245 = scmp.lt.s32.totalorder %s18, 1
      %s246 = scalar_select %p245, %s18, 1
      %s247 = smul.addr %s246, 2
      %s248 = scalar_lea.vmem %s6, %s247
      %p249 = scmp.lt.s32.totalorder %s18, 1
      %s250 = scalar_select %p249, %s18, 1
      %s251 = smul.addr %s250, 36
      %s252 = smul.addr %s251, 8
      %s253 = scalar_lea.vmem %s1, %s252
      %p254 = scmp.lt.s32.totalorder %s18, 1
      %s255 = scalar_select %p254, %s18, 1
      %s256 = smul.addr %s255, 36
      %s257 = smul.addr %s256, 8
      %s258 = scalar_lea.vmem %s5, %s257
      %p259 = scmp.lt.s32.totalorder %s18, 1
      %s260 = scalar_select %p259, %s18, 1
      %s261 = smul.addr %s260, 2
      %s262 = scalar_lea.vmem %s6, %s261
      %v263 = vld [vmem:[%s253] sm:$0xff]
      %v264 = vld [vmem:[%s253 + $0x8] sm:$0xff]
      %v265 = vld [vmem:[%s253 + $0x10] sm:$0xff]
      %v266 = vld [vmem:[%s253 + $0x18] sm:$0xff]
      %v267 = vld [vmem:[%s253 + $0x20] sm:$0xff]
      %v268 = vld [vmem:[%s253 + $0x28] sm:$0xff]
      %v269 = vld [vmem:[%s253 + $0x30] sm:$0xff]
      %v270 = vld [vmem:[%s253 + $0x38] sm:$0xff]
      %v271 = vld [vmem:[%s253 + $0x40] sm:$0xff]
      %v272 = vld [vmem:[%s253 + $0x48] sm:$0xff]
      %v273 = vld [vmem:[%s253 + $0x50] sm:$0xff]
      %v274 = vld [vmem:[%s253 + $0x58] sm:$0xff]
      %v275 = vld [vmem:[%s253 + $0x60] sm:$0xff]
      %v276 = vld [vmem:[%s253 + $0x68] sm:$0xff]
      %v277 = vld [vmem:[%s253 + $0x70] sm:$0xff]
      %v278 = vld [vmem:[%s253 + $0x78] sm:$0xff]
      %v279 = vld [vmem:[%s253 + $0x80] sm:$0xff]
      %v280 = vld [vmem:[%s253 + $0x88] sm:$0xff]
      %v281 = vld [vmem:[%s253 + $0x90] sm:$0xff]
      %v282 = vld [vmem:[%s253 + $0x98] sm:$0xff]
      %v283 = vld [vmem:[%s253 + $0xa0] sm:$0xff]
      %v284 = vld [vmem:[%s253 + $0xa8] sm:$0xff]
      %v285 = vld [vmem:[%s253 + $0xb0] sm:$0xff]
      %v286 = vld [vmem:[%s253 + $0xb8] sm:$0xff]
      %v287 = vld [vmem:[%s253 + $0xc0] sm:$0xff]
      %v288 = vld [vmem:[%s253 + $0xc8] sm:$0xff]
      %v289 = vld [vmem:[%s253 + $0xd0] sm:$0xff]
      %v290 = vld [vmem:[%s253 + $0xd8] sm:$0xff]
      %v291 = vld [vmem:[%s253 + $0xe0] sm:$0xff]
      %v292 = vld [vmem:[%s253 + $0xe8] sm:$0xff]
      %v293 = vld [vmem:[%s253 + $0xf0] sm:$0xff]
      %v294 = vld [vmem:[%s253 + $0xf8] sm:$0xff]
      %v295 = vld [vmem:[%s253 + $0x100] sm:$0xff]
      %v296 = vld [vmem:[%s253 + $0x108] sm:$0xff]
      %v297 = vld [vmem:[%s253 + $0x110] sm:$0xff]
      %v298 = vld [vmem:[%s253 + $0x118] sm:$0xff]
      %v299 = vld [vmem:[%s2] sm:$0x1]
      %v301 = vperm.slane %v299, 0
      %v303 = vmul.f32 %v263, %v301
      %v304 = vmul.f32 %v264, %v301
      %v305 = vmul.f32 %v265, %v301
      %v306 = vmul.f32 %v266, %v301
      %v307 = vmul.f32 %v267, %v301
      %v308 = vmul.f32 %v268, %v301
      %v309 = vmul.f32 %v269, %v301
      %v310 = vmul.f32 %v270, %v301
      %v311 = vmul.f32 %v271, %v301
      %v312 = vmul.f32 %v272, %v301
      %v313 = vmul.f32 %v273, %v301
      %v314 = vmul.f32 %v274, %v301
      %v315 = vmul.f32 %v275, %v301
      %v316 = vmul.f32 %v276, %v301
      %v317 = vmul.f32 %v277, %v301
      %v318 = vmul.f32 %v278, %v301
      %v319 = vmul.f32 %v279, %v301
      %v320 = vmul.f32 %v280, %v301
      %v321 = vmul.f32 %v281, %v301
      %v322 = vmul.f32 %v282, %v301
      %v323 = vmul.f32 %v283, %v301
      %v324 = vmul.f32 %v284, %v301
      %v325 = vmul.f32 %v285, %v301
      %v326 = vmul.f32 %v286, %v301
      %v327 = vmul.f32 %v287, %v301
      %v328 = vmul.f32 %v288, %v301
      %v329 = vmul.f32 %v289, %v301
      %v330 = vmul.f32 %v290, %v301
      %v331 = vmul.f32 %v291, %v301
      %v332 = vmul.f32 %v292, %v301
      %v333 = vmul.f32 %v293, %v301
      %v334 = vmul.f32 %v294, %v301
      %v335 = vmul.f32 %v295, %v301
      %v336 = vmul.f32 %v296, %v301
      %v337 = vmul.f32 %v297, %v301
      %v338 = vmul.f32 %v298, %v301
      %v339 = vld [vmem:[%s3] sm:$0x1]
      %v341 = vperm.slane %v339, 0
      %v343 = vadd.f32 %v303, %v341
      %v344 = vadd.f32 %v304, %v341
      %v345 = vadd.f32 %v305, %v341
      %v346 = vadd.f32 %v306, %v341
      %v347 = vadd.f32 %v307, %v341
      %v348 = vadd.f32 %v308, %v341
      %v349 = vadd.f32 %v309, %v341
      %v350 = vadd.f32 %v310, %v341
      %v351 = vadd.f32 %v311, %v341
      %v352 = vadd.f32 %v312, %v341
      %v353 = vadd.f32 %v313, %v341
      %v354 = vadd.f32 %v314, %v341
      %v355 = vadd.f32 %v315, %v341
      %v356 = vadd.f32 %v316, %v341
      %v357 = vadd.f32 %v317, %v341
      %v358 = vadd.f32 %v318, %v341
      %v359 = vadd.f32 %v319, %v341
      %v360 = vadd.f32 %v320, %v341
      %v361 = vadd.f32 %v321, %v341
      %v362 = vadd.f32 %v322, %v341
      %v363 = vadd.f32 %v323, %v341
      %v364 = vadd.f32 %v324, %v341
      %v365 = vadd.f32 %v325, %v341
      %v366 = vadd.f32 %v326, %v341
      %v367 = vadd.f32 %v327, %v341
      %v368 = vadd.f32 %v328, %v341
      %v369 = vadd.f32 %v329, %v341
      %v370 = vadd.f32 %v330, %v341
      %v371 = vadd.f32 %v331, %v341
      %v372 = vadd.f32 %v332, %v341
      %v373 = vadd.f32 %v333, %v341
      %v374 = vadd.f32 %v334, %v341
      %v375 = vadd.f32 %v335, %v341
      %v376 = vadd.f32 %v336, %v341
      %v377 = vadd.f32 %v337, %v341
      %v378 = vadd.f32 %v338, %v341
      %v379 = vmax.f32 %v343, 0.0
      %v380 = vmax.f32 %v344, 0.0
      %v381 = vmax.f32 %v345, 0.0
      %v382 = vmax.f32 %v346, 0.0
      %v383 = vmax.f32 %v347, 0.0
      %v384 = vmax.f32 %v348, 0.0
      %v385 = vmax.f32 %v349, 0.0
      %v386 = vmax.f32 %v350, 0.0
      %v387 = vmax.f32 %v351, 0.0
      %v388 = vmax.f32 %v352, 0.0
      %v389 = vmax.f32 %v353, 0.0
      %v390 = vmax.f32 %v354, 0.0
      %v391 = vmax.f32 %v355, 0.0
      %v392 = vmax.f32 %v356, 0.0
      %v393 = vmax.f32 %v357, 0.0
      %v394 = vmax.f32 %v358, 0.0
      %v395 = vmax.f32 %v359, 0.0
      %v396 = vmax.f32 %v360, 0.0
      %v397 = vmax.f32 %v361, 0.0
      %v398 = vmax.f32 %v362, 0.0
      %v399 = vmax.f32 %v363, 0.0
      %v400 = vmax.f32 %v364, 0.0
      %v401 = vmax.f32 %v365, 0.0
      %v402 = vmax.f32 %v366, 0.0
      %v403 = vmax.f32 %v367, 0.0
      %v404 = vmax.f32 %v368, 0.0
      %v405 = vmax.f32 %v369, 0.0
      %v406 = vmax.f32 %v370, 0.0
      %v407 = vmax.f32 %v371, 0.0
      %v408 = vmax.f32 %v372, 0.0
      %v409 = vmax.f32 %v373, 0.0
      %v410 = vmax.f32 %v374, 0.0
      %v411 = vmax.f32 %v375, 0.0
      %v412 = vmax.f32 %v376, 0.0
      %v413 = vmax.f32 %v377, 0.0
      %v414 = vmax.f32 %v378, 0.0
      %v415 = vld [vmem:[%s0] sm:$0xff]
      %v416 = vld [vmem:[%s0 + $0x8] sm:$0xff]
      %v417 = vld [vmem:[%s0 + $0x10] sm:$0xff]
      %v418 = vld [vmem:[%s0 + $0x18] sm:$0xff]
      %v419 = vld [vmem:[%s0 + $0x20] sm:$0xff]
      %v420 = vld [vmem:[%s0 + $0x28] sm:$0xff]
      %v421 = vld [vmem:[%s0 + $0x30] sm:$0xff]
      %v422 = vld [vmem:[%s0 + $0x38] sm:$0xff]
      %v423 = vld [vmem:[%s0 + $0x40] sm:$0xff]
      %v424 = vld [vmem:[%s0 + $0x48] sm:$0xff]
      %v425 = vld [vmem:[%s0 + $0x50] sm:$0xff]
      %v426 = vld [vmem:[%s0 + $0x58] sm:$0xff]
      %v427 = vld [vmem:[%s0 + $0x60] sm:$0xff]
      %v428 = vld [vmem:[%s0 + $0x68] sm:$0xff]
      %v429 = vld [vmem:[%s0 + $0x70] sm:$0xff]
      %v430 = vld [vmem:[%s0 + $0x78] sm:$0xff]
      %v431 = vld [vmem:[%s0 + $0x80] sm:$0xff]
      %v432 = vld [vmem:[%s0 + $0x88] sm:$0xff]
      %v433 = vld [vmem:[%s0 + $0x90] sm:$0xff]
      %v434 = vld [vmem:[%s0 + $0x98] sm:$0xff]
      %v435 = vld [vmem:[%s0 + $0xa0] sm:$0xff]
      %v436 = vld [vmem:[%s0 + $0xa8] sm:$0xff]
      %v437 = vld [vmem:[%s0 + $0xb0] sm:$0xff]
      %v438 = vld [vmem:[%s0 + $0xb8] sm:$0xff]
      %v439 = vld [vmem:[%s0 + $0xc0] sm:$0xff]
      %v440 = vld [vmem:[%s0 + $0xc8] sm:$0xff]
      %v441 = vld [vmem:[%s0 + $0xd0] sm:$0xff]
      %v442 = vld [vmem:[%s0 + $0xd8] sm:$0xff]
      %v443 = vld [vmem:[%s0 + $0xe0] sm:$0xff]
      %v444 = vld [vmem:[%s0 + $0xe8] sm:$0xff]
      %v445 = vld [vmem:[%s0 + $0xf0] sm:$0xff]
      %v446 = vld [vmem:[%s0 + $0xf8] sm:$0xff]
      %v447 = vld [vmem:[%s0 + $0x100] sm:$0xff]
      %v448 = vld [vmem:[%s0 + $0x108] sm:$0xff]
      %v449 = vld [vmem:[%s0 + $0x110] sm:$0xff]
      %v450 = vld [vmem:[%s0 + $0x118] sm:$0xff]
      %452 = vset.pattern.permute.xlu0 0
      %453 = vperm.xlu0 %452, %v415
      %v454 = vpop.permute.xlu0 %453
      %457 = vset.pattern.permute.xlu0 0
      %458 = vperm.xlu0 %457, %v416
      %v459 = vpop.permute.xlu0 %458
      %462 = vset.pattern.permute.xlu0 0
      %463 = vperm.xlu0 %462, %v417
      %v464 = vpop.permute.xlu0 %463
      %467 = vset.pattern.permute.xlu0 0
      %468 = vperm.xlu0 %467, %v418
      %v469 = vpop.permute.xlu0 %468
      %472 = vset.pattern.permute.xlu0 0
      %473 = vperm.xlu0 %472, %v419
      %v474 = vpop.permute.xlu0 %473
      %477 = vset.pattern.permute.xlu0 0
      %478 = vperm.xlu0 %477, %v420
      %v479 = vpop.permute.xlu0 %478
      %482 = vset.pattern.permute.xlu0 0
      %483 = vperm.xlu0 %482, %v421
      %v484 = vpop.permute.xlu0 %483
      %487 = vset.pattern.permute.xlu0 0
      %488 = vperm.xlu0 %487, %v422
      %v489 = vpop.permute.xlu0 %488
      %492 = vset.pattern.permute.xlu0 0
      %493 = vperm.xlu0 %492, %v423
      %v494 = vpop.permute.xlu0 %493
      %497 = vset.pattern.permute.xlu0 0
      %498 = vperm.xlu0 %497, %v424
      %v499 = vpop.permute.xlu0 %498
      %502 = vset.pattern.permute.xlu0 0
      %503 = vperm.xlu0 %502, %v425
      %v504 = vpop.permute.xlu0 %503
      %507 = vset.pattern.permute.xlu0 0
      %508 = vperm.xlu0 %507, %v426
      %v509 = vpop.permute.xlu0 %508
      %512 = vset.pattern.permute.xlu0 0
      %513 = vperm.xlu0 %512, %v427
      %v514 = vpop.permute.xlu0 %513
      %517 = vset.pattern.permute.xlu0 0
      %518 = vperm.xlu0 %517, %v428
      %v519 = vpop.permute.xlu0 %518
      %522 = vset.pattern.permute.xlu0 0
      %523 = vperm.xlu0 %522, %v429
      %v524 = vpop.permute.xlu0 %523
      %527 = vset.pattern.permute.xlu0 0
      %528 = vperm.xlu0 %527, %v430
      %v529 = vpop.permute.xlu0 %528
      %532 = vset.pattern.permute.xlu0 0
      %533 = vperm.xlu0 %532, %v431
      %v534 = vpop.permute.xlu0 %533
      %537 = vset.pattern.permute.xlu0 0
      %538 = vperm.xlu0 %537, %v432
      %v539 = vpop.permute.xlu0 %538
      %542 = vset.pattern.permute.xlu0 0
      %543 = vperm.xlu0 %542, %v433
      %v544 = vpop.permute.xlu0 %543
      %547 = vset.pattern.permute.xlu0 0
      %548 = vperm.xlu0 %547, %v434
      %v549 = vpop.permute.xlu0 %548
      %552 = vset.pattern.permute.xlu0 0
      %553 = vperm.xlu0 %552, %v435
      %v554 = vpop.permute.xlu0 %553
      %557 = vset.pattern.permute.xlu0 0
      %558 = vperm.xlu0 %557, %v436
      %v559 = vpop.permute.xlu0 %558
      %562 = vset.pattern.permute.xlu0 0
      %563 = vperm.xlu0 %562, %v437
      %v564 = vpop.permute.xlu0 %563
      %567 = vset.pattern.permute.xlu0 0
      %568 = vperm.xlu0 %567, %v438
      %v569 = vpop.permute.xlu0 %568
      %572 = vset.pattern.permute.xlu0 0
      %573 = vperm.xlu0 %572, %v439
      %v574 = vpop.permute.xlu0 %573
      %577 = vset.pattern.permute.xlu0 0
      %578 = vperm.xlu0 %577, %v440
      %v579 = vpop.permute.xlu0 %578
      %582 = vset.pattern.permute.xlu0 0
      %583 = vperm.xlu0 %582, %v441
      %v584 = vpop.permute.xlu0 %583
      %587 = vset.pattern.permute.xlu0 0
      %588 = vperm.xlu0 %587, %v442
      %v589 = vpop.permute.xlu0 %588
      %592 = vset.pattern.permute.xlu0 0
      %593 = vperm.xlu0 %592, %v443
      %v594 = vpop.permute.xlu0 %593
      %597 = vset.pattern.permute.xlu0 0
      %598 = vperm.xlu0 %597, %v444
      %v599 = vpop.permute.xlu0 %598
      %602 = vset.pattern.permute.xlu0 0
      %603 = vperm.xlu0 %602, %v445
      %v604 = vpop.permute.xlu0 %603
      %607 = vset.pattern.permute.xlu0 0
      %608 = vperm.xlu0 %607, %v446
      %v609 = vpop.permute.xlu0 %608
      %612 = vset.pattern.permute.xlu0 0
      %613 = vperm.xlu0 %612, %v447
      %v614 = vpop.permute.xlu0 %613
      %617 = vset.pattern.permute.xlu0 0
      %618 = vperm.xlu0 %617, %v448
      %v619 = vpop.permute.xlu0 %618
      %622 = vset.pattern.permute.xlu0 0
      %623 = vperm.xlu0 %622, %v449
      %v624 = vpop.permute.xlu0 %623
      %627 = vset.pattern.permute.xlu0 0
      %628 = vperm.xlu0 %627, %v450
      %v629 = vpop.permute.xlu0 %628
      %v631 = vmul.f32 %v379, %v454
      %v632 = vmul.f32 %v380, %v459
      %v633 = vmul.f32 %v381, %v464
      %v634 = vmul.f32 %v382, %v469
      %v635 = vmul.f32 %v383, %v474
      %v636 = vmul.f32 %v384, %v479
      %v637 = vmul.f32 %v385, %v484
      %v638 = vmul.f32 %v386, %v489
      %v639 = vmul.f32 %v387, %v494
      %v640 = vmul.f32 %v388, %v499
      %v641 = vmul.f32 %v389, %v504
      %v642 = vmul.f32 %v390, %v509
      %v643 = vmul.f32 %v391, %v514
      %v644 = vmul.f32 %v392, %v519
      %v645 = vmul.f32 %v393, %v524
      %v646 = vmul.f32 %v394, %v529
      %v647 = vmul.f32 %v395, %v534
      %v648 = vmul.f32 %v396, %v539
      %v649 = vmul.f32 %v397, %v544
      %v650 = vmul.f32 %v398, %v549
      %v651 = vmul.f32 %v399, %v554
      %v652 = vmul.f32 %v400, %v559
      %v653 = vmul.f32 %v401, %v564
      %v654 = vmul.f32 %v402, %v569
      %v655 = vmul.f32 %v403, %v574
      %v656 = vmul.f32 %v404, %v579
      %v657 = vmul.f32 %v405, %v584
      %v658 = vmul.f32 %v406, %v589
      %v659 = vmul.f32 %v407, %v594
      %v660 = vmul.f32 %v408, %v599
      %v661 = vmul.f32 %v409, %v604
      %v662 = vmul.f32 %v410, %v609
      %v663 = vmul.f32 %v411, %v614
      %v664 = vmul.f32 %v412, %v619
      %v665 = vmul.f32 %v413, %v624
      %v666 = vmul.f32 %v414, %v629
      %667 = vst [vmem:[#allocation2] sm:$0xff] 0.0
      %668 = vst [vmem:[#allocation2 + $0x8] sm:$0xff] 0.0
      %669 = vst [vmem:[#allocation2 + $0x10] sm:$0x7] 0.0
      %670 = vst [vmem:[#allocation2 + $0x13] sm:$0xff] %v631
      %671 = vst [vmem:[#allocation2 + $0x1b] sm:$0xff] %v632
      %672 = vst [vmem:[#allocation2 + $0x23] sm:$0xff] %v633
      %673 = vst [vmem:[#allocation2 + $0x2b] sm:$0xff] %v634
      %674 = vst [vmem:[#allocation2 + $0x33] sm:$0xff] %v635
      %675 = vst [vmem:[#allocation2 + $0x3b] sm:$0xff] %v636
      %676 = vst [vmem:[#allocation2 + $0x43] sm:$0xff] %v637
      %677 = vst [vmem:[#allocation2 + $0x4b] sm:$0xff] %v638
      %678 = vst [vmem:[#allocation2 + $0x53] sm:$0xff] %v639
      %679 = vst [vmem:[#allocation2 + $0x5b] sm:$0xff] %v640
      %680 = vst [vmem:[#allocation2 + $0x63] sm:$0xff] %v641
      %681 = vst [vmem:[#allocation2 + $0x6b] sm:$0xff] %v642
      %682 = vst [vmem:[#allocation2 + $0x73] sm:$0xff] %v643
      %683 = vst [vmem:[#allocation2 + $0x7b] sm:$0xff] %v644
      %684 = vst [vmem:[#allocation2 + $0x83] sm:$0xff] %v645
      %685 = vst [vmem:[#allocation2 + $0x8b] sm:$0xff] %v646
      %686 = vst [vmem:[#allocation2 + $0x93] sm:$0xff] %v647
      %687 = vst [vmem:[#allocation2 + $0x9b] sm:$0xff] %v648
      %688 = vst [vmem:[#allocation2 + $0xa3] sm:$0xff] %v649
      %689 = vst [vmem:[#allocation2 + $0xab] sm:$0xff] %v650
      %690 = vst [vmem:[#allocation2 + $0xb3] sm:$0xff] %v651
      %691 = vst [vmem:[#allocation2 + $0xbb] sm:$0xff] %v652
      %692 = vst [vmem:[#allocation2 + $0xc3] sm:$0xff] %v653
      %693 = vst [vmem:[#allocation2 + $0xcb] sm:$0xff] %v654
      %694 = vst [vmem:[#allocation2 + $0xd3] sm:$0xff] %v655
      %695 = vst [vmem:[#allocation2 + $0xdb] sm:$0xff] %v656
      %696 = vst [vmem:[#allocation2 + $0xe3] sm:$0xff] %v657
      %697 = vst [vmem:[#allocation2 + $0xeb] sm:$0xff] %v658
      %698 = vst [vmem:[#allocation2 + $0xf3] sm:$0xff] %v659
      %699 = vst [vmem:[#allocation2 + $0xfb] sm:$0xff] %v660
      %700 = vst [vmem:[#allocation2 + $0x103] sm:$0xff] %v661
      %701 = vst [vmem:[#allocation2 + $0x10b] sm:$0xff] %v662
      %702 = vst [vmem:[#allocation2 + $0x113] sm:$0xff] %v663
      %703 = vst [vmem:[#allocation2 + $0x11b] sm:$0xff] %v664
      %704 = vst [vmem:[#allocation2 + $0x123] sm:$0xff] %v665
      %705 = vst [vmem:[#allocation2 + $0x12b] sm:$0xff] %v666
      %706 = vst [vmem:[#allocation2 + $0x133] sm:$0xff] 0.0
      %707 = vst [vmem:[#allocation2 + $0x13b] sm:$0xff] 0.0
      %708 = vst [vmem:[#allocation2 + $0x143] sm:$0x1f] 0.0
      %v709 = vld [vmem:[#allocation2] sm:$0xff]
      %v710 = vld [vmem:[#allocation2 + $0x8] sm:$0xff]
      %v711 = vld [vmem:[#allocation2 + $0x10] sm:$0xff]
      %v712 = vld [vmem:[#allocation2 + $0x18] sm:$0xff]
      %v713 = vld [vmem:[#allocation2 + $0x20] sm:$0xff]
      %v714 = vld [vmem:[#allocation2 + $0x28] sm:$0xff]
      %v715 = vld [vmem:[#allocation2 + $0x30] sm:$0xff]
      %v716 = vld [vmem:[#allocation2 + $0x38] sm:$0xff]
      %v717 = vld [vmem:[#allocation2 + $0x40] sm:$0xff]
      %v718 = vld [vmem:[#allocation2 + $0x48] sm:$0xff]
      %v719 = vld [vmem:[#allocation2 + $0x50] sm:$0xff]
      %v720 = vld [vmem:[#allocation2 + $0x58] sm:$0xff]
      %v721 = vld [vmem:[#allocation2 + $0x60] sm:$0xff]
      %v722 = vld [vmem:[#allocation2 + $0x68] sm:$0xff]
      %v723 = vld [vmem:[#allocation2 + $0x70] sm:$0xff]
      %v724 = vld [vmem:[#allocation2 + $0x78] sm:$0xff]
      %v725 = vld [vmem:[#allocation2 + $0x80] sm:$0xff]
      %v726 = vld [vmem:[#allocation2 + $0x88] sm:$0xff]
      %v727 = vld [vmem:[#allocation2 + $0x90] sm:$0xff]
      %v728 = vld [vmem:[#allocation2 + $0x98] sm:$0xff]
      %v729 = vld [vmem:[#allocation2 + $0xa0] sm:$0xff]
      %v730 = vld [vmem:[#allocation2 + $0xa8] sm:$0xff]
      %v731 = vld [vmem:[#allocation2 + $0xb0] sm:$0xff]
      %v732 = vld [vmem:[#allocation2 + $0xb8] sm:$0xff]
      %v733 = vld [vmem:[#allocation2 + $0xc0] sm:$0xff]
      %v734 = vld [vmem:[#allocation2 + $0xc8] sm:$0xff]
      %v735 = vld [vmem:[#allocation2 + $0xd0] sm:$0xff]
      %v736 = vld [vmem:[#allocation2 + $0xd8] sm:$0xff]
      %v737 = vld [vmem:[#allocation2 + $0xe0] sm:$0xff]
      %v738 = vld [vmem:[#allocation2 + $0xe8] sm:$0xff]
      %v739 = vld [vmem:[#allocation2 + $0xf0] sm:$0xff]
      %v740 = vld [vmem:[#allocation2 + $0xf8] sm:$0xff]
      %v741 = vld [vmem:[#allocation2 + $0x100] sm:$0xff]
      %v742 = vld [vmem:[#allocation2 + $0x108] sm:$0xff]
      %v743 = vld [vmem:[#allocation2 + $0x110] sm:$0xff]
      %v744 = vld [vmem:[#allocation2 + $0x118] sm:$0xff]
      %745 = vst [vmem:[#allocation3] sm:$0xff] %v709
      %746 = vst [vmem:[#allocation3 + $0x48] sm:$0xff] %v710
      %747 = vst [vmem:[#allocation3 + $0x90] sm:$0xff] %v711
      %748 = vst [vmem:[#allocation3 + $0xd8] sm:$0xff] %v712
      %749 = vst [vmem:[#allocation3 + $0x120] sm:$0xff] %v713
      %750 = vst [vmem:[#allocation3 + $0x168] sm:$0xff] %v714
      %751 = vst [vmem:[#allocation3 + $0x1b0] sm:$0xff] %v715
      %752 = vst [vmem:[#allocation3 + $0x1f8] sm:$0xff] %v716
      %753 = vst [vmem:[#allocation3 + $0x240] sm:$0xff] %v717
      %754 = vst [vmem:[#allocation3 + $0x288] sm:$0xff] %v718
      %755 = vst [vmem:[#allocation3 + $0x2d0] sm:$0xff] %v719
      %756 = vst [vmem:[#allocation3 + $0x318] sm:$0xff] %v720
      %757 = vst [vmem:[#allocation3 + $0x360] sm:$0xff] %v721
      %758 = vst [vmem:[#allocation3 + $0x3a8] sm:$0xff] %v722
      %759 = vst [vmem:[#allocation3 + $0x3f0] sm:$0xff] %v723
      %760 = vst [vmem:[#allocation3 + $0x438] sm:$0xff] %v724
      %761 = vst [vmem:[#allocation3 + $0x480] sm:$0xff] %v725
      %762 = vst [vmem:[#allocation3 + $0x4c8] sm:$0xff] %v726
      %763 = vst [vmem:[#allocation3 + $0x510] sm:$0xff] %v727
      %764 = vst [vmem:[#allocation3 + $0x558] sm:$0xff] %v728
      %765 = vst [vmem:[#allocation3 + $0x5a0] sm:$0xff] %v729
      %766 = vst [vmem:[#allocation3 + $0x5e8] sm:$0xff] %v730
      %767 = vst [vmem:[#allocation3 + $0x630] sm:$0xff] %v731
      %768 = vst [vmem:[#allocation3 + $0x678] sm:$0xff] %v732
      %769 = vst [vmem:[#allocation3 + $0x6c0] sm:$0xff] %v733
      %770 = vst [vmem:[#allocation3 + $0x708] sm:$0xff] %v734
      %771 = vst [vmem:[#allocation3 + $0x750] sm:$0xff] %v735
      %772 = vst [vmem:[#allocation3 + $0x798] sm:$0xff] %v736
      %773 = vst [vmem:[#allocation3 + $0x7e0] sm:$0xff] %v737
      %774 = vst [vmem:[#allocation3 + $0x828] sm:$0xff] %v738
      %775 = vst [vmem:[#allocation3 + $0x870] sm:$0xff] %v739
      %776 = vst [vmem:[#allocation3 + $0x8b8] sm:$0xff] %v740
      %777 = vst [vmem:[#allocation3 + $0x900] sm:$0xff] %v741
      %778 = vst [vmem:[#allocation3 + $0x948] sm:$0xff] %v742
      %779 = vst [vmem:[#allocation3 + $0x990] sm:$0xff] %v743
      %780 = vst [vmem:[#allocation3 + $0x9d8] sm:$0xff] %v744
      %v781 = vld [vmem:[#allocation2 + $0x1] sm:$0xff]
      %v782 = vld [vmem:[#allocation2 + $0x9] sm:$0xff]
      %v783 = vld [vmem:[#allocation2 + $0x11] sm:$0xff]
      %v784 = vld [vmem:[#allocation2 + $0x19] sm:$0xff]
      %v785 = vld [vmem:[#allocation2 + $0x21] sm:$0xff]
      %v786 = vld [vmem:[#allocation2 + $0x29] sm:$0xff]
      %v787 = vld [vmem:[#allocation2 + $0x31] sm:$0xff]
      %v788 = vld [vmem:[#allocation2 + $0x39] sm:$0xff]
      %v789 = vld [vmem:[#allocation2 + $0x41] sm:$0xff]
      %v790 = vld [vmem:[#allocation2 + $0x49] sm:$0xff]
      %v791 = vld [vmem:[#allocation2 + $0x51] sm:$0xff]
      %v792 = vld [vmem:[#allocation2 + $0x59] sm:$0xff]
      %v793 = vld [vmem:[#allocation2 + $0x61] sm:$0xff]
      %v794 = vld [vmem:[#allocation2 + $0x69] sm:$0xff]
      %v795 = vld [vmem:[#allocation2 + $0x71] sm:$0xff]
      %v796 = vld [vmem:[#allocation2 + $0x79] sm:$0xff]
      %v797 = vld [vmem:[#allocation2 + $0x81] sm:$0xff]
      %v798 = vld [vmem:[#allocation2 + $0x89] sm:$0xff]
      %v799 = vld [vmem:[#allocation2 + $0x91] sm:$0xff]
      %v800 = vld [vmem:[#allocation2 + $0x99] sm:$0xff]
      %v801 = vld [vmem:[#allocation2 + $0xa1] sm:$0xff]
      %v802 = vld [vmem:[#allocation2 + $0xa9] sm:$0xff]
      %v803 = vld [vmem:[#allocation2 + $0xb1] sm:$0xff]
      %v804 = vld [vmem:[#allocation2 + $0xb9] sm:$0xff]
      %v805 = vld [vmem:[#allocation2 + $0xc1] sm:$0xff]
      %v806 = vld [vmem:[#allocation2 + $0xc9] sm:$0xff]
      %v807 = vld [vmem:[#allocation2 + $0xd1] sm:$0xff]
      %v808 = vld [vmem:[#allocation2 + $0xd9] sm:$0xff]
      %v809 = vld [vmem:[#allocation2 + $0xe1] sm:$0xff]
      %v810 = vld [vmem:[#allocation2 + $0xe9] sm:$0xff]
      %v811 = vld [vmem:[#allocation2 + $0xf1] sm:$0xff]
      %v812 = vld [vmem:[#allocation2 + $0xf9] sm:$0xff]
      %v813 = vld [vmem:[#allocation2 + $0x101] sm:$0xff]
      %v814 = vld [vmem:[#allocation2 + $0x109] sm:$0xff]
      %v815 = vld [vmem:[#allocation2 + $0x111] sm:$0xff]
      %v816 = vld [vmem:[#allocation2 + $0x119] sm:$0xff]
      %817 = vst [vmem:[#allocation3 + $0x8] sm:$0xff] %v781
      %818 = vst [vmem:[#allocation3 + $0x50] sm:$0xff] %v782
      %819 = vst [vmem:[#allocation3 + $0x98] sm:$0xff] %v783
      %820 = vst [vmem:[#allocation3 + $0xe0] sm:$0xff] %v784
      %821 = vst [vmem:[#allocation3 + $0x128] sm:$0xff] %v785
      %822 = vst [vmem:[#allocation3 + $0x170] sm:$0xff] %v786
      %823 = vst [vmem:[#allocation3 + $0x1b8] sm:$0xff] %v787
      %824 = vst [vmem:[#allocation3 + $0x200] sm:$0xff] %v788
      %825 = vst [vmem:[#allocation3 + $0x248] sm:$0xff] %v789
      %826 = vst [vmem:[#allocation3 + $0x290] sm:$0xff] %v790
      %827 = vst [vmem:[#allocation3 + $0x2d8] sm:$0xff] %v791
      %828 = vst [vmem:[#allocation3 + $0x320] sm:$0xff] %v792
      %829 = vst [vmem:[#allocation3 + $0x368] sm:$0xff] %v793
      %830 = vst [vmem:[#allocation3 + $0x3b0] sm:$0xff] %v794
      %831 = vst [vmem:[#allocation3 + $0x3f8] sm:$0xff] %v795
      %832 = vst [vmem:[#allocation3 + $0x440] sm:$0xff] %v796
      %833 = vst [vmem:[#allocation3 + $0x488] sm:$0xff] %v797
      %834 = vst [vmem:[#allocation3 + $0x4d0] sm:$0xff] %v798
      %835 = vst [vmem:[#allocation3 + $0x518] sm:$0xff] %v799
      %836 = vst [vmem:[#allocation3 + $0x560] sm:$0xff] %v800
      %837 = vst [vmem:[#allocation3 + $0x5a8] sm:$0xff] %v801
      %838 = vst [vmem:[#allocation3 + $0x5f0] sm:$0xff] %v802
      %839 = vst [vmem:[#allocation3 + $0x638] sm:$0xff] %v803
      %840 = vst [vmem:[#allocation3 + $0x680] sm:$0xff] %v804
      %841 = vst [vmem:[#allocation3 + $0x6c8] sm:$0xff] %v805
      %842 = vst [vmem:[#allocation3 + $0x710] sm:$0xff] %v806
      %843 = vst [vmem:[#allocation3 + $0x758] sm:$0xff] %v807
      %844 = vst [vmem:[#allocation3 + $0x7a0] sm:$0xff] %v808
      %845 = vst [vmem:[#allocation3 + $0x7e8] sm:$0xff] %v809
      %846 = vst [vmem:[#allocation3 + $0x830] sm:$0xff] %v810
      %847 = vst [vmem:[#allocation3 + $0x878] sm:$0xff] %v811
      %848 = vst [vmem:[#allocation3 + $0x8c0] sm:$0xff] %v812
      %849 = vst [vmem:[#allocation3 + $0x908] sm:$0xff] %v813
      %850 = vst [vmem:[#allocation3 + $0x950] sm:$0xff] %v814
      %851 = vst [vmem:[#allocation3 + $0x998] sm:$0xff] %v815
      %852 = vst [vmem:[#allocation3 + $0x9e0] sm:$0xff] %v816
      %v853 = vld [vmem:[#allocation2 + $0x2] sm:$0xff]
      %v854 = vld [vmem:[#allocation2 + $0xa] sm:$0xff]
      %v855 = vld [vmem:[#allocation2 + $0x12] sm:$0xff]
      %v856 = vld [vmem:[#allocation2 + $0x1a] sm:$0xff]
      %v857 = vld [vmem:[#allocation2 + $0x22] sm:$0xff]
      %v858 = vld [vmem:[#allocation2 + $0x2a] sm:$0xff]
      %v859 = vld [vmem:[#allocation2 + $0x32] sm:$0xff]
      %v860 = vld [vmem:[#allocation2 + $0x3a] sm:$0xff]
      %v861 = vld [vmem:[#allocation2 + $0x42] sm:$0xff]
      %v862 = vld [vmem:[#allocation2 + $0x4a] sm:$0xff]
      %v863 = vld [vmem:[#allocation2 + $0x52] sm:$0xff]
      %v864 = vld [vmem:[#allocation2 + $0x5a] sm:$0xff]
      %v865 = vld [vmem:[#allocation2 + $0x62] sm:$0xff]
      %v866 = vld [vmem:[#allocation2 + $0x6a] sm:$0xff]
      %v867 = vld [vmem:[#allocation2 + $0x72] sm:$0xff]
      %v868 = vld [vmem:[#allocation2 + $0x7a] sm:$0xff]
      %v869 = vld [vmem:[#allocation2 + $0x82] sm:$0xff]
      %v870 = vld [vmem:[#allocation2 + $0x8a] sm:$0xff]
      %v871 = vld [vmem:[#allocation2 + $0x92] sm:$0xff]
      %v872 = vld [vmem:[#allocation2 + $0x9a] sm:$0xff]
      %v873 = vld [vmem:[#allocation2 + $0xa2] sm:$0xff]
      %v874 = vld [vmem:[#allocation2 + $0xaa] sm:$0xff]
      %v875 = vld [vmem:[#allocation2 + $0xb2] sm:$0xff]
      %v876 = vld [vmem:[#allocation2 + $0xba] sm:$0xff]
      %v877 = vld [vmem:[#allocation2 + $0xc2] sm:$0xff]
      %v878 = vld [vmem:[#allocation2 + $0xca] sm:$0xff]
      %v879 = vld [vmem:[#allocation2 + $0xd2] sm:$0xff]
      %v880 = vld [vmem:[#allocation2 + $0xda] sm:$0xff]
      %v881 = vld [vmem:[#allocation2 + $0xe2] sm:$0xff]
      %v882 = vld [vmem:[#allocation2 + $0xea] sm:$0xff]
      %v883 = vld [vmem:[#allocation2 + $0xf2] sm:$0xff]
      %v884 = vld [vmem:[#allocation2 + $0xfa] sm:$0xff]
      %v885 = vld [vmem:[#allocation2 + $0x102] sm:$0xff]
      %v886 = vld [vmem:[#allocation2 + $0x10a] sm:$0xff]
      %v887 = vld [vmem:[#allocation2 + $0x112] sm:$0xff]
      %v888 = vld [vmem:[#allocation2 + $0x11a] sm:$0xff]
      %889 = vst [vmem:[#allocation3 + $0x10] sm:$0xff] %v853
      %890 = vst [vmem:[#allocation3 + $0x58] sm:$0xff] %v854
      %891 = vst [vmem:[#allocation3 + $0xa0] sm:$0xff] %v855
      %892 = vst [vmem:[#allocation3 + $0xe8] sm:$0xff] %v856
      %893 = vst [vmem:[#allocation3 + $0x130] sm:$0xff] %v857
      %894 = vst [vmem:[#allocation3 + $0x178] sm:$0xff] %v858
      %895 = vst [vmem:[#allocation3 + $0x1c0] sm:$0xff] %v859
      %896 = vst [vmem:[#allocation3 + $0x208] sm:$0xff] %v860
      %897 = vst [vmem:[#allocation3 + $0x250] sm:$0xff] %v861
      %898 = vst [vmem:[#allocation3 + $0x298] sm:$0xff] %v862
      %899 = vst [vmem:[#allocation3 + $0x2e0] sm:$0xff] %v863
      %900 = vst [vmem:[#allocation3 + $0x328] sm:$0xff] %v864
      %901 = vst [vmem:[#allocation3 + $0x370] sm:$0xff] %v865
      %902 = vst [vmem:[#allocation3 + $0x3b8] sm:$0xff] %v866
      %903 = vst [vmem:[#allocation3 + $0x400] sm:$0xff] %v867
      %904 = vst [vmem:[#allocation3 + $0x448] sm:$0xff] %v868
      %905 = vst [vmem:[#allocation3 + $0x490] sm:$0xff] %v869
      %906 = vst [vmem:[#allocation3 + $0x4d8] sm:$0xff] %v870
      %907 = vst [vmem:[#allocation3 + $0x520] sm:$0xff] %v871
      %908 = vst [vmem:[#allocation3 + $0x568] sm:$0xff] %v872
      %909 = vst [vmem:[#allocation3 + $0x5b0] sm:$0xff] %v873
      %910 = vst [vmem:[#allocation3 + $0x5f8] sm:$0xff] %v874
      %911 = vst [vmem:[#allocation3 + $0x640] sm:$0xff] %v875
      %912 = vst [vmem:[#allocation3 + $0x688] sm:$0xff] %v876
      %913 = vst [vmem:[#allocation3 + $0x6d0] sm:$0xff] %v877
      %914 = vst [vmem:[#allocation3 + $0x718] sm:$0xff] %v878
      %915 = vst [vmem:[#allocation3 + $0x760] sm:$0xff] %v879
      %916 = vst [vmem:[#allocation3 + $0x7a8] sm:$0xff] %v880
      %917 = vst [vmem:[#allocation3 + $0x7f0] sm:$0xff] %v881
      %918 = vst [vmem:[#allocation3 + $0x838] sm:$0xff] %v882
      %919 = vst [vmem:[#allocation3 + $0x880] sm:$0xff] %v883
      %920 = vst [vmem:[#allocation3 + $0x8c8] sm:$0xff] %v884
      %921 = vst [vmem:[#allocation3 + $0x910] sm:$0xff] %v885
      %922 = vst [vmem:[#allocation3 + $0x958] sm:$0xff] %v886
      %923 = vst [vmem:[#allocation3 + $0x9a0] sm:$0xff] %v887
      %924 = vst [vmem:[#allocation3 + $0x9e8] sm:$0xff] %v888
      %v925 = vld [vmem:[#allocation2 + $0x12] sm:$0xff]
      %v926 = vld [vmem:[#allocation2 + $0x1a] sm:$0xff]
      %v927 = vld [vmem:[#allocation2 + $0x22] sm:$0xff]
      %v928 = vld [vmem:[#allocation2 + $0x2a] sm:$0xff]
      %v929 = vld [vmem:[#allocation2 + $0x32] sm:$0xff]
      %v930 = vld [vmem:[#allocation2 + $0x3a] sm:$0xff]
      %v931 = vld [vmem:[#allocation2 + $0x42] sm:$0xff]
      %v932 = vld [vmem:[#allocation2 + $0x4a] sm:$0xff]
      %v933 = vld [vmem:[#allocation2 + $0x52] sm:$0xff]
      %v934 = vld [vmem:[#allocation2 + $0x5a] sm:$0xff]
      %v935 = vld [vmem:[#allocation2 + $0x62] sm:$0xff]
      %v936 = vld [vmem:[#allocation2 + $0x6a] sm:$0xff]
      %v937 = vld [vmem:[#allocation2 + $0x72] sm:$0xff]
      %v938 = vld [vmem:[#allocation2 + $0x7a] sm:$0xff]
      %v939 = vld [vmem:[#allocation2 + $0x82] sm:$0xff]
      %v940 = vld [vmem:[#allocation2 + $0x8a] sm:$0xff]
      %v941 = vld [vmem:[#allocation2 + $0x92] sm:$0xff]
      %v942 = vld [vmem:[#allocation2 + $0x9a] sm:$0xff]
      %v943 = vld [vmem:[#allocation2 + $0xa2] sm:$0xff]
      %v944 = vld [vmem:[#allocation2 + $0xaa] sm:$0xff]
      %v945 = vld [vmem:[#allocation2 + $0xb2] sm:$0xff]
      %v946 = vld [vmem:[#allocation2 + $0xba] sm:$0xff]
      %v947 = vld [vmem:[#allocation2 + $0xc2] sm:$0xff]
      %v948 = vld [vmem:[#allocation2 + $0xca] sm:$0xff]
      %v949 = vld [vmem:[#allocation2 + $0xd2] sm:$0xff]
      %v950 = vld [vmem:[#allocation2 + $0xda] sm:$0xff]
      %v951 = vld [vmem:[#allocation2 + $0xe2] sm:$0xff]
      %v952 = vld [vmem:[#allocation2 + $0xea] sm:$0xff]
      %v953 = vld [vmem:[#allocation2 + $0xf2] sm:$0xff]
      %v954 = vld [vmem:[#allocation2 + $0xfa] sm:$0xff]
      %v955 = vld [vmem:[#allocation2 + $0x102] sm:$0xff]
      %v956 = vld [vmem:[#allocation2 + $0x10a] sm:$0xff]
      %v957 = vld [vmem:[#allocation2 + $0x112] sm:$0xff]
      %v958 = vld [vmem:[#allocation2 + $0x11a] sm:$0xff]
      %v959 = vld [vmem:[#allocation2 + $0x122] sm:$0xff]
      %v960 = vld [vmem:[#allocation2 + $0x12a] sm:$0xff]
      %961 = vst [vmem:[#allocation3 + $0x18] sm:$0xff] %v925
      %962 = vst [vmem:[#allocation3 + $0x60] sm:$0xff] %v926
      %963 = vst [vmem:[#allocation3 + $0xa8] sm:$0xff] %v927
      %964 = vst [vmem:[#allocation3 + $0xf0] sm:$0xff] %v928
      %965 = vst [vmem:[#allocation3 + $0x138] sm:$0xff] %v929
      %966 = vst [vmem:[#allocation3 + $0x180] sm:$0xff] %v930
      %967 = vst [vmem:[#allocation3 + $0x1c8] sm:$0xff] %v931
      %968 = vst [vmem:[#allocation3 + $0x210] sm:$0xff] %v932
      %969 = vst [vmem:[#allocation3 + $0x258] sm:$0xff] %v933
      %970 = vst [vmem:[#allocation3 + $0x2a0] sm:$0xff] %v934
      %971 = vst [vmem:[#allocation3 + $0x2e8] sm:$0xff] %v935
      %972 = vst [vmem:[#allocation3 + $0x330] sm:$0xff] %v936
      %973 = vst [vmem:[#allocation3 + $0x378] sm:$0xff] %v937
      %974 = vst [vmem:[#allocation3 + $0x3c0] sm:$0xff] %v938
      %975 = vst [vmem:[#allocation3 + $0x408] sm:$0xff] %v939
      %976 = vst [vmem:[#allocation3 + $0x450] sm:$0xff] %v940
      %977 = vst [vmem:[#allocation3 + $0x498] sm:$0xff] %v941
      %978 = vst [vmem:[#allocation3 + $0x4e0] sm:$0xff] %v942
      %979 = vst [vmem:[#allocation3 + $0x528] sm:$0xff] %v943
      %980 = vst [vmem:[#allocation3 + $0x570] sm:$0xff] %v944
      %981 = vst [vmem:[#allocation3 + $0x5b8] sm:$0xff] %v945
      %982 = vst [vmem:[#allocation3 + $0x600] sm:$0xff] %v946
      %983 = vst [vmem:[#allocation3 + $0x648] sm:$0xff] %v947
      %984 = vst [vmem:[#allocation3 + $0x690] sm:$0xff] %v948
      %985 = vst [vmem:[#allocation3 + $0x6d8] sm:$0xff] %v949
      %986 = vst [vmem:[#allocation3 + $0x720] sm:$0xff] %v950
      %987 = vst [vmem:[#allocation3 + $0x768] sm:$0xff] %v951
      %988 = vst [vmem:[#allocation3 + $0x7b0] sm:$0xff] %v952
      %989 = vst [vmem:[#allocation3 + $0x7f8] sm:$0xff] %v953
      %990 = vst [vmem:[#allocation3 + $0x840] sm:$0xff] %v954
      %991 = vst [vmem:[#allocation3 + $0x888] sm:$0xff] %v955
      %992 = vst [vmem:[#allocation3 + $0x8d0] sm:$0xff] %v956
      %993 = vst [vmem:[#allocation3 + $0x918] sm:$0xff] %v957
      %994 = vst [vmem:[#allocation3 + $0x960] sm:$0xff] %v958
      %995 = vst [vmem:[#allocation3 + $0x9a8] sm:$0xff] %v959
      %996 = vst [vmem:[#allocation3 + $0x9f0] sm:$0xff] %v960
      %v997 = vld [vmem:[#allocation2 + $0x13] sm:$0xff]
      %v998 = vld [vmem:[#allocation2 + $0x1b] sm:$0xff]
      %v999 = vld [vmem:[#allocation2 + $0x23] sm:$0xff]
      %v1000 = vld [vmem:[#allocation2 + $0x2b] sm:$0xff]
      %v1001 = vld [vmem:[#allocation2 + $0x33] sm:$0xff]
      %v1002 = vld [vmem:[#allocation2 + $0x3b] sm:$0xff]
      %v1003 = vld [vmem:[#allocation2 + $0x43] sm:$0xff]
      %v1004 = vld [vmem:[#allocation2 + $0x4b] sm:$0xff]
      %v1005 = vld [vmem:[#allocation2 + $0x53] sm:$0xff]
      %v1006 = vld [vmem:[#allocation2 + $0x5b] sm:$0xff]
      %v1007 = vld [vmem:[#allocation2 + $0x63] sm:$0xff]
      %v1008 = vld [vmem:[#allocation2 + $0x6b] sm:$0xff]
      %v1009 = vld [vmem:[#allocation2 + $0x73] sm:$0xff]
      %v1010 = vld [vmem:[#allocation2 + $0x7b] sm:$0xff]
      %v1011 = vld [vmem:[#allocation2 + $0x83] sm:$0xff]
      %v1012 = vld [vmem:[#allocation2 + $0x8b] sm:$0xff]
      %v1013 = vld [vmem:[#allocation2 + $0x93] sm:$0xff]
      %v1014 = vld [vmem:[#allocation2 + $0x9b] sm:$0xff]
      %v1015 = vld [vmem:[#allocation2 + $0xa3] sm:$0xff]
      %v1016 = vld [vmem:[#allocation2 + $0xab] sm:$0xff]
      %v1017 = vld [vmem:[#allocation2 + $0xb3] sm:$0xff]
      %v1018 = vld [vmem:[#allocation2 + $0xbb] sm:$0xff]
      %v1019 = vld [vmem:[#allocation2 + $0xc3] sm:$0xff]
      %v1020 = vld [vmem:[#allocation2 + $0xcb] sm:$0xff]
      %v1021 = vld [vmem:[#allocation2 + $0xd3] sm:$0xff]
      %v1022 = vld [vmem:[#allocation2 + $0xdb] sm:$0xff]
      %v1023 = vld [vmem:[#allocation2 + $0xe3] sm:$0xff]
      %v1024 = vld [vmem:[#allocation2 + $0xeb] sm:$0xff]
      %v1025 = vld [vmem:[#allocation2 + $0xf3] sm:$0xff]
      %v1026 = vld [vmem:[#allocation2 + $0xfb] sm:$0xff]
      %v1027 = vld [vmem:[#allocation2 + $0x103] sm:$0xff]
      %v1028 = vld [vmem:[#allocation2 + $0x10b] sm:$0xff]
      %v1029 = vld [vmem:[#allocation2 + $0x113] sm:$0xff]
      %v1030 = vld [vmem:[#allocation2 + $0x11b] sm:$0xff]
      %v1031 = vld [vmem:[#allocation2 + $0x123] sm:$0xff]
      %v1032 = vld [vmem:[#allocation2 + $0x12b] sm:$0xff]
      %1033 = vst [vmem:[#allocation3 + $0x20] sm:$0xff] %v997
      %1034 = vst [vmem:[#allocation3 + $0x68] sm:$0xff] %v998
      %1035 = vst [vmem:[#allocation3 + $0xb0] sm:$0xff] %v999
      %1036 = vst [vmem:[#allocation3 + $0xf8] sm:$0xff] %v1000
      %1037 = vst [vmem:[#allocation3 + $0x140] sm:$0xff] %v1001
      %1038 = vst [vmem:[#allocation3 + $0x188] sm:$0xff] %v1002
      %1039 = vst [vmem:[#allocation3 + $0x1d0] sm:$0xff] %v1003
      %1040 = vst [vmem:[#allocation3 + $0x218] sm:$0xff] %v1004
      %1041 = vst [vmem:[#allocation3 + $0x260] sm:$0xff] %v1005
      %1042 = vst [vmem:[#allocation3 + $0x2a8] sm:$0xff] %v1006
      %1043 = vst [vmem:[#allocation3 + $0x2f0] sm:$0xff] %v1007
      %1044 = vst [vmem:[#allocation3 + $0x338] sm:$0xff] %v1008
      %1045 = vst [vmem:[#allocation3 + $0x380] sm:$0xff] %v1009
      %1046 = vst [vmem:[#allocation3 + $0x3c8] sm:$0xff] %v1010
      %1047 = vst [vmem:[#allocation3 + $0x410] sm:$0xff] %v1011
      %1048 = vst [vmem:[#allocation3 + $0x458] sm:$0xff] %v1012
      %1049 = vst [vmem:[#allocation3 + $0x4a0] sm:$0xff] %v1013
      %1050 = vst [vmem:[#allocation3 + $0x4e8] sm:$0xff] %v1014
      %1051 = vst [vmem:[#allocation3 + $0x530] sm:$0xff] %v1015
      %1052 = vst [vmem:[#allocation3 + $0x578] sm:$0xff] %v1016
      %1053 = vst [vmem:[#allocation3 + $0x5c0] sm:$0xff] %v1017
      %1054 = vst [vmem:[#allocation3 + $0x608] sm:$0xff] %v1018
      %1055 = vst [vmem:[#allocation3 + $0x650] sm:$0xff] %v1019
      %1056 = vst [vmem:[#allocation3 + $0x698] sm:$0xff] %v1020
      %1057 = vst [vmem:[#allocation3 + $0x6e0] sm:$0xff] %v1021
      %1058 = vst [vmem:[#allocation3 + $0x728] sm:$0xff] %v1022
      %1059 = vst [vmem:[#allocation3 + $0x770] sm:$0xff] %v1023
      %1060 = vst [vmem:[#allocation3 + $0x7b8] sm:$0xff] %v1024
      %1061 = vst [vmem:[#allocation3 + $0x800] sm:$0xff] %v1025
      %1062 = vst [vmem:[#allocation3 + $0x848] sm:$0xff] %v1026
      %1063 = vst [vmem:[#allocation3 + $0x890] sm:$0xff] %v1027
      %1064 = vst [vmem:[#allocation3 + $0x8d8] sm:$0xff] %v1028
      %1065 = vst [vmem:[#allocation3 + $0x920] sm:$0xff] %v1029
      %1066 = vst [vmem:[#allocation3 + $0x968] sm:$0xff] %v1030
      %1067 = vst [vmem:[#allocation3 + $0x9b0] sm:$0xff] %v1031
      %1068 = vst [vmem:[#allocation3 + $0x9f8] sm:$0xff] %v1032
      %v1069 = vld [vmem:[#allocation2 + $0x14] sm:$0xff]
      %v1070 = vld [vmem:[#allocation2 + $0x1c] sm:$0xff]
      %v1071 = vld [vmem:[#allocation2 + $0x24] sm:$0xff]
      %v1072 = vld [vmem:[#allocation2 + $0x2c] sm:$0xff]
      %v1073 = vld [vmem:[#allocation2 + $0x34] sm:$0xff]
      %v1074 = vld [vmem:[#allocation2 + $0x3c] sm:$0xff]
      %v1075 = vld [vmem:[#allocation2 + $0x44] sm:$0xff]
      %v1076 = vld [vmem:[#allocation2 + $0x4c] sm:$0xff]
      %v1077 = vld [vmem:[#allocation2 + $0x54] sm:$0xff]
      %v1078 = vld [vmem:[#allocation2 + $0x5c] sm:$0xff]
      %v1079 = vld [vmem:[#allocation2 + $0x64] sm:$0xff]
      %v1080 = vld [vmem:[#allocation2 + $0x6c] sm:$0xff]
      %v1081 = vld [vmem:[#allocation2 + $0x74] sm:$0xff]
      %v1082 = vld [vmem:[#allocation2 + $0x7c] sm:$0xff]
      %v1083 = vld [vmem:[#allocation2 + $0x84] sm:$0xff]
      %v1084 = vld [vmem:[#allocation2 + $0x8c] sm:$0xff]
      %v1085 = vld [vmem:[#allocation2 + $0x94] sm:$0xff]
      %v1086 = vld [vmem:[#allocation2 + $0x9c] sm:$0xff]
      %v1087 = vld [vmem:[#allocation2 + $0xa4] sm:$0xff]
      %v1088 = vld [vmem:[#allocation2 + $0xac] sm:$0xff]
      %v1089 = vld [vmem:[#allocation2 + $0xb4] sm:$0xff]
      %v1090 = vld [vmem:[#allocation2 + $0xbc] sm:$0xff]
      %v1091 = vld [vmem:[#allocation2 + $0xc4] sm:$0xff]
      %v1092 = vld [vmem:[#allocation2 + $0xcc] sm:$0xff]
      %v1093 = vld [vmem:[#allocation2 + $0xd4] sm:$0xff]
      %v1094 = vld [vmem:[#allocation2 + $0xdc] sm:$0xff]
      %v1095 = vld [vmem:[#allocation2 + $0xe4] sm:$0xff]
      %v1096 = vld [vmem:[#allocation2 + $0xec] sm:$0xff]
      %v1097 = vld [vmem:[#allocation2 + $0xf4] sm:$0xff]
      %v1098 = vld [vmem:[#allocation2 + $0xfc] sm:$0xff]
      %v1099 = vld [vmem:[#allocation2 + $0x104] sm:$0xff]
      %v1100 = vld [vmem:[#allocation2 + $0x10c] sm:$0xff]
      %v1101 = vld [vmem:[#allocation2 + $0x114] sm:$0xff]
      %v1102 = vld [vmem:[#allocation2 + $0x11c] sm:$0xff]
      %v1103 = vld [vmem:[#allocation2 + $0x124] sm:$0xff]
      %v1104 = vld [vmem:[#allocation2 + $0x12c] sm:$0xff]
      %1105 = vst [vmem:[#allocation3 + $0x28] sm:$0xff] %v1069
      %1106 = vst [vmem:[#allocation3 + $0x70] sm:$0xff] %v1070
      %1107 = vst [vmem:[#allocation3 + $0xb8] sm:$0xff] %v1071
      %1108 = vst [vmem:[#allocation3 + $0x100] sm:$0xff] %v1072
      %1109 = vst [vmem:[#allocation3 + $0x148] sm:$0xff] %v1073
      %1110 = vst [vmem:[#allocation3 + $0x190] sm:$0xff] %v1074
      %1111 = vst [vmem:[#allocation3 + $0x1d8] sm:$0xff] %v1075
      %1112 = vst [vmem:[#allocation3 + $0x220] sm:$0xff] %v1076
      %1113 = vst [vmem:[#allocation3 + $0x268] sm:$0xff] %v1077
      %1114 = vst [vmem:[#allocation3 + $0x2b0] sm:$0xff] %v1078
      %1115 = vst [vmem:[#allocation3 + $0x2f8] sm:$0xff] %v1079
      %1116 = vst [vmem:[#allocation3 + $0x340] sm:$0xff] %v1080
      %1117 = vst [vmem:[#allocation3 + $0x388] sm:$0xff] %v1081
      %1118 = vst [vmem:[#allocation3 + $0x3d0] sm:$0xff] %v1082
      %1119 = vst [vmem:[#allocation3 + $0x418] sm:$0xff] %v1083
      %1120 = vst [vmem:[#allocation3 + $0x460] sm:$0xff] %v1084
      %1121 = vst [vmem:[#allocation3 + $0x4a8] sm:$0xff] %v1085
      %1122 = vst [vmem:[#allocation3 + $0x4f0] sm:$0xff] %v1086
      %1123 = vst [vmem:[#allocation3 + $0x538] sm:$0xff] %v1087
      %1124 = vst [vmem:[#allocation3 + $0x580] sm:$0xff] %v1088
      %1125 = vst [vmem:[#allocation3 + $0x5c8] sm:$0xff] %v1089
      %1126 = vst [vmem:[#allocation3 + $0x610] sm:$0xff] %v1090
      %1127 = vst [vmem:[#allocation3 + $0x658] sm:$0xff] %v1091
      %1128 = vst [vmem:[#allocation3 + $0x6a0] sm:$0xff] %v1092
      %1129 = vst [vmem:[#allocation3 + $0x6e8] sm:$0xff] %v1093
      %1130 = vst [vmem:[#allocation3 + $0x730] sm:$0xff] %v1094
      %1131 = vst [vmem:[#allocation3 + $0x778] sm:$0xff] %v1095
      %1132 = vst [vmem:[#allocation3 + $0x7c0] sm:$0xff] %v1096
      %1133 = vst [vmem:[#allocation3 + $0x808] sm:$0xff] %v1097
      %1134 = vst [vmem:[#allocation3 + $0x850] sm:$0xff] %v1098
      %1135 = vst [vmem:[#allocation3 + $0x898] sm:$0xff] %v1099
      %1136 = vst [vmem:[#allocation3 + $0x8e0] sm:$0xff] %v1100
      %1137 = vst [vmem:[#allocation3 + $0x928] sm:$0xff] %v1101
      %1138 = vst [vmem:[#allocation3 + $0x970] sm:$0xff] %v1102
      %1139 = vst [vmem:[#allocation3 + $0x9b8] sm:$0xff] %v1103
      %1140 = vst [vmem:[#allocation3 + $0xa00] sm:$0xff] %v1104
      %v1141 = vld [vmem:[#allocation2 + $0x24] sm:$0xff]
      %v1142 = vld [vmem:[#allocation2 + $0x2c] sm:$0xff]
      %v1143 = vld [vmem:[#allocation2 + $0x34] sm:$0xff]
      %v1144 = vld [vmem:[#allocation2 + $0x3c] sm:$0xff]
      %v1145 = vld [vmem:[#allocation2 + $0x44] sm:$0xff]
      %v1146 = vld [vmem:[#allocation2 + $0x4c] sm:$0xff]
      %v1147 = vld [vmem:[#allocation2 + $0x54] sm:$0xff]
      %v1148 = vld [vmem:[#allocation2 + $0x5c] sm:$0xff]
      %v1149 = vld [vmem:[#allocation2 + $0x64] sm:$0xff]
      %v1150 = vld [vmem:[#allocation2 + $0x6c] sm:$0xff]
      %v1151 = vld [vmem:[#allocation2 + $0x74] sm:$0xff]
      %v1152 = vld [vmem:[#allocation2 + $0x7c] sm:$0xff]
      %v1153 = vld [vmem:[#allocation2 + $0x84] sm:$0xff]
      %v1154 = vld [vmem:[#allocation2 + $0x8c] sm:$0xff]
      %v1155 = vld [vmem:[#allocation2 + $0x94] sm:$0xff]
      %v1156 = vld [vmem:[#allocation2 + $0x9c] sm:$0xff]
      %v1157 = vld [vmem:[#allocation2 + $0xa4] sm:$0xff]
      %v1158 = vld [vmem:[#allocation2 + $0xac] sm:$0xff]
      %v1159 = vld [vmem:[#allocation2 + $0xb4] sm:$0xff]
      %v1160 = vld [vmem:[#allocation2 + $0xbc] sm:$0xff]
      %v1161 = vld [vmem:[#allocation2 + $0xc4] sm:$0xff]
      %v1162 = vld [vmem:[#allocation2 + $0xcc] sm:$0xff]
      %v1163 = vld [vmem:[#allocation2 + $0xd4] sm:$0xff]
      %v1164 = vld [vmem:[#allocation2 + $0xdc] sm:$0xff]
      %v1165 = vld [vmem:[#allocation2 + $0xe4] sm:$0xff]
      %v1166 = vld [vmem:[#allocation2 + $0xec] sm:$0xff]
      %v1167 = vld [vmem:[#allocation2 + $0xf4] sm:$0xff]
      %v1168 = vld [vmem:[#allocation2 + $0xfc] sm:$0xff]
      %v1169 = vld [vmem:[#allocation2 + $0x104] sm:$0xff]
      %v1170 = vld [vmem:[#allocation2 + $0x10c] sm:$0xff]
      %v1171 = vld [vmem:[#allocation2 + $0x114] sm:$0xff]
      %v1172 = vld [vmem:[#allocation2 + $0x11c] sm:$0xff]
      %v1173 = vld [vmem:[#allocation2 + $0x124] sm:$0xff]
      %v1174 = vld [vmem:[#allocation2 + $0x12c] sm:$0xff]
      %v1175 = vld [vmem:[#allocation2 + $0x134] sm:$0xff]
      %v1176 = vld [vmem:[#allocation2 + $0x13c] sm:$0xff]
      %1177 = vst [vmem:[#allocation3 + $0x30] sm:$0xff] %v1141
      %1178 = vst [vmem:[#allocation3 + $0x78] sm:$0xff] %v1142
      %1179 = vst [vmem:[#allocation3 + $0xc0] sm:$0xff] %v1143
      %1180 = vst [vmem:[#allocation3 + $0x108] sm:$0xff] %v1144
      %1181 = vst [vmem:[#allocation3 + $0x150] sm:$0xff] %v1145
      %1182 = vst [vmem:[#allocation3 + $0x198] sm:$0xff] %v1146
      %1183 = vst [vmem:[#allocation3 + $0x1e0] sm:$0xff] %v1147
      %1184 = vst [vmem:[#allocation3 + $0x228] sm:$0xff] %v1148
      %1185 = vst [vmem:[#allocation3 + $0x270] sm:$0xff] %v1149
      %1186 = vst [vmem:[#allocation3 + $0x2b8] sm:$0xff] %v1150
      %1187 = vst [vmem:[#allocation3 + $0x300] sm:$0xff] %v1151
      %1188 = vst [vmem:[#allocation3 + $0x348] sm:$0xff] %v1152
      %1189 = vst [vmem:[#allocation3 + $0x390] sm:$0xff] %v1153
      %1190 = vst [vmem:[#allocation3 + $0x3d8] sm:$0xff] %v1154
      %1191 = vst [vmem:[#allocation3 + $0x420] sm:$0xff] %v1155
      %1192 = vst [vmem:[#allocation3 + $0x468] sm:$0xff] %v1156
      %1193 = vst [vmem:[#allocation3 + $0x4b0] sm:$0xff] %v1157
      %1194 = vst [vmem:[#allocation3 + $0x4f8] sm:$0xff] %v1158
      %1195 = vst [vmem:[#allocation3 + $0x540] sm:$0xff] %v1159
      %1196 = vst [vmem:[#allocation3 + $0x588] sm:$0xff] %v1160
      %1197 = vst [vmem:[#allocation3 + $0x5d0] sm:$0xff] %v1161
      %1198 = vst [vmem:[#allocation3 + $0x618] sm:$0xff] %v1162
      %1199 = vst [vmem:[#allocation3 + $0x660] sm:$0xff] %v1163
      %1200 = vst [vmem:[#allocation3 + $0x6a8] sm:$0xff] %v1164
      %1201 = vst [vmem:[#allocation3 + $0x6f0] sm:$0xff] %v1165
      %1202 = vst [vmem:[#allocation3 + $0x738] sm:$0xff] %v1166
      %1203 = vst [vmem:[#allocation3 + $0x780] sm:$0xff] %v1167
      %1204 = vst [vmem:[#allocation3 + $0x7c8] sm:$0xff] %v1168
      %1205 = vst [vmem:[#allocation3 + $0x810] sm:$0xff] %v1169
      %1206 = vst [vmem:[#allocation3 + $0x858] sm:$0xff] %v1170
      %1207 = vst [vmem:[#allocation3 + $0x8a0] sm:$0xff] %v1171
      %1208 = vst [vmem:[#allocation3 + $0x8e8] sm:$0xff] %v1172
      %1209 = vst [vmem:[#allocation3 + $0x930] sm:$0xff] %v1173
      %1210 = vst [vmem:[#allocation3 + $0x978] sm:$0xff] %v1174
      %1211 = vst [vmem:[#allocation3 + $0x9c0] sm:$0xff] %v1175
      %1212 = vst [vmem:[#allocation3 + $0xa08] sm:$0xff] %v1176
      %v1213 = vld [vmem:[#allocation2 + $0x25] sm:$0xff]
      %v1214 = vld [vmem:[#allocation2 + $0x2d] sm:$0xff]
      %v1215 = vld [vmem:[#allocation2 + $0x35] sm:$0xff]
      %v1216 = vld [vmem:[#allocation2 + $0x3d] sm:$0xff]
      %v1217 = vld [vmem:[#allocation2 + $0x45] sm:$0xff]
      %v1218 = vld [vmem:[#allocation2 + $0x4d] sm:$0xff]
      %v1219 = vld [vmem:[#allocation2 + $0x55] sm:$0xff]
      %v1220 = vld [vmem:[#allocation2 + $0x5d] sm:$0xff]
      %v1221 = vld [vmem:[#allocation2 + $0x65] sm:$0xff]
      %v1222 = vld [vmem:[#allocation2 + $0x6d] sm:$0xff]
      %v1223 = vld [vmem:[#allocation2 + $0x75] sm:$0xff]
      %v1224 = vld [vmem:[#allocation2 + $0x7d] sm:$0xff]
      %v1225 = vld [vmem:[#allocation2 + $0x85] sm:$0xff]
      %v1226 = vld [vmem:[#allocation2 + $0x8d] sm:$0xff]
      %v1227 = vld [vmem:[#allocation2 + $0x95] sm:$0xff]
      %v1228 = vld [vmem:[#allocation2 + $0x9d] sm:$0xff]
      %v1229 = vld [vmem:[#allocation2 + $0xa5] sm:$0xff]
      %v1230 = vld [vmem:[#allocation2 + $0xad] sm:$0xff]
      %v1231 = vld [vmem:[#allocation2 + $0xb5] sm:$0xff]
      %v1232 = vld [vmem:[#allocation2 + $0xbd] sm:$0xff]
      %v1233 = vld [vmem:[#allocation2 + $0xc5] sm:$0xff]
      %v1234 = vld [vmem:[#allocation2 + $0xcd] sm:$0xff]
      %v1235 = vld [vmem:[#allocation2 + $0xd5] sm:$0xff]
      %v1236 = vld [vmem:[#allocation2 + $0xdd] sm:$0xff]
      %v1237 = vld [vmem:[#allocation2 + $0xe5] sm:$0xff]
      %v1238 = vld [vmem:[#allocation2 + $0xed] sm:$0xff]
      %v1239 = vld [vmem:[#allocation2 + $0xf5] sm:$0xff]
      %v1240 = vld [vmem:[#allocation2 + $0xfd] sm:$0xff]
      %v1241 = vld [vmem:[#allocation2 + $0x105] sm:$0xff]
      %v1242 = vld [vmem:[#allocation2 + $0x10d] sm:$0xff]
      %v1243 = vld [vmem:[#allocation2 + $0x115] sm:$0xff]
      %v1244 = vld [vmem:[#allocation2 + $0x11d] sm:$0xff]
      %v1245 = vld [vmem:[#allocation2 + $0x125] sm:$0xff]
      %v1246 = vld [vmem:[#allocation2 + $0x12d] sm:$0xff]
      %v1247 = vld [vmem:[#allocation2 + $0x135] sm:$0xff]
      %v1248 = vld [vmem:[#allocation2 + $0x13d] sm:$0xff]
      %1249 = vst [vmem:[#allocation3 + $0x38] sm:$0xff] %v1213
      %1250 = vst [vmem:[#allocation3 + $0x80] sm:$0xff] %v1214
      %1251 = vst [vmem:[#allocation3 + $0xc8] sm:$0xff] %v1215
      %1252 = vst [vmem:[#allocation3 + $0x110] sm:$0xff] %v1216
      %1253 = vst [vmem:[#allocation3 + $0x158] sm:$0xff] %v1217
      %1254 = vst [vmem:[#allocation3 + $0x1a0] sm:$0xff] %v1218
      %1255 = vst [vmem:[#allocation3 + $0x1e8] sm:$0xff] %v1219
      %1256 = vst [vmem:[#allocation3 + $0x230] sm:$0xff] %v1220
      %1257 = vst [vmem:[#allocation3 + $0x278] sm:$0xff] %v1221
      %1258 = vst [vmem:[#allocation3 + $0x2c0] sm:$0xff] %v1222
      %1259 = vst [vmem:[#allocation3 + $0x308] sm:$0xff] %v1223
      %1260 = vst [vmem:[#allocation3 + $0x350] sm:$0xff] %v1224
      %1261 = vst [vmem:[#allocation3 + $0x398] sm:$0xff] %v1225
      %1262 = vst [vmem:[#allocation3 + $0x3e0] sm:$0xff] %v1226
      %1263 = vst [vmem:[#allocation3 + $0x428] sm:$0xff] %v1227
      %1264 = vst [vmem:[#allocation3 + $0x470] sm:$0xff] %v1228
      %1265 = vst [vmem:[#allocation3 + $0x4b8] sm:$0xff] %v1229
      %1266 = vst [vmem:[#allocation3 + $0x500] sm:$0xff] %v1230
      %1267 = vst [vmem:[#allocation3 + $0x548] sm:$0xff] %v1231
      %1268 = vst [vmem:[#allocation3 + $0x590] sm:$0xff] %v1232
      %1269 = vst [vmem:[#allocation3 + $0x5d8] sm:$0xff] %v1233
      %1270 = vst [vmem:[#allocation3 + $0x620] sm:$0xff] %v1234
      %1271 = vst [vmem:[#allocation3 + $0x668] sm:$0xff] %v1235
      %1272 = vst [vmem:[#allocation3 + $0x6b0] sm:$0xff] %v1236
      %1273 = vst [vmem:[#allocation3 + $0x6f8] sm:$0xff] %v1237
      %1274 = vst [vmem:[#allocation3 + $0x740] sm:$0xff] %v1238
      %1275 = vst [vmem:[#allocation3 + $0x788] sm:$0xff] %v1239
      %1276 = vst [vmem:[#allocation3 + $0x7d0] sm:$0xff] %v1240
      %1277 = vst [vmem:[#allocation3 + $0x818] sm:$0xff] %v1241
      %1278 = vst [vmem:[#allocation3 + $0x860] sm:$0xff] %v1242
      %1279 = vst [vmem:[#allocation3 + $0x8a8] sm:$0xff] %v1243
      %1280 = vst [vmem:[#allocation3 + $0x8f0] sm:$0xff] %v1244
      %1281 = vst [vmem:[#allocation3 + $0x938] sm:$0xff] %v1245
      %1282 = vst [vmem:[#allocation3 + $0x980] sm:$0xff] %v1246
      %1283 = vst [vmem:[#allocation3 + $0x9c8] sm:$0xff] %v1247
      %1284 = vst [vmem:[#allocation3 + $0xa10] sm:$0xff] %v1248
      %v1285 = vld [vmem:[#allocation2 + $0x26] sm:$0xff]
      %v1286 = vld [vmem:[#allocation2 + $0x2e] sm:$0xff]
      %v1287 = vld [vmem:[#allocation2 + $0x36] sm:$0xff]
      %v1288 = vld [vmem:[#allocation2 + $0x3e] sm:$0xff]
      %v1289 = vld [vmem:[#allocation2 + $0x46] sm:$0xff]
      %v1290 = vld [vmem:[#allocation2 + $0x4e] sm:$0xff]
      %v1291 = vld [vmem:[#allocation2 + $0x56] sm:$0xff]
      %v1292 = vld [vmem:[#allocation2 + $0x5e] sm:$0xff]
      %v1293 = vld [vmem:[#allocation2 + $0x66] sm:$0xff]
      %v1294 = vld [vmem:[#allocation2 + $0x6e] sm:$0xff]
      %v1295 = vld [vmem:[#allocation2 + $0x76] sm:$0xff]
      %v1296 = vld [vmem:[#allocation2 + $0x7e] sm:$0xff]
      %v1297 = vld [vmem:[#allocation2 + $0x86] sm:$0xff]
      %v1298 = vld [vmem:[#allocation2 + $0x8e] sm:$0xff]
      %v1299 = vld [vmem:[#allocation2 + $0x96] sm:$0xff]
      %v1300 = vld [vmem:[#allocation2 + $0x9e] sm:$0xff]
      %v1301 = vld [vmem:[#allocation2 + $0xa6] sm:$0xff]
      %v1302 = vld [vmem:[#allocation2 + $0xae] sm:$0xff]
      %v1303 = vld [vmem:[#allocation2 + $0xb6] sm:$0xff]
      %v1304 = vld [vmem:[#allocation2 + $0xbe] sm:$0xff]
      %v1305 = vld [vmem:[#allocation2 + $0xc6] sm:$0xff]
      %v1306 = vld [vmem:[#allocation2 + $0xce] sm:$0xff]
      %v1307 = vld [vmem:[#allocation2 + $0xd6] sm:$0xff]
      %v1308 = vld [vmem:[#allocation2 + $0xde] sm:$0xff]
      %v1309 = vld [vmem:[#allocation2 + $0xe6] sm:$0xff]
      %v1310 = vld [vmem:[#allocation2 + $0xee] sm:$0xff]
      %v1311 = vld [vmem:[#allocation2 + $0xf6] sm:$0xff]
      %v1312 = vld [vmem:[#allocation2 + $0xfe] sm:$0xff]
      %v1313 = vld [vmem:[#allocation2 + $0x106] sm:$0xff]
      %v1314 = vld [vmem:[#allocation2 + $0x10e] sm:$0xff]
      %v1315 = vld [vmem:[#allocation2 + $0x116] sm:$0xff]
      %v1316 = vld [vmem:[#allocation2 + $0x11e] sm:$0xff]
      %v1317 = vld [vmem:[#allocation2 + $0x126] sm:$0xff]
      %v1318 = vld [vmem:[#allocation2 + $0x12e] sm:$0xff]
      %v1319 = vld [vmem:[#allocation2 + $0x136] sm:$0xff]
      %v1320 = vld [vmem:[#allocation2 + $0x13e] sm:$0xff]
      %1321 = vst [vmem:[#allocation3 + $0x40] sm:$0xff] %v1285
      %1322 = vst [vmem:[#allocation3 + $0x88] sm:$0xff] %v1286
      %1323 = vst [vmem:[#allocation3 + $0xd0] sm:$0xff] %v1287
      %1324 = vst [vmem:[#allocation3 + $0x118] sm:$0xff] %v1288
      %1325 = vst [vmem:[#allocation3 + $0x160] sm:$0xff] %v1289
      %1326 = vst [vmem:[#allocation3 + $0x1a8] sm:$0xff] %v1290
      %1327 = vst [vmem:[#allocation3 + $0x1f0] sm:$0xff] %v1291
      %1328 = vst [vmem:[#allocation3 + $0x238] sm:$0xff] %v1292
      %1329 = vst [vmem:[#allocation3 + $0x280] sm:$0xff] %v1293
      %1330 = vst [vmem:[#allocation3 + $0x2c8] sm:$0xff] %v1294
      %1331 = vst [vmem:[#allocation3 + $0x310] sm:$0xff] %v1295
      %1332 = vst [vmem:[#allocation3 + $0x358] sm:$0xff] %v1296
      %1333 = vst [vmem:[#allocation3 + $0x3a0] sm:$0xff] %v1297
      %1334 = vst [vmem:[#allocation3 + $0x3e8] sm:$0xff] %v1298
      %1335 = vst [vmem:[#allocation3 + $0x430] sm:$0xff] %v1299
      %1336 = vst [vmem:[#allocation3 + $0x478] sm:$0xff] %v1300
      %1337 = vst [vmem:[#allocation3 + $0x4c0] sm:$0xff] %v1301
      %1338 = vst [vmem:[#allocation3 + $0x508] sm:$0xff] %v1302
      %1339 = vst [vmem:[#allocation3 + $0x550] sm:$0xff] %v1303
      %1340 = vst [vmem:[#allocation3 + $0x598] sm:$0xff] %v1304
      %1341 = vst [vmem:[#allocation3 + $0x5e0] sm:$0xff] %v1305
      %1342 = vst [vmem:[#allocation3 + $0x628] sm:$0xff] %v1306
      %1343 = vst [vmem:[#allocation3 + $0x670] sm:$0xff] %v1307
      %1344 = vst [vmem:[#allocation3 + $0x6b8] sm:$0xff] %v1308
      %1345 = vst [vmem:[#allocation3 + $0x700] sm:$0xff] %v1309
      %1346 = vst [vmem:[#allocation3 + $0x748] sm:$0xff] %v1310
      %1347 = vst [vmem:[#allocation3 + $0x790] sm:$0xff] %v1311
      %1348 = vst [vmem:[#allocation3 + $0x7d8] sm:$0xff] %v1312
      %1349 = vst [vmem:[#allocation3 + $0x820] sm:$0xff] %v1313
      %1350 = vst [vmem:[#allocation3 + $0x868] sm:$0xff] %v1314
      %1351 = vst [vmem:[#allocation3 + $0x8b0] sm:$0xff] %v1315
      %1352 = vst [vmem:[#allocation3 + $0x8f8] sm:$0xff] %v1316
      %1353 = vst [vmem:[#allocation3 + $0x940] sm:$0xff] %v1317
      %1354 = vst [vmem:[#allocation3 + $0x988] sm:$0xff] %v1318
      %1355 = vst [vmem:[#allocation3 + $0x9d0] sm:$0xff] %v1319
      %1356 = vst [vmem:[#allocation3 + $0xa18] sm:$0xff] %v1320
      %v1357 = vld [vmem:[#allocation3] sm:$0xff]
      %v1358 = vld [vmem:[#allocation3 + $0x8] sm:$0xff]
      %v1359 = vld [vmem:[#allocation3 + $0x10] sm:$0xff]
      %v1360 = vld [vmem:[#allocation3 + $0x18] sm:$0xff]
      %v1361 = vld [vmem:[#allocation3 + $0x20] sm:$0xff]
      %v1362 = vld [vmem:[#allocation3 + $0x28] sm:$0xff]
      %v1363 = vld [vmem:[#allocation3 + $0x30] sm:$0xff]
      %v1364 = vld [vmem:[#allocation3 + $0x38] sm:$0xff]
      %v1365 = vld [vmem:[#allocation3 + $0x40] sm:$0xff]
      %v1366 = vld [vmem:[#allocation3 + $0x48] sm:$0xff]
      %v1367 = vld [vmem:[#allocation3 + $0x50] sm:$0xff]
      %v1368 = vld [vmem:[#allocation3 + $0x58] sm:$0xff]
      %v1369 = vld [vmem:[#allocation3 + $0x60] sm:$0xff]
      %v1370 = vld [vmem:[#allocation3 + $0x68] sm:$0xff]
      %v1371 = vld [vmem:[#allocation3 + $0x70] sm:$0xff]
      %v1372 = vld [vmem:[#allocation3 + $0x78] sm:$0xff]
      %v1373 = vld [vmem:[#allocation3 + $0x80] sm:$0xff]
      %v1374 = vld [vmem:[#allocation3 + $0x88] sm:$0xff]
      %v1375 = vld [vmem:[#allocation3 + $0x90] sm:$0xff]
      %v1376 = vld [vmem:[#allocation3 + $0x98] sm:$0xff]
      %v1377 = vld [vmem:[#allocation3 + $0xa0] sm:$0xff]
      %v1378 = vld [vmem:[#allocation3 + $0xa8] sm:$0xff]
      %v1379 = vld [vmem:[#allocation3 + $0xb0] sm:$0xff]
      %v1380 = vld [vmem:[#allocation3 + $0xb8] sm:$0xff]
      %v1381 = vld [vmem:[#allocation3 + $0xc0] sm:$0xff]
      %v1382 = vld [vmem:[#allocation3 + $0xc8] sm:$0xff]
      %v1383 = vld [vmem:[#allocation3 + $0xd0] sm:$0xff]
      %v1384 = vld [vmem:[#allocation3 + $0xd8] sm:$0xff]
      %v1385 = vld [vmem:[#allocation3 + $0xe0] sm:$0xff]
      %v1386 = vld [vmem:[#allocation3 + $0xe8] sm:$0xff]
      %v1387 = vld [vmem:[#allocation3 + $0xf0] sm:$0xff]
      %v1388 = vld [vmem:[#allocation3 + $0xf8] sm:$0xff]
      %v1389 = vld [vmem:[#allocation3 + $0x100] sm:$0xff]
      %v1390 = vld [vmem:[#allocation3 + $0x108] sm:$0xff]
      %v1391 = vld [vmem:[#allocation3 + $0x110] sm:$0xff]
      %v1392 = vld [vmem:[#allocation3 + $0x118] sm:$0xff]
      %v1393 = vld [vmem:[#allocation3 + $0x120] sm:$0xff]
      %v1394 = vld [vmem:[#allocation3 + $0x128] sm:$0xff]
      %v1395 = vld [vmem:[#allocation3 + $0x130] sm:$0xff]
      %v1396 = vld [vmem:[#allocation3 + $0x138] sm:$0xff]
      %v1397 = vld [vmem:[#allocation3 + $0x140] sm:$0xff]
      %v1398 = vld [vmem:[#allocation3 + $0x148] sm:$0xff]
      %v1399 = vld [vmem:[#allocation3 + $0x150] sm:$0xff]
      %v1400 = vld [vmem:[#allocation3 + $0x158] sm:$0xff]
      %v1401 = vld [vmem:[#allocation3 + $0x160] sm:$0xff]
      %v1402 = vld [vmem:[#allocation3 + $0x168] sm:$0xff]
      %v1403 = vld [vmem:[#allocation3 + $0x170] sm:$0xff]
      %v1404 = vld [vmem:[#allocation3 + $0x178] sm:$0xff]
      %v1405 = vld [vmem:[#allocation3 + $0x180] sm:$0xff]
      %v1406 = vld [vmem:[#allocation3 + $0x188] sm:$0xff]
      %v1407 = vld [vmem:[#allocation3 + $0x190] sm:$0xff]
      %v1408 = vld [vmem:[#allocation3 + $0x198] sm:$0xff]
      %v1409 = vld [vmem:[#allocation3 + $0x1a0] sm:$0xff]
      %v1410 = vld [vmem:[#allocation3 + $0x1a8] sm:$0xff]
      %v1411 = vld [vmem:[#allocation3 + $0x1b0] sm:$0xff]
      %v1412 = vld [vmem:[#allocation3 + $0x1b8] sm:$0xff]
      %v1413 = vld [vmem:[#allocation3 + $0x1c0] sm:$0xff]
      %v1414 = vld [vmem:[#allocation3 + $0x1c8] sm:$0xff]
      %v1415 = vld [vmem:[#allocation3 + $0x1d0] sm:$0xff]
      %v1416 = vld [vmem:[#allocation3 + $0x1d8] sm:$0xff]
      %v1417 = vld [vmem:[#allocation3 + $0x1e0] sm:$0xff]
      %v1418 = vld [vmem:[#allocation3 + $0x1e8] sm:$0xff]
      %v1419 = vld [vmem:[#allocation3 + $0x1f0] sm:$0xff]
      %v1420 = vld [vmem:[#allocation3 + $0x1f8] sm:$0xff]
      %v1421 = vld [vmem:[#allocation3 + $0x200] sm:$0xff]
      %v1422 = vld [vmem:[#allocation3 + $0x208] sm:$0xff]
      %v1423 = vld [vmem:[#allocation3 + $0x210] sm:$0xff]
      %v1424 = vld [vmem:[#allocation3 + $0x218] sm:$0xff]
      %v1425 = vld [vmem:[#allocation3 + $0x220] sm:$0xff]
      %v1426 = vld [vmem:[#allocation3 + $0x228] sm:$0xff]
      %v1427 = vld [vmem:[#allocation3 + $0x230] sm:$0xff]
      %v1428 = vld [vmem:[#allocation3 + $0x238] sm:$0xff]
      %v1429 = vld [vmem:[#allocation3 + $0x240] sm:$0xff]
      %v1430 = vld [vmem:[#allocation3 + $0x248] sm:$0xff]
      %v1431 = vld [vmem:[#allocation3 + $0x250] sm:$0xff]
      %v1432 = vld [vmem:[#allocation3 + $0x258] sm:$0xff]
      %v1433 = vld [vmem:[#allocation3 + $0x260] sm:$0xff]
      %v1434 = vld [vmem:[#allocation3 + $0x268] sm:$0xff]
      %v1435 = vld [vmem:[#allocation3 + $0x270] sm:$0xff]
      %v1436 = vld [vmem:[#allocation3 + $0x278] sm:$0xff]
      %v1437 = vld [vmem:[#allocation3 + $0x280] sm:$0xff]
      %v1438 = vld [vmem:[#allocation3 + $0x288] sm:$0xff]
      %v1439 = vld [vmem:[#allocation3 + $0x290] sm:$0xff]
      %v1440 = vld [vmem:[#allocation3 + $0x298] sm:$0xff]
      %v1441 = vld [vmem:[#allocation3 + $0x2a0] sm:$0xff]
      %v1442 = vld [vmem:[#allocation3 + $0x2a8] sm:$0xff]
      %v1443 = vld [vmem:[#allocation3 + $0x2b0] sm:$0xff]
      %v1444 = vld [vmem:[#allocation3 + $0x2b8] sm:$0xff]
      %v1445 = vld [vmem:[#allocation3 + $0x2c0] sm:$0xff]
      %v1446 = vld [vmem:[#allocation3 + $0x2c8] sm:$0xff]
      %v1447 = vld [vmem:[#allocation3 + $0x2d0] sm:$0xff]
      %v1448 = vld [vmem:[#allocation3 + $0x2d8] sm:$0xff]
      %v1449 = vld [vmem:[#allocation3 + $0x2e0] sm:$0xff]
      %v1450 = vld [vmem:[#allocation3 + $0x2e8] sm:$0xff]
      %v1451 = vld [vmem:[#allocation3 + $0x2f0] sm:$0xff]
      %v1452 = vld [vmem:[#allocation3 + $0x2f8] sm:$0xff]
      %v1453 = vld [vmem:[#allocation3 + $0x300] sm:$0xff]
      %v1454 = vld [vmem:[#allocation3 + $0x308] sm:$0xff]
      %v1455 = vld [vmem:[#allocation3 + $0x310] sm:$0xff]
      %v1456 = vld [vmem:[#allocation3 + $0x318] sm:$0xff]
      %v1457 = vld [vmem:[#allocation3 + $0x320] sm:$0xff]
      %v1458 = vld [vmem:[#allocation3 + $0x328] sm:$0xff]
      %v1459 = vld [vmem:[#allocation3 + $0x330] sm:$0xff]
      %v1460 = vld [vmem:[#allocation3 + $0x338] sm:$0xff]
      %v1461 = vld [vmem:[#allocation3 + $0x340] sm:$0xff]
      %v1462 = vld [vmem:[#allocation3 + $0x348] sm:$0xff]
      %v1463 = vld [vmem:[#allocation3 + $0x350] sm:$0xff]
      %v1464 = vld [vmem:[#allocation3 + $0x358] sm:$0xff]
      %v1465 = vld [vmem:[#allocation3 + $0x360] sm:$0xff]
      %v1466 = vld [vmem:[#allocation3 + $0x368] sm:$0xff]
      %v1467 = vld [vmem:[#allocation3 + $0x370] sm:$0xff]
      %v1468 = vld [vmem:[#allocation3 + $0x378] sm:$0xff]
      %v1469 = vld [vmem:[#allocation3 + $0x380] sm:$0xff]
      %v1470 = vld [vmem:[#allocation3 + $0x388] sm:$0xff]
      %v1471 = vld [vmem:[#allocation3 + $0x390] sm:$0xff]
      %v1472 = vld [vmem:[#allocation3 + $0x398] sm:$0xff]
      %v1473 = vld [vmem:[#allocation3 + $0x3a0] sm:$0xff]
      %v1474 = vld [vmem:[#allocation3 + $0x3a8] sm:$0xff]
      %v1475 = vld [vmem:[#allocation3 + $0x3b0] sm:$0xff]
      %v1476 = vld [vmem:[#allocation3 + $0x3b8] sm:$0xff]
      %v1477 = vld [vmem:[#allocation3 + $0x3c0] sm:$0xff]
      %v1478 = vld [vmem:[#allocation3 + $0x3c8] sm:$0xff]
      %v1479 = vld [vmem:[#allocation3 + $0x3d0] sm:$0xff]
      %v1480 = vld [vmem:[#allocation3 + $0x3d8] sm:$0xff]
      %v1481 = vld [vmem:[#allocation3 + $0x3e0] sm:$0xff]
      %v1482 = vld [vmem:[#allocation3 + $0x3e8] sm:$0xff]
      %v1483 = vld [vmem:[#allocation3 + $0x3f0] sm:$0xff]
      %v1484 = vld [vmem:[#allocation3 + $0x3f8] sm:$0xff]
      %v1485 = vld [vmem:[#allocation3 + $0x400] sm:$0xff]
      %v1486 = vld [vmem:[#allocation3 + $0x408] sm:$0xff]
      %v1487 = vld [vmem:[#allocation3 + $0x410] sm:$0xff]
      %v1488 = vld [vmem:[#allocation3 + $0x418] sm:$0xff]
      %v1489 = vld [vmem:[#allocation3 + $0x420] sm:$0xff]
      %v1490 = vld [vmem:[#allocation3 + $0x428] sm:$0xff]
      %v1491 = vld [vmem:[#allocation3 + $0x430] sm:$0xff]
      %v1492 = vld [vmem:[#allocation3 + $0x438] sm:$0xff]
      %v1493 = vld [vmem:[#allocation3 + $0x440] sm:$0xff]
      %v1494 = vld [vmem:[#allocation3 + $0x448] sm:$0xff]
      %v1495 = vld [vmem:[#allocation3 + $0x450] sm:$0xff]
      %v1496 = vld [vmem:[#allocation3 + $0x458] sm:$0xff]
      %v1497 = vld [vmem:[#allocation3 + $0x460] sm:$0xff]
      %v1498 = vld [vmem:[#allocation3 + $0x468] sm:$0xff]
      %v1499 = vld [vmem:[#allocation3 + $0x470] sm:$0xff]
      %v1500 = vld [vmem:[#allocation3 + $0x478] sm:$0xff]
      %v1501 = vld [vmem:[#allocation3 + $0x480] sm:$0xff]
      %v1502 = vld [vmem:[#allocation3 + $0x488] sm:$0xff]
      %v1503 = vld [vmem:[#allocation3 + $0x490] sm:$0xff]
      %v1504 = vld [vmem:[#allocation3 + $0x498] sm:$0xff]
      %v1505 = vld [vmem:[#allocation3 + $0x4a0] sm:$0xff]
      %v1506 = vld [vmem:[#allocation3 + $0x4a8] sm:$0xff]
      %v1507 = vld [vmem:[#allocation3 + $0x4b0] sm:$0xff]
      %v1508 = vld [vmem:[#allocation3 + $0x4b8] sm:$0xff]
      %v1509 = vld [vmem:[#allocation3 + $0x4c0] sm:$0xff]
      %v1510 = vld [vmem:[#allocation3 + $0x4c8] sm:$0xff]
      %v1511 = vld [vmem:[#allocation3 + $0x4d0] sm:$0xff]
      %v1512 = vld [vmem:[#allocation3 + $0x4d8] sm:$0xff]
      %v1513 = vld [vmem:[#allocation3 + $0x4e0] sm:$0xff]
      %v1514 = vld [vmem:[#allocation3 + $0x4e8] sm:$0xff]
      %v1515 = vld [vmem:[#allocation3 + $0x4f0] sm:$0xff]
      %v1516 = vld [vmem:[#allocation3 + $0x4f8] sm:$0xff]
      %v1517 = vld [vmem:[#allocation3 + $0x500] sm:$0xff]
      %v1518 = vld [vmem:[#allocation3 + $0x508] sm:$0xff]
      %v1519 = vld [vmem:[#allocation3 + $0x510] sm:$0xff]
      %v1520 = vld [vmem:[#allocation3 + $0x518] sm:$0xff]
      %v1521 = vld [vmem:[#allocation3 + $0x520] sm:$0xff]
      %v1522 = vld [vmem:[#allocation3 + $0x528] sm:$0xff]
      %v1523 = vld [vmem:[#allocation3 + $0x530] sm:$0xff]
      %v1524 = vld [vmem:[#allocation3 + $0x538] sm:$0xff]
      %v1525 = vld [vmem:[#allocation3 + $0x540] sm:$0xff]
      %v1526 = vld [vmem:[#allocation3 + $0x548] sm:$0xff]
      %v1527 = vld [vmem:[#allocation3 + $0x550] sm:$0xff]
      %v1528 = vld [vmem:[#allocation3 + $0x558] sm:$0xff]
      %v1529 = vld [vmem:[#allocation3 + $0x560] sm:$0xff]
      %v1530 = vld [vmem:[#allocation3 + $0x568] sm:$0xff]
      %v1531 = vld [vmem:[#allocation3 + $0x570] sm:$0xff]
      %v1532 = vld [vmem:[#allocation3 + $0x578] sm:$0xff]
      %v1533 = vld [vmem:[#allocation3 + $0x580] sm:$0xff]
      %v1534 = vld [vmem:[#allocation3 + $0x588] sm:$0xff]
      %v1535 = vld [vmem:[#allocation3 + $0x590] sm:$0xff]
      %v1536 = vld [vmem:[#allocation3 + $0x598] sm:$0xff]
      %v1537 = vld [vmem:[#allocation3 + $0x5a0] sm:$0xff]
      %v1538 = vld [vmem:[#allocation3 + $0x5a8] sm:$0xff]
      %v1539 = vld [vmem:[#allocation3 + $0x5b0] sm:$0xff]
      %v1540 = vld [vmem:[#allocation3 + $0x5b8] sm:$0xff]
      %v1541 = vld [vmem:[#allocation3 + $0x5c0] sm:$0xff]
      %v1542 = vld [vmem:[#allocation3 + $0x5c8] sm:$0xff]
      %v1543 = vld [vmem:[#allocation3 + $0x5d0] sm:$0xff]
      %v1544 = vld [vmem:[#allocation3 + $0x5d8] sm:$0xff]
      %v1545 = vld [vmem:[#allocation3 + $0x5e0] sm:$0xff]
      %v1546 = vld [vmem:[#allocation3 + $0x5e8] sm:$0xff]
      %v1547 = vld [vmem:[#allocation3 + $0x5f0] sm:$0xff]
      %v1548 = vld [vmem:[#allocation3 + $0x5f8] sm:$0xff]
      %v1549 = vld [vmem:[#allocation3 + $0x600] sm:$0xff]
      %v1550 = vld [vmem:[#allocation3 + $0x608] sm:$0xff]
      %v1551 = vld [vmem:[#allocation3 + $0x610] sm:$0xff]
      %v1552 = vld [vmem:[#allocation3 + $0x618] sm:$0xff]
      %v1553 = vld [vmem:[#allocation3 + $0x620] sm:$0xff]
      %v1554 = vld [vmem:[#allocation3 + $0x628] sm:$0xff]
      %v1555 = vld [vmem:[#allocation3 + $0x630] sm:$0xff]
      %v1556 = vld [vmem:[#allocation3 + $0x638] sm:$0xff]
      %v1557 = vld [vmem:[#allocation3 + $0x640] sm:$0xff]
      %v1558 = vld [vmem:[#allocation3 + $0x648] sm:$0xff]
      %v1559 = vld [vmem:[#allocation3 + $0x650] sm:$0xff]
      %v1560 = vld [vmem:[#allocation3 + $0x658] sm:$0xff]
      %v1561 = vld [vmem:[#allocation3 + $0x660] sm:$0xff]
      %v1562 = vld [vmem:[#allocation3 + $0x668] sm:$0xff]
      %v1563 = vld [vmem:[#allocation3 + $0x670] sm:$0xff]
      %v1564 = vld [vmem:[#allocation3 + $0x678] sm:$0xff]
      %v1565 = vld [vmem:[#allocation3 + $0x680] sm:$0xff]
      %v1566 = vld [vmem:[#allocation3 + $0x688] sm:$0xff]
      %v1567 = vld [vmem:[#allocation3 + $0x690] sm:$0xff]
      %v1568 = vld [vmem:[#allocation3 + $0x698] sm:$0xff]
      %v1569 = vld [vmem:[#allocation3 + $0x6a0] sm:$0xff]
      %v1570 = vld [vmem:[#allocation3 + $0x6a8] sm:$0xff]
      %v1571 = vld [vmem:[#allocation3 + $0x6b0] sm:$0xff]
      %v1572 = vld [vmem:[#allocation3 + $0x6b8] sm:$0xff]
      %v1573 = vld [vmem:[#allocation3 + $0x6c0] sm:$0xff]
      %v1574 = vld [vmem:[#allocation3 + $0x6c8] sm:$0xff]
      %v1575 = vld [vmem:[#allocation3 + $0x6d0] sm:$0xff]
      %v1576 = vld [vmem:[#allocation3 + $0x6d8] sm:$0xff]
      %v1577 = vld [vmem:[#allocation3 + $0x6e0] sm:$0xff]
      %v1578 = vld [vmem:[#allocation3 + $0x6e8] sm:$0xff]
      %v1579 = vld [vmem:[#allocation3 + $0x6f0] sm:$0xff]
      %v1580 = vld [vmem:[#allocation3 + $0x6f8] sm:$0xff]
      %v1581 = vld [vmem:[#allocation3 + $0x700] sm:$0xff]
      %v1582 = vld [vmem:[#allocation3 + $0x708] sm:$0xff]
      %v1583 = vld [vmem:[#allocation3 + $0x710] sm:$0xff]
      %v1584 = vld [vmem:[#allocation3 + $0x718] sm:$0xff]
      %v1585 = vld [vmem:[#allocation3 + $0x720] sm:$0xff]
      %v1586 = vld [vmem:[#allocation3 + $0x728] sm:$0xff]
      %v1587 = vld [vmem:[#allocation3 + $0x730] sm:$0xff]
      %v1588 = vld [vmem:[#allocation3 + $0x738] sm:$0xff]
      %v1589 = vld [vmem:[#allocation3 + $0x740] sm:$0xff]
      %v1590 = vld [vmem:[#allocation3 + $0x748] sm:$0xff]
      %v1591 = vld [vmem:[#allocation3 + $0x750] sm:$0xff]
      %v1592 = vld [vmem:[#allocation3 + $0x758] sm:$0xff]
      %v1593 = vld [vmem:[#allocation3 + $0x760] sm:$0xff]
      %v1594 = vld [vmem:[#allocation3 + $0x768] sm:$0xff]
      %v1595 = vld [vmem:[#allocation3 + $0x770] sm:$0xff]
      %v1596 = vld [vmem:[#allocation3 + $0x778] sm:$0xff]
      %v1597 = vld [vmem:[#allocation3 + $0x780] sm:$0xff]
      %v1598 = vld [vmem:[#allocation3 + $0x788] sm:$0xff]
      %v1599 = vld [vmem:[#allocation3 + $0x790] sm:$0xff]
      %v1600 = vld [vmem:[#allocation3 + $0x798] sm:$0xff]
      %v1601 = vld [vmem:[#allocation3 + $0x7a0] sm:$0xff]
      %v1602 = vld [vmem:[#allocation3 + $0x7a8] sm:$0xff]
      %v1603 = vld [vmem:[#allocation3 + $0x7b0] sm:$0xff]
      %v1604 = vld [vmem:[#allocation3 + $0x7b8] sm:$0xff]
      %v1605 = vld [vmem:[#allocation3 + $0x7c0] sm:$0xff]
      %v1606 = vld [vmem:[#allocation3 + $0x7c8] sm:$0xff]
      %v1607 = vld [vmem:[#allocation3 + $0x7d0] sm:$0xff]
      %v1608 = vld [vmem:[#allocation3 + $0x7d8] sm:$0xff]
      %v1609 = vld [vmem:[#allocation3 + $0x7e0] sm:$0xff]
      %v1610 = vld [vmem:[#allocation3 + $0x7e8] sm:$0xff]
      %v1611 = vld [vmem:[#allocation3 + $0x7f0] sm:$0xff]
      %v1612 = vld [vmem:[#allocation3 + $0x7f8] sm:$0xff]
      %v1613 = vld [vmem:[#allocation3 + $0x800] sm:$0xff]
      %v1614 = vld [vmem:[#allocation3 + $0x808] sm:$0xff]
      %v1615 = vld [vmem:[#allocation3 + $0x810] sm:$0xff]
      %v1616 = vld [vmem:[#allocation3 + $0x818] sm:$0xff]
      %v1617 = vld [vmem:[#allocation3 + $0x820] sm:$0xff]
      %v1618 = vld [vmem:[#allocation3 + $0x828] sm:$0xff]
      %v1619 = vld [vmem:[#allocation3 + $0x830] sm:$0xff]
      %v1620 = vld [vmem:[#allocation3 + $0x838] sm:$0xff]
      %v1621 = vld [vmem:[#allocation3 + $0x840] sm:$0xff]
      %v1622 = vld [vmem:[#allocation3 + $0x848] sm:$0xff]
      %v1623 = vld [vmem:[#allocation3 + $0x850] sm:$0xff]
      %v1624 = vld [vmem:[#allocation3 + $0x858] sm:$0xff]
      %v1625 = vld [vmem:[#allocation3 + $0x860] sm:$0xff]
      %v1626 = vld [vmem:[#allocation3 + $0x868] sm:$0xff]
      %v1627 = vld [vmem:[#allocation3 + $0x870] sm:$0xff]
      %v1628 = vld [vmem:[#allocation3 + $0x878] sm:$0xff]
      %v1629 = vld [vmem:[#allocation3 + $0x880] sm:$0xff]
      %v1630 = vld [vmem:[#allocation3 + $0x888] sm:$0xff]
      %v1631 = vld [vmem:[#allocation3 + $0x890] sm:$0xff]
      %v1632 = vld [vmem:[#allocation3 + $0x898] sm:$0xff]
      %v1633 = vld [vmem:[#allocation3 + $0x8a0] sm:$0xff]
      %v1634 = vld [vmem:[#allocation3 + $0x8a8] sm:$0xff]
      %v1635 = vld [vmem:[#allocation3 + $0x8b0] sm:$0xff]
      %v1636 = vld [vmem:[#allocation3 + $0x8b8] sm:$0xff]
      %v1637 = vld [vmem:[#allocation3 + $0x8c0] sm:$0xff]
      %v1638 = vld [vmem:[#allocation3 + $0x8c8] sm:$0xff]
      %v1639 = vld [vmem:[#allocation3 + $0x8d0] sm:$0xff]
      %v1640 = vld [vmem:[#allocation3 + $0x8d8] sm:$0xff]
      %v1641 = vld [vmem:[#allocation3 + $0x8e0] sm:$0xff]
      %v1642 = vld [vmem:[#allocation3 + $0x8e8] sm:$0xff]
      %v1643 = vld [vmem:[#allocation3 + $0x8f0] sm:$0xff]
      %v1644 = vld [vmem:[#allocation3 + $0x8f8] sm:$0xff]
      %v1645 = vld [vmem:[#allocation3 + $0x900] sm:$0xff]
      %v1646 = vld [vmem:[#allocation3 + $0x908] sm:$0xff]
      %v1647 = vld [vmem:[#allocation3 + $0x910] sm:$0xff]
      %v1648 = vld [vmem:[#allocation3 + $0x918] sm:$0xff]
      %v1649 = vld [vmem:[#allocation3 + $0x920] sm:$0xff]
      %v1650 = vld [vmem:[#allocation3 + $0x928] sm:$0xff]
      %v1651 = vld [vmem:[#allocation3 + $0x930] sm:$0xff]
      %v1652 = vld [vmem:[#allocation3 + $0x938] sm:$0xff]
      %v1653 = vld [vmem:[#allocation3 + $0x940] sm:$0xff]
      %v1654 = vld [vmem:[#allocation3 + $0x948] sm:$0xff]
      %v1655 = vld [vmem:[#allocation3 + $0x950] sm:$0xff]
      %v1656 = vld [vmem:[#allocation3 + $0x958] sm:$0xff]
      %v1657 = vld [vmem:[#allocation3 + $0x960] sm:$0xff]
      %v1658 = vld [vmem:[#allocation3 + $0x968] sm:$0xff]
      %v1659 = vld [vmem:[#allocation3 + $0x970] sm:$0xff]
      %v1660 = vld [vmem:[#allocation3 + $0x978] sm:$0xff]
      %v1661 = vld [vmem:[#allocation3 + $0x980] sm:$0xff]
      %v1662 = vld [vmem:[#allocation3 + $0x988] sm:$0xff]
      %v1663 = vld [vmem:[#allocation3 + $0x990] sm:$0xff]
      %v1664 = vld [vmem:[#allocation3 + $0x998] sm:$0xff]
      %v1665 = vld [vmem:[#allocation3 + $0x9a0] sm:$0xff]
      %v1666 = vld [vmem:[#allocation3 + $0x9a8] sm:$0xff]
      %v1667 = vld [vmem:[#allocation3 + $0x9b0] sm:$0xff]
      %v1668 = vld [vmem:[#allocation3 + $0x9b8] sm:$0xff]
      %v1669 = vld [vmem:[#allocation3 + $0x9c0] sm:$0xff]
      %v1670 = vld [vmem:[#allocation3 + $0x9c8] sm:$0xff]
      %v1671 = vld [vmem:[#allocation3 + $0x9d0] sm:$0xff]
      %v1672 = vld [vmem:[#allocation3 + $0x9d8] sm:$0xff]
      %v1673 = vld [vmem:[#allocation3 + $0x9e0] sm:$0xff]
      %v1674 = vld [vmem:[#allocation3 + $0x9e8] sm:$0xff]
      %v1675 = vld [vmem:[#allocation3 + $0x9f0] sm:$0xff]
      %v1676 = vld [vmem:[#allocation3 + $0x9f8] sm:$0xff]
      %v1677 = vld [vmem:[#allocation3 + $0xa00] sm:$0xff]
      %v1678 = vld [vmem:[#allocation3 + $0xa08] sm:$0xff]
      %v1679 = vld [vmem:[#allocation3 + $0xa10] sm:$0xff]
      %v1680 = vld [vmem:[#allocation3 + $0xa18] sm:$0xff]
      %v1681 = vld [vmem:[%s4] sm:$0xff]
      %v1682 = vld [vmem:[%s4 + $0x8] sm:$0xff]
      %v1683 = vld [vmem:[%s4 + $0x10] sm:$0xff]
      %v1684 = vld [vmem:[%s4 + $0x18] sm:$0xff]
      %v1685 = vld [vmem:[%s4 + $0x20] sm:$0xff]
      %v1686 = vld [vmem:[%s4 + $0x28] sm:$0xff]
      %v1687 = vld [vmem:[%s4 + $0x30] sm:$0xff]
      %v1688 = vld [vmem:[%s4 + $0x38] sm:$0xff]
      %v1689 = vld [vmem:[%s4 + $0x40] sm:$0xff]
      %v1690 = vld [vmem:[%s4 + $0x48] sm:$0xff]
      %v1691 = vld [vmem:[%s4 + $0x50] sm:$0xff]
      %v1692 = vld [vmem:[%s4 + $0x58] sm:$0xff]
      %v1693 = vld [vmem:[%s4 + $0x60] sm:$0xff]
      %v1694 = vld [vmem:[%s4 + $0x68] sm:$0xff]
      %v1695 = vld [vmem:[%s4 + $0x70] sm:$0xff]
      %v1696 = vld [vmem:[%s4 + $0x78] sm:$0xff]
      %v1697 = vld [vmem:[%s4 + $0x80] sm:$0xff]
      %v1698 = vld [vmem:[%s4 + $0x88] sm:$0xff]
      %v1699 = vld [vmem:[%s4 + $0x90] sm:$0xff]
      %v1700 = vld [vmem:[%s4 + $0x98] sm:$0xff]
      %v1701 = vld [vmem:[%s4 + $0xa0] sm:$0xff]
      %v1702 = vld [vmem:[%s4 + $0xa8] sm:$0xff]
      %v1703 = vld [vmem:[%s4 + $0xb0] sm:$0xff]
      %v1704 = vld [vmem:[%s4 + $0xb8] sm:$0xff]
      %v1705 = vld [vmem:[%s4 + $0xc0] sm:$0xff]
      %v1706 = vld [vmem:[%s4 + $0xc8] sm:$0xff]
      %v1707 = vld [vmem:[%s4 + $0xd0] sm:$0xff]
      %v1708 = vld [vmem:[%s4 + $0xd8] sm:$0xff]
      %v1709 = vld [vmem:[%s4 + $0xe0] sm:$0xff]
      %v1710 = vld [vmem:[%s4 + $0xe8] sm:$0xff]
      %v1711 = vld [vmem:[%s4 + $0xf0] sm:$0xff]
      %v1712 = vld [vmem:[%s4 + $0xf8] sm:$0xff]
      %v1713 = vld [vmem:[%s4 + $0x100] sm:$0xff]
      %v1714 = vld [vmem:[%s4 + $0x108] sm:$0xff]
      %v1715 = vld [vmem:[%s4 + $0x110] sm:$0xff]
      %v1716 = vld [vmem:[%s4 + $0x118] sm:$0xff]
      %v1717 = vld [vmem:[%s4 + $0x120] sm:$0xff]
      %v1718 = vld [vmem:[%s4 + $0x128] sm:$0xff]
      %v1719 = vld [vmem:[%s4 + $0x130] sm:$0xff]
      %v1720 = vld [vmem:[%s4 + $0x138] sm:$0xff]
      %v1721 = vld [vmem:[%s4 + $0x140] sm:$0xff]
      %v1722 = vld [vmem:[%s4 + $0x148] sm:$0xff]
      %v1723 = vld [vmem:[%s4 + $0x150] sm:$0xff]
      %v1724 = vld [vmem:[%s4 + $0x158] sm:$0xff]
      %v1725 = vld [vmem:[%s4 + $0x160] sm:$0xff]
      %v1726 = vld [vmem:[%s4 + $0x168] sm:$0xff]
      %v1727 = vld [vmem:[%s4 + $0x170] sm:$0xff]
      %v1728 = vld [vmem:[%s4 + $0x178] sm:$0xff]
      %v1729 = vld [vmem:[%s4 + $0x180] sm:$0xff]
      %v1730 = vld [vmem:[%s4 + $0x188] sm:$0xff]
      %v1731 = vld [vmem:[%s4 + $0x190] sm:$0xff]
      %v1732 = vld [vmem:[%s4 + $0x198] sm:$0xff]
      %v1733 = vld [vmem:[%s4 + $0x1a0] sm:$0xff]
      %v1734 = vld [vmem:[%s4 + $0x1a8] sm:$0xff]
      %v1735 = vld [vmem:[%s4 + $0x1b0] sm:$0xff]
      %v1736 = vld [vmem:[%s4 + $0x1b8] sm:$0xff]
      %v1737 = vld [vmem:[%s4 + $0x1c0] sm:$0xff]
      %v1738 = vld [vmem:[%s4 + $0x1c8] sm:$0xff]
      %v1739 = vld [vmem:[%s4 + $0x1d0] sm:$0xff]
      %v1740 = vld [vmem:[%s4 + $0x1d8] sm:$0xff]
      %v1741 = vld [vmem:[%s4 + $0x1e0] sm:$0xff]
      %v1742 = vld [vmem:[%s4 + $0x1e8] sm:$0xff]
      %v1743 = vld [vmem:[%s4 + $0x1f0] sm:$0xff]
      %v1744 = vld [vmem:[%s4 + $0x1f8] sm:$0xff]
      %v1745 = vld [vmem:[%s4 + $0x200] sm:$0xff]
      %v1746 = vld [vmem:[%s4 + $0x208] sm:$0xff]
      %v1747 = vld [vmem:[%s4 + $0x210] sm:$0xff]
      %v1748 = vld [vmem:[%s4 + $0x218] sm:$0xff]
      %v1749 = vld [vmem:[%s4 + $0x220] sm:$0xff]
      %v1750 = vld [vmem:[%s4 + $0x228] sm:$0xff]
      %v1751 = vld [vmem:[%s4 + $0x230] sm:$0xff]
      %v1752 = vld [vmem:[%s4 + $0x238] sm:$0xff]
      %v1753 = vld [vmem:[%s4 + $0x240] sm:$0xff]
      %v1754 = vld [vmem:[%s4 + $0x248] sm:$0xff]
      %v1755 = vld [vmem:[%s4 + $0x250] sm:$0xff]
      %v1756 = vld [vmem:[%s4 + $0x258] sm:$0xff]
      %v1757 = vld [vmem:[%s4 + $0x260] sm:$0xff]
      %v1758 = vld [vmem:[%s4 + $0x268] sm:$0xff]
      %v1759 = vld [vmem:[%s4 + $0x270] sm:$0xff]
      %v1760 = vld [vmem:[%s4 + $0x278] sm:$0xff]
      %v1761 = vld [vmem:[%s4 + $0x280] sm:$0xff]
      %v1762 = vld [vmem:[%s4 + $0x288] sm:$0xff]
      %v1763 = vld [vmem:[%s4 + $0x290] sm:$0xff]
      %v1764 = vld [vmem:[%s4 + $0x298] sm:$0xff]
      %v1765 = vld [vmem:[%s4 + $0x2a0] sm:$0xff]
      %v1766 = vld [vmem:[%s4 + $0x2a8] sm:$0xff]
      %v1767 = vld [vmem:[%s4 + $0x2b0] sm:$0xff]
      %v1768 = vld [vmem:[%s4 + $0x2b8] sm:$0xff]
      %v1769 = vld [vmem:[%s4 + $0x2c0] sm:$0xff]
      %v1770 = vld [vmem:[%s4 + $0x2c8] sm:$0xff]
      %v1771 = vld [vmem:[%s4 + $0x2d0] sm:$0xff]
      %v1772 = vld [vmem:[%s4 + $0x2d8] sm:$0xff]
      %v1773 = vld [vmem:[%s4 + $0x2e0] sm:$0xff]
      %v1774 = vld [vmem:[%s4 + $0x2e8] sm:$0xff]
      %v1775 = vld [vmem:[%s4 + $0x2f0] sm:$0xff]
      %v1776 = vld [vmem:[%s4 + $0x2f8] sm:$0xff]
      %v1777 = vld [vmem:[%s4 + $0x300] sm:$0xff]
      %v1778 = vld [vmem:[%s4 + $0x308] sm:$0xff]
      %v1779 = vld [vmem:[%s4 + $0x310] sm:$0xff]
      %v1780 = vld [vmem:[%s4 + $0x318] sm:$0xff]
      %v1781 = vld [vmem:[%s4 + $0x320] sm:$0xff]
      %v1782 = vld [vmem:[%s4 + $0x328] sm:$0xff]
      %v1783 = vld [vmem:[%s4 + $0x330] sm:$0xff]
      %v1784 = vld [vmem:[%s4 + $0x338] sm:$0xff]
      %v1785 = vld [vmem:[%s4 + $0x340] sm:$0xff]
      %v1786 = vld [vmem:[%s4 + $0x348] sm:$0xff]
      %v1787 = vld [vmem:[%s4 + $0x350] sm:$0xff]
      %v1788 = vld [vmem:[%s4 + $0x358] sm:$0xff]
      %v1789 = vld [vmem:[%s4 + $0x360] sm:$0xff]
      %v1790 = vld [vmem:[%s4 + $0x368] sm:$0xff]
      %v1791 = vld [vmem:[%s4 + $0x370] sm:$0xff]
      %v1792 = vld [vmem:[%s4 + $0x378] sm:$0xff]
      %v1793 = vld [vmem:[%s4 + $0x380] sm:$0xff]
      %v1794 = vld [vmem:[%s4 + $0x388] sm:$0xff]
      %v1795 = vld [vmem:[%s4 + $0x390] sm:$0xff]
      %v1796 = vld [vmem:[%s4 + $0x398] sm:$0xff]
      %v1797 = vld [vmem:[%s4 + $0x3a0] sm:$0xff]
      %v1798 = vld [vmem:[%s4 + $0x3a8] sm:$0xff]
      %v1799 = vld [vmem:[%s4 + $0x3b0] sm:$0xff]
      %v1800 = vld [vmem:[%s4 + $0x3b8] sm:$0xff]
      %v1801 = vld [vmem:[%s4 + $0x3c0] sm:$0xff]
      %v1802 = vld [vmem:[%s4 + $0x3c8] sm:$0xff]
      %v1803 = vld [vmem:[%s4 + $0x3d0] sm:$0xff]
      %v1804 = vld [vmem:[%s4 + $0x3d8] sm:$0xff]
      %v1805 = vld [vmem:[%s4 + $0x3e0] sm:$0xff]
      %v1806 = vld [vmem:[%s4 + $0x3e8] sm:$0xff]
      %v1807 = vld [vmem:[%s4 + $0x3f0] sm:$0xff]
      %v1808 = vld [vmem:[%s4 + $0x3f8] sm:$0xff]
      %v1809 = vld [vmem:[%s4 + $0x400] sm:$0xff]
      %v1810 = vld [vmem:[%s4 + $0x408] sm:$0xff]
      %v1811 = vld [vmem:[%s4 + $0x410] sm:$0xff]
      %v1812 = vld [vmem:[%s4 + $0x418] sm:$0xff]
      %v1813 = vld [vmem:[%s4 + $0x420] sm:$0xff]
      %v1814 = vld [vmem:[%s4 + $0x428] sm:$0xff]
      %v1815 = vld [vmem:[%s4 + $0x430] sm:$0xff]
      %v1816 = vld [vmem:[%s4 + $0x438] sm:$0xff]
      %v1817 = vld [vmem:[%s4 + $0x440] sm:$0xff]
      %v1818 = vld [vmem:[%s4 + $0x448] sm:$0xff]
      %v1819 = vld [vmem:[%s4 + $0x450] sm:$0xff]
      %v1820 = vld [vmem:[%s4 + $0x458] sm:$0xff]
      %v1821 = vld [vmem:[%s4 + $0x460] sm:$0xff]
      %v1822 = vld [vmem:[%s4 + $0x468] sm:$0xff]
      %v1823 = vld [vmem:[%s4 + $0x470] sm:$0xff]
      %v1824 = vld [vmem:[%s4 + $0x478] sm:$0xff]
      %1825 = vmatpush.msra.mxu0 %v1696
      %1826 = vmatpush.msra.mxu0 %v1695
      %1827 = vmatpush.msra.mxu0 %v1694
      %1828 = vmatpush.msra.mxu0 %v1693
      %1829 = vmatpush.msra.mxu0 %v1692
      %1830 = vmatpush.msra.mxu0 %v1691
      %1831 = vmatpush.msra.mxu0 %v1690
      %1832 = vmatpush.msra.mxu0 %v1689
      %1833 = vmatpush.msra.mxu0 %v1688
      %1834 = vmatpush.msra.mxu0 %v1687
      %1835 = vmatpush.msra.mxu0 %v1686
      %1836 = vmatpush.msra.mxu0 %v1685
      %1837 = vmatpush.msra.mxu0 %v1684
      %1838 = vmatpush.msra.mxu0 %v1683
      %1839 = vmatpush.msra.mxu0 %v1682
      %1840 = vmatpush.msra.mxu0 %v1681
      %1841 = vmatmul.f32.gmra.mxu0 %v1357
      %v1842 = vpop.f32.mrf.mxu0
      %v1843 = vadd.f32 0.0, %v1842
      %1844 = vmatmul.f32.gmra.mxu0 %v1366
      %v1845 = vpop.f32.mrf.mxu0
      %v1846 = vadd.f32 0.0, %v1845
      %1847 = vmatmul.f32.gmra.mxu0 %v1375
      %v1848 = vpop.f32.mrf.mxu0
      %v1849 = vadd.f32 0.0, %v1848
      %1850 = vmatmul.f32.gmra.mxu0 %v1384
      %v1851 = vpop.f32.mrf.mxu0
      %v1852 = vadd.f32 0.0, %v1851
      %1853 = vmatmul.f32.gmra.mxu0 %v1393
      %v1854 = vpop.f32.mrf.mxu0
      %v1855 = vadd.f32 0.0, %v1854
      %1856 = vmatmul.f32.gmra.mxu0 %v1402
      %v1857 = vpop.f32.mrf.mxu0
      %v1858 = vadd.f32 0.0, %v1857
      %1859 = vmatmul.f32.gmra.mxu0 %v1411
      %v1860 = vpop.f32.mrf.mxu0
      %v1861 = vadd.f32 0.0, %v1860
      %1862 = vmatmul.f32.gmra.mxu0 %v1420
      %v1863 = vpop.f32.mrf.mxu0
      %v1864 = vadd.f32 0.0, %v1863
      %1865 = vmatmul.f32.gmra.mxu0 %v1429
      %v1866 = vpop.f32.mrf.mxu0
      %v1867 = vadd.f32 0.0, %v1866
      %1868 = vmatmul.f32.gmra.mxu0 %v1438
      %v1869 = vpop.f32.mrf.mxu0
      %v1870 = vadd.f32 0.0, %v1869
      %1871 = vmatmul.f32.gmra.mxu0 %v1447
      %v1872 = vpop.f32.mrf.mxu0
      %v1873 = vadd.f32 0.0, %v1872
      %1874 = vmatmul.f32.gmra.mxu0 %v1456
      %v1875 = vpop.f32.mrf.mxu0
      %v1876 = vadd.f32 0.0, %v1875
      %1877 = vmatmul.f32.gmra.mxu0 %v1465
      %v1878 = vpop.f32.mrf.mxu0
      %v1879 = vadd.f32 0.0, %v1878
      %1880 = vmatmul.f32.gmra.mxu0 %v1474
      %v1881 = vpop.f32.mrf.mxu0
      %v1882 = vadd.f32 0.0, %v1881
      %1883 = vmatmul.f32.gmra.mxu0 %v1483
      %v1884 = vpop.f32.mrf.mxu0
      %v1885 = vadd.f32 0.0, %v1884
      %1886 = vmatmul.f32.gmra.mxu0 %v1492
      %v1887 = vpop.f32.mrf.mxu0
      %v1888 = vadd.f32 0.0, %v1887
      %1889 = vmatmul.f32.gmra.mxu0 %v1501
      %v1890 = vpop.f32.mrf.mxu0
      %v1891 = vadd.f32 0.0, %v1890
      %1892 = vmatmul.f32.gmra.mxu0 %v1510
      %v1893 = vpop.f32.mrf.mxu0
      %v1894 = vadd.f32 0.0, %v1893
      %1895 = vmatmul.f32.gmra.mxu0 %v1519
      %v1896 = vpop.f32.mrf.mxu0
      %v1897 = vadd.f32 0.0, %v1896
      %1898 = vmatmul.f32.gmra.mxu0 %v1528
      %v1899 = vpop.f32.mrf.mxu0
      %v1900 = vadd.f32 0.0, %v1899
      %1901 = vmatmul.f32.gmra.mxu0 %v1537
      %v1902 = vpop.f32.mrf.mxu0
      %v1903 = vadd.f32 0.0, %v1902
      %1904 = vmatmul.f32.gmra.mxu0 %v1546
      %v1905 = vpop.f32.mrf.mxu0
      %v1906 = vadd.f32 0.0, %v1905
      %1907 = vmatmul.f32.gmra.mxu0 %v1555
      %v1908 = vpop.f32.mrf.mxu0
      %v1909 = vadd.f32 0.0, %v1908
      %1910 = vmatmul.f32.gmra.mxu0 %v1564
      %v1911 = vpop.f32.mrf.mxu0
      %v1912 = vadd.f32 0.0, %v1911
      %1913 = vmatmul.f32.gmra.mxu0 %v1573
      %v1914 = vpop.f32.mrf.mxu0
      %v1915 = vadd.f32 0.0, %v1914
      %1916 = vmatmul.f32.gmra.mxu0 %v1582
      %v1917 = vpop.f32.mrf.mxu0
      %v1918 = vadd.f32 0.0, %v1917
      %1919 = vmatmul.f32.gmra.mxu0 %v1591
      %v1920 = vpop.f32.mrf.mxu0
      %v1921 = vadd.f32 0.0, %v1920
      %1922 = vmatmul.f32.gmra.mxu0 %v1600
      %v1923 = vpop.f32.mrf.mxu0
      %v1924 = vadd.f32 0.0, %v1923
      %1925 = vmatmul.f32.gmra.mxu0 %v1609
      %v1926 = vpop.f32.mrf.mxu0
      %v1927 = vadd.f32 0.0, %v1926
      %1928 = vmatmul.f32.gmra.mxu0 %v1618
      %v1929 = vpop.f32.mrf.mxu0
      %v1930 = vadd.f32 0.0, %v1929
      %1931 = vmatmul.f32.gmra.mxu0 %v1627
      %v1932 = vpop.f32.mrf.mxu0
      %v1933 = vadd.f32 0.0, %v1932
      %1934 = vmatmul.f32.gmra.mxu0 %v1636
      %v1935 = vpop.f32.mrf.mxu0
      %v1936 = vadd.f32 0.0, %v1935
      %1937 = vmatmul.f32.gmra.mxu0 %v1645
      %v1938 = vpop.f32.mrf.mxu0
      %v1939 = vadd.f32 0.0, %v1938
      %1940 = vmatmul.f32.gmra.mxu0 %v1654
      %v1941 = vpop.f32.mrf.mxu0
      %v1942 = vadd.f32 0.0, %v1941
      %1943 = vmatmul.f32.gmra.mxu0 %v1663
      %v1944 = vpop.f32.mrf.mxu0
      %v1945 = vadd.f32 0.0, %v1944
      %1946 = vmatmul.f32.gmra.mxu0 %v1672
      %v1947 = vpop.f32.mrf.mxu0
      %v1948 = vadd.f32 0.0, %v1947
      %1949 = vdwg.mxu0
      %1950 = vmatpush.msra.mxu0 %v1712
      %1951 = vmatpush.msra.mxu0 %v1711
      %1952 = vmatpush.msra.mxu0 %v1710
      %1953 = vmatpush.msra.mxu0 %v1709
      %1954 = vmatpush.msra.mxu0 %v1708
      %1955 = vmatpush.msra.mxu0 %v1707
      %1956 = vmatpush.msra.mxu0 %v1706
      %1957 = vmatpush.msra.mxu0 %v1705
      %1958 = vmatpush.msra.mxu0 %v1704
      %1959 = vmatpush.msra.mxu0 %v1703
      %1960 = vmatpush.msra.mxu0 %v1702
      %1961 = vmatpush.msra.mxu0 %v1701
      %1962 = vmatpush.msra.mxu0 %v1700
      %1963 = vmatpush.msra.mxu0 %v1699
      %1964 = vmatpush.msra.mxu0 %v1698
      %1965 = vmatpush.msra.mxu0 %v1697
      %1966 = vmatmul.f32.gmra.mxu0 %v1358
      %v1967 = vpop.f32.mrf.mxu0
      %v1968 = vadd.f32 %v1843, %v1967
      %1969 = vmatmul.f32.gmra.mxu0 %v1367
      %v1970 = vpop.f32.mrf.mxu0
      %v1971 = vadd.f32 %v1846, %v1970
      %1972 = vmatmul.f32.gmra.mxu0 %v1376
      %v1973 = vpop.f32.mrf.mxu0
      %v1974 = vadd.f32 %v1849, %v1973
      %1975 = vmatmul.f32.gmra.mxu0 %v1385
      %v1976 = vpop.f32.mrf.mxu0
      %v1977 = vadd.f32 %v1852, %v1976
      %1978 = vmatmul.f32.gmra.mxu0 %v1394
      %v1979 = vpop.f32.mrf.mxu0
      %v1980 = vadd.f32 %v1855, %v1979
      %1981 = vmatmul.f32.gmra.mxu0 %v1403
      %v1982 = vpop.f32.mrf.mxu0
      %v1983 = vadd.f32 %v1858, %v1982
      %1984 = vmatmul.f32.gmra.mxu0 %v1412
      %v1985 = vpop.f32.mrf.mxu0
      %v1986 = vadd.f32 %v1861, %v1985
      %1987 = vmatmul.f32.gmra.mxu0 %v1421
      %v1988 = vpop.f32.mrf.mxu0
      %v1989 = vadd.f32 %v1864, %v1988
      %1990 = vmatmul.f32.gmra.mxu0 %v1430
      %v1991 = vpop.f32.mrf.mxu0
      %v1992 = vadd.f32 %v1867, %v1991
      %1993 = vmatmul.f32.gmra.mxu0 %v1439
      %v1994 = vpop.f32.mrf.mxu0
      %v1995 = vadd.f32 %v1870, %v1994
      %1996 = vmatmul.f32.gmra.mxu0 %v1448
      %v1997 = vpop.f32.mrf.mxu0
      %v1998 = vadd.f32 %v1873, %v1997
      %1999 = vmatmul.f32.gmra.mxu0 %v1457
      %v2000 = vpop.f32.mrf.mxu0
      %v2001 = vadd.f32 %v1876, %v2000
      %2002 = vmatmul.f32.gmra.mxu0 %v1466
      %v2003 = vpop.f32.mrf.mxu0
      %v2004 = vadd.f32 %v1879, %v2003
      %2005 = vmatmul.f32.gmra.mxu0 %v1475
      %v2006 = vpop.f32.mrf.mxu0
      %v2007 = vadd.f32 %v1882, %v2006
      %2008 = vmatmul.f32.gmra.mxu0 %v1484
      %v2009 = vpop.f32.mrf.mxu0
      %v2010 = vadd.f32 %v1885, %v2009
      %2011 = vmatmul.f32.gmra.mxu0 %v1493
      %v2012 = vpop.f32.mrf.mxu0
      %v2013 = vadd.f32 %v1888, %v2012
      %2014 = vmatmul.f32.gmra.mxu0 %v1502
      %v2015 = vpop.f32.mrf.mxu0
      %v2016 = vadd.f32 %v1891, %v2015
      %2017 = vmatmul.f32.gmra.mxu0 %v1511
      %v2018 = vpop.f32.mrf.mxu0
      %v2019 = vadd.f32 %v1894, %v2018
      %2020 = vmatmul.f32.gmra.mxu0 %v1520
      %v2021 = vpop.f32.mrf.mxu0
      %v2022 = vadd.f32 %v1897, %v2021
      %2023 = vmatmul.f32.gmra.mxu0 %v1529
      %v2024 = vpop.f32.mrf.mxu0
      %v2025 = vadd.f32 %v1900, %v2024
      %2026 = vmatmul.f32.gmra.mxu0 %v1538
      %v2027 = vpop.f32.mrf.mxu0
      %v2028 = vadd.f32 %v1903, %v2027
      %2029 = vmatmul.f32.gmra.mxu0 %v1547
      %v2030 = vpop.f32.mrf.mxu0
      %v2031 = vadd.f32 %v1906, %v2030
      %2032 = vmatmul.f32.gmra.mxu0 %v1556
      %v2033 = vpop.f32.mrf.mxu0
      %v2034 = vadd.f32 %v1909, %v2033
      %2035 = vmatmul.f32.gmra.mxu0 %v1565
      %v2036 = vpop.f32.mrf.mxu0
      %v2037 = vadd.f32 %v1912, %v2036
      %2038 = vmatmul.f32.gmra.mxu0 %v1574
      %v2039 = vpop.f32.mrf.mxu0
      %v2040 = vadd.f32 %v1915, %v2039
      %2041 = vmatmul.f32.gmra.mxu0 %v1583
      %v2042 = vpop.f32.mrf.mxu0
      %v2043 = vadd.f32 %v1918, %v2042
      %2044 = vmatmul.f32.gmra.mxu0 %v1592
      %v2045 = vpop.f32.mrf.mxu0
      %v2046 = vadd.f32 %v1921, %v2045
      %2047 = vmatmul.f32.gmra.mxu0 %v1601
      %v2048 = vpop.f32.mrf.mxu0
      %v2049 = vadd.f32 %v1924, %v2048
      %2050 = vmatmul.f32.gmra.mxu0 %v1610
      %v2051 = vpop.f32.mrf.mxu0
      %v2052 = vadd.f32 %v1927, %v2051
      %2053 = vmatmul.f32.gmra.mxu0 %v1619
      %v2054 = vpop.f32.mrf.mxu0
      %v2055 = vadd.f32 %v1930, %v2054
      %2056 = vmatmul.f32.gmra.mxu0 %v1628
      %v2057 = vpop.f32.mrf.mxu0
      %v2058 = vadd.f32 %v1933, %v2057
      %2059 = vmatmul.f32.gmra.mxu0 %v1637
      %v2060 = vpop.f32.mrf.mxu0
      %v2061 = vadd.f32 %v1936, %v2060
      %2062 = vmatmul.f32.gmra.mxu0 %v1646
      %v2063 = vpop.f32.mrf.mxu0
      %v2064 = vadd.f32 %v1939, %v2063
      %2065 = vmatmul.f32.gmra.mxu0 %v1655
      %v2066 = vpop.f32.mrf.mxu0
      %v2067 = vadd.f32 %v1942, %v2066
      %2068 = vmatmul.f32.gmra.mxu0 %v1664
      %v2069 = vpop.f32.mrf.mxu0
      %v2070 = vadd.f32 %v1945, %v2069
      %2071 = vmatmul.f32.gmra.mxu0 %v1673
      %v2072 = vpop.f32.mrf.mxu0
      %v2073 = vadd.f32 %v1948, %v2072
      %2074 = vdwg.mxu0
      %2075 = vmatpush.msra.mxu0 %v1728
      %2076 = vmatpush.msra.mxu0 %v1727
      %2077 = vmatpush.msra.mxu0 %v1726
      %2078 = vmatpush.msra.mxu0 %v1725
      %2079 = vmatpush.msra.mxu0 %v1724
      %2080 = vmatpush.msra.mxu0 %v1723
      %2081 = vmatpush.msra.mxu0 %v1722
      %2082 = vmatpush.msra.mxu0 %v1721
      %2083 = vmatpush.msra.mxu0 %v1720
      %2084 = vmatpush.msra.mxu0 %v1719
      %2085 = vmatpush.msra.mxu0 %v1718
      %2086 = vmatpush.msra.mxu0 %v1717
      %2087 = vmatpush.msra.mxu0 %v1716
      %2088 = vmatpush.msra.mxu0 %v1715
      %2089 = vmatpush.msra.mxu0 %v1714
      %2090 = vmatpush.msra.mxu0 %v1713
      %2091 = vmatmul.f32.gmra.mxu0 %v1359
      %v2092 = vpop.f32.mrf.mxu0
      %v2093 = vadd.f32 %v1968, %v2092
      %2094 = vmatmul.f32.gmra.mxu0 %v1368
      %v2095 = vpop.f32.mrf.mxu0
      %v2096 = vadd.f32 %v1971, %v2095
      %2097 = vmatmul.f32.gmra.mxu0 %v1377
      %v2098 = vpop.f32.mrf.mxu0
      %v2099 = vadd.f32 %v1974, %v2098
      %2100 = vmatmul.f32.gmra.mxu0 %v1386
      %v2101 = vpop.f32.mrf.mxu0
      %v2102 = vadd.f32 %v1977, %v2101
      %2103 = vmatmul.f32.gmra.mxu0 %v1395
      %v2104 = vpop.f32.mrf.mxu0
      %v2105 = vadd.f32 %v1980, %v2104
      %2106 = vmatmul.f32.gmra.mxu0 %v1404
      %v2107 = vpop.f32.mrf.mxu0
      %v2108 = vadd.f32 %v1983, %v2107
      %2109 = vmatmul.f32.gmra.mxu0 %v1413
      %v2110 = vpop.f32.mrf.mxu0
      %v2111 = vadd.f32 %v1986, %v2110
      %2112 = vmatmul.f32.gmra.mxu0 %v1422
      %v2113 = vpop.f32.mrf.mxu0
      %v2114 = vadd.f32 %v1989, %v2113
      %2115 = vmatmul.f32.gmra.mxu0 %v1431
      %v2116 = vpop.f32.mrf.mxu0
      %v2117 = vadd.f32 %v1992, %v2116
      %2118 = vmatmul.f32.gmra.mxu0 %v1440
      %v2119 = vpop.f32.mrf.mxu0
      %v2120 = vadd.f32 %v1995, %v2119
      %2121 = vmatmul.f32.gmra.mxu0 %v1449
      %v2122 = vpop.f32.mrf.mxu0
      %v2123 = vadd.f32 %v1998, %v2122
      %2124 = vmatmul.f32.gmra.mxu0 %v1458
      %v2125 = vpop.f32.mrf.mxu0
      %v2126 = vadd.f32 %v2001, %v2125
      %2127 = vmatmul.f32.gmra.mxu0 %v1467
      %v2128 = vpop.f32.mrf.mxu0
      %v2129 = vadd.f32 %v2004, %v2128
      %2130 = vmatmul.f32.gmra.mxu0 %v1476
      %v2131 = vpop.f32.mrf.mxu0
      %v2132 = vadd.f32 %v2007, %v2131
      %2133 = vmatmul.f32.gmra.mxu0 %v1485
      %v2134 = vpop.f32.mrf.mxu0
      %v2135 = vadd.f32 %v2010, %v2134
      %2136 = vmatmul.f32.gmra.mxu0 %v1494
      %v2137 = vpop.f32.mrf.mxu0
      %v2138 = vadd.f32 %v2013, %v2137
      %2139 = vmatmul.f32.gmra.mxu0 %v1503
      %v2140 = vpop.f32.mrf.mxu0
      %v2141 = vadd.f32 %v2016, %v2140
      %2142 = vmatmul.f32.gmra.mxu0 %v1512
      %v2143 = vpop.f32.mrf.mxu0
      %v2144 = vadd.f32 %v2019, %v2143
      %2145 = vmatmul.f32.gmra.mxu0 %v1521
      %v2146 = vpop.f32.mrf.mxu0
      %v2147 = vadd.f32 %v2022, %v2146
      %2148 = vmatmul.f32.gmra.mxu0 %v1530
      %v2149 = vpop.f32.mrf.mxu0
      %v2150 = vadd.f32 %v2025, %v2149
      %2151 = vmatmul.f32.gmra.mxu0 %v1539
      %v2152 = vpop.f32.mrf.mxu0
      %v2153 = vadd.f32 %v2028, %v2152
      %2154 = vmatmul.f32.gmra.mxu0 %v1548
      %v2155 = vpop.f32.mrf.mxu0
      %v2156 = vadd.f32 %v2031, %v2155
      %2157 = vmatmul.f32.gmra.mxu0 %v1557
      %v2158 = vpop.f32.mrf.mxu0
      %v2159 = vadd.f32 %v2034, %v2158
      %2160 = vmatmul.f32.gmra.mxu0 %v1566
      %v2161 = vpop.f32.mrf.mxu0
      %v2162 = vadd.f32 %v2037, %v2161
      %2163 = vmatmul.f32.gmra.mxu0 %v1575
      %v2164 = vpop.f32.mrf.mxu0
      %v2165 = vadd.f32 %v2040, %v2164
      %2166 = vmatmul.f32.gmra.mxu0 %v1584
      %v2167 = vpop.f32.mrf.mxu0
      %v2168 = vadd.f32 %v2043, %v2167
      %2169 = vmatmul.f32.gmra.mxu0 %v1593
      %v2170 = vpop.f32.mrf.mxu0
      %v2171 = vadd.f32 %v2046, %v2170
      %2172 = vmatmul.f32.gmra.mxu0 %v1602
      %v2173 = vpop.f32.mrf.mxu0
      %v2174 = vadd.f32 %v2049, %v2173
      %2175 = vmatmul.f32.gmra.mxu0 %v1611
      %v2176 = vpop.f32.mrf.mxu0
      %v2177 = vadd.f32 %v2052, %v2176
      %2178 = vmatmul.f32.gmra.mxu0 %v1620
      %v2179 = vpop.f32.mrf.mxu0
      %v2180 = vadd.f32 %v2055, %v2179
      %2181 = vmatmul.f32.gmra.mxu0 %v1629
      %v2182 = vpop.f32.mrf.mxu0
      %v2183 = vadd.f32 %v2058, %v2182
      %2184 = vmatmul.f32.gmra.mxu0 %v1638
      %v2185 = vpop.f32.mrf.mxu0
      %v2186 = vadd.f32 %v2061, %v2185
      %2187 = vmatmul.f32.gmra.mxu0 %v1647
      %v2188 = vpop.f32.mrf.mxu0
      %v2189 = vadd.f32 %v2064, %v2188
      %2190 = vmatmul.f32.gmra.mxu0 %v1656
      %v2191 = vpop.f32.mrf.mxu0
      %v2192 = vadd.f32 %v2067, %v2191
      %2193 = vmatmul.f32.gmra.mxu0 %v1665
      %v2194 = vpop.f32.mrf.mxu0
      %v2195 = vadd.f32 %v2070, %v2194
      %2196 = vmatmul.f32.gmra.mxu0 %v1674
      %v2197 = vpop.f32.mrf.mxu0
      %v2198 = vadd.f32 %v2073, %v2197
      %2199 = vdwg.mxu0
      %2200 = vmatpush.msra.mxu0 %v1744
      %2201 = vmatpush.msra.mxu0 %v1743
      %2202 = vmatpush.msra.mxu0 %v1742
      %2203 = vmatpush.msra.mxu0 %v1741
      %2204 = vmatpush.msra.mxu0 %v1740
      %2205 = vmatpush.msra.mxu0 %v1739
      %2206 = vmatpush.msra.mxu0 %v1738
      %2207 = vmatpush.msra.mxu0 %v1737
      %2208 = vmatpush.msra.mxu0 %v1736
      %2209 = vmatpush.msra.mxu0 %v1735
      %2210 = vmatpush.msra.mxu0 %v1734
      %2211 = vmatpush.msra.mxu0 %v1733
      %2212 = vmatpush.msra.mxu0 %v1732
      %2213 = vmatpush.msra.mxu0 %v1731
      %2214 = vmatpush.msra.mxu0 %v1730
      %2215 = vmatpush.msra.mxu0 %v1729
      %2216 = vmatmul.f32.gmra.mxu0 %v1360
      %v2217 = vpop.f32.mrf.mxu0
      %v2218 = vadd.f32 %v2093, %v2217
      %2219 = vmatmul.f32.gmra.mxu0 %v1369
      %v2220 = vpop.f32.mrf.mxu0
      %v2221 = vadd.f32 %v2096, %v2220
      %2222 = vmatmul.f32.gmra.mxu0 %v1378
      %v2223 = vpop.f32.mrf.mxu0
      %v2224 = vadd.f32 %v2099, %v2223
      %2225 = vmatmul.f32.gmra.mxu0 %v1387
      %v2226 = vpop.f32.mrf.mxu0
      %v2227 = vadd.f32 %v2102, %v2226
      %2228 = vmatmul.f32.gmra.mxu0 %v1396
      %v2229 = vpop.f32.mrf.mxu0
      %v2230 = vadd.f32 %v2105, %v2229
      %2231 = vmatmul.f32.gmra.mxu0 %v1405
      %v2232 = vpop.f32.mrf.mxu0
      %v2233 = vadd.f32 %v2108, %v2232
      %2234 = vmatmul.f32.gmra.mxu0 %v1414
      %v2235 = vpop.f32.mrf.mxu0
      %v2236 = vadd.f32 %v2111, %v2235
      %2237 = vmatmul.f32.gmra.mxu0 %v1423
      %v2238 = vpop.f32.mrf.mxu0
      %v2239 = vadd.f32 %v2114, %v2238
      %2240 = vmatmul.f32.gmra.mxu0 %v1432
      %v2241 = vpop.f32.mrf.mxu0
      %v2242 = vadd.f32 %v2117, %v2241
      %2243 = vmatmul.f32.gmra.mxu0 %v1441
      %v2244 = vpop.f32.mrf.mxu0
      %v2245 = vadd.f32 %v2120, %v2244
      %2246 = vmatmul.f32.gmra.mxu0 %v1450
      %v2247 = vpop.f32.mrf.mxu0
      %v2248 = vadd.f32 %v2123, %v2247
      %2249 = vmatmul.f32.gmra.mxu0 %v1459
      %v2250 = vpop.f32.mrf.mxu0
      %v2251 = vadd.f32 %v2126, %v2250
      %2252 = vmatmul.f32.gmra.mxu0 %v1468
      %v2253 = vpop.f32.mrf.mxu0
      %v2254 = vadd.f32 %v2129, %v2253
      %2255 = vmatmul.f32.gmra.mxu0 %v1477
      %v2256 = vpop.f32.mrf.mxu0
      %v2257 = vadd.f32 %v2132, %v2256
      %2258 = vmatmul.f32.gmra.mxu0 %v1486
      %v2259 = vpop.f32.mrf.mxu0
      %v2260 = vadd.f32 %v2135, %v2259
      %2261 = vmatmul.f32.gmra.mxu0 %v1495
      %v2262 = vpop.f32.mrf.mxu0
      %v2263 = vadd.f32 %v2138, %v2262
      %2264 = vmatmul.f32.gmra.mxu0 %v1504
      %v2265 = vpop.f32.mrf.mxu0
      %v2266 = vadd.f32 %v2141, %v2265
      %2267 = vmatmul.f32.gmra.mxu0 %v1513
      %v2268 = vpop.f32.mrf.mxu0
      %v2269 = vadd.f32 %v2144, %v2268
      %2270 = vmatmul.f32.gmra.mxu0 %v1522
      %v2271 = vpop.f32.mrf.mxu0
      %v2272 = vadd.f32 %v2147, %v2271
      %2273 = vmatmul.f32.gmra.mxu0 %v1531
      %v2274 = vpop.f32.mrf.mxu0
      %v2275 = vadd.f32 %v2150, %v2274
      %2276 = vmatmul.f32.gmra.mxu0 %v1540
      %v2277 = vpop.f32.mrf.mxu0
      %v2278 = vadd.f32 %v2153, %v2277
      %2279 = vmatmul.f32.gmra.mxu0 %v1549
      %v2280 = vpop.f32.mrf.mxu0
      %v2281 = vadd.f32 %v2156, %v2280
      %2282 = vmatmul.f32.gmra.mxu0 %v1558
      %v2283 = vpop.f32.mrf.mxu0
      %v2284 = vadd.f32 %v2159, %v2283
      %2285 = vmatmul.f32.gmra.mxu0 %v1567
      %v2286 = vpop.f32.mrf.mxu0
      %v2287 = vadd.f32 %v2162, %v2286
      %2288 = vmatmul.f32.gmra.mxu0 %v1576
      %v2289 = vpop.f32.mrf.mxu0
      %v2290 = vadd.f32 %v2165, %v2289
      %2291 = vmatmul.f32.gmra.mxu0 %v1585
      %v2292 = vpop.f32.mrf.mxu0
      %v2293 = vadd.f32 %v2168, %v2292
      %2294 = vmatmul.f32.gmra.mxu0 %v1594
      %v2295 = vpop.f32.mrf.mxu0
      %v2296 = vadd.f32 %v2171, %v2295
      %2297 = vmatmul.f32.gmra.mxu0 %v1603
      %v2298 = vpop.f32.mrf.mxu0
      %v2299 = vadd.f32 %v2174, %v2298
      %2300 = vmatmul.f32.gmra.mxu0 %v1612
      %v2301 = vpop.f32.mrf.mxu0
      %v2302 = vadd.f32 %v2177, %v2301
      %2303 = vmatmul.f32.gmra.mxu0 %v1621
      %v2304 = vpop.f32.mrf.mxu0
      %v2305 = vadd.f32 %v2180, %v2304
      %2306 = vmatmul.f32.gmra.mxu0 %v1630
      %v2307 = vpop.f32.mrf.mxu0
      %v2308 = vadd.f32 %v2183, %v2307
      %2309 = vmatmul.f32.gmra.mxu0 %v1639
      %v2310 = vpop.f32.mrf.mxu0
      %v2311 = vadd.f32 %v2186, %v2310
      %2312 = vmatmul.f32.gmra.mxu0 %v1648
      %v2313 = vpop.f32.mrf.mxu0
      %v2314 = vadd.f32 %v2189, %v2313
      %2315 = vmatmul.f32.gmra.mxu0 %v1657
      %v2316 = vpop.f32.mrf.mxu0
      %v2317 = vadd.f32 %v2192, %v2316
      %2318 = vmatmul.f32.gmra.mxu0 %v1666
      %v2319 = vpop.f32.mrf.mxu0
      %v2320 = vadd.f32 %v2195, %v2319
      %2321 = vmatmul.f32.gmra.mxu0 %v1675
      %v2322 = vpop.f32.mrf.mxu0
      %v2323 = vadd.f32 %v2198, %v2322
      %2324 = vdwg.mxu0
      %2325 = vmatpush.msra.mxu0 %v1760
      %2326 = vmatpush.msra.mxu0 %v1759
      %2327 = vmatpush.msra.mxu0 %v1758
      %2328 = vmatpush.msra.mxu0 %v1757
      %2329 = vmatpush.msra.mxu0 %v1756
      %2330 = vmatpush.msra.mxu0 %v1755
      %2331 = vmatpush.msra.mxu0 %v1754
      %2332 = vmatpush.msra.mxu0 %v1753
      %2333 = vmatpush.msra.mxu0 %v1752
      %2334 = vmatpush.msra.mxu0 %v1751
      %2335 = vmatpush.msra.mxu0 %v1750
      %2336 = vmatpush.msra.mxu0 %v1749
      %2337 = vmatpush.msra.mxu0 %v1748
      %2338 = vmatpush.msra.mxu0 %v1747
      %2339 = vmatpush.msra.mxu0 %v1746
      %2340 = vmatpush.msra.mxu0 %v1745
      %2341 = vmatmul.f32.gmra.mxu0 %v1361
      %v2342 = vpop.f32.mrf.mxu0
      %v2343 = vadd.f32 %v2218, %v2342
      %2344 = vmatmul.f32.gmra.mxu0 %v1370
      %v2345 = vpop.f32.mrf.mxu0
      %v2346 = vadd.f32 %v2221, %v2345
      %2347 = vmatmul.f32.gmra.mxu0 %v1379
      %v2348 = vpop.f32.mrf.mxu0
      %v2349 = vadd.f32 %v2224, %v2348
      %2350 = vmatmul.f32.gmra.mxu0 %v1388
      %v2351 = vpop.f32.mrf.mxu0
      %v2352 = vadd.f32 %v2227, %v2351
      %2353 = vmatmul.f32.gmra.mxu0 %v1397
      %v2354 = vpop.f32.mrf.mxu0
      %v2355 = vadd.f32 %v2230, %v2354
      %2356 = vmatmul.f32.gmra.mxu0 %v1406
      %v2357 = vpop.f32.mrf.mxu0
      %v2358 = vadd.f32 %v2233, %v2357
      %2359 = vmatmul.f32.gmra.mxu0 %v1415
      %v2360 = vpop.f32.mrf.mxu0
      %v2361 = vadd.f32 %v2236, %v2360
      %2362 = vmatmul.f32.gmra.mxu0 %v1424
      %v2363 = vpop.f32.mrf.mxu0
      %v2364 = vadd.f32 %v2239, %v2363
      %2365 = vmatmul.f32.gmra.mxu0 %v1433
      %v2366 = vpop.f32.mrf.mxu0
      %v2367 = vadd.f32 %v2242, %v2366
      %2368 = vmatmul.f32.gmra.mxu0 %v1442
      %v2369 = vpop.f32.mrf.mxu0
      %v2370 = vadd.f32 %v2245, %v2369
      %2371 = vmatmul.f32.gmra.mxu0 %v1451
      %v2372 = vpop.f32.mrf.mxu0
      %v2373 = vadd.f32 %v2248, %v2372
      %2374 = vmatmul.f32.gmra.mxu0 %v1460
      %v2375 = vpop.f32.mrf.mxu0
      %v2376 = vadd.f32 %v2251, %v2375
      %2377 = vmatmul.f32.gmra.mxu0 %v1469
      %v2378 = vpop.f32.mrf.mxu0
      %v2379 = vadd.f32 %v2254, %v2378
      %2380 = vmatmul.f32.gmra.mxu0 %v1478
      %v2381 = vpop.f32.mrf.mxu0
      %v2382 = vadd.f32 %v2257, %v2381
      %2383 = vmatmul.f32.gmra.mxu0 %v1487
      %v2384 = vpop.f32.mrf.mxu0
      %v2385 = vadd.f32 %v2260, %v2384
      %2386 = vmatmul.f32.gmra.mxu0 %v1496
      %v2387 = vpop.f32.mrf.mxu0
      %v2388 = vadd.f32 %v2263, %v2387
      %2389 = vmatmul.f32.gmra.mxu0 %v1505
      %v2390 = vpop.f32.mrf.mxu0
      %v2391 = vadd.f32 %v2266, %v2390
      %2392 = vmatmul.f32.gmra.mxu0 %v1514
      %v2393 = vpop.f32.mrf.mxu0
      %v2394 = vadd.f32 %v2269, %v2393
      %2395 = vmatmul.f32.gmra.mxu0 %v1523
      %v2396 = vpop.f32.mrf.mxu0
      %v2397 = vadd.f32 %v2272, %v2396
      %2398 = vmatmul.f32.gmra.mxu0 %v1532
      %v2399 = vpop.f32.mrf.mxu0
      %v2400 = vadd.f32 %v2275, %v2399
      %2401 = vmatmul.f32.gmra.mxu0 %v1541
      %v2402 = vpop.f32.mrf.mxu0
      %v2403 = vadd.f32 %v2278, %v2402
      %2404 = vmatmul.f32.gmra.mxu0 %v1550
      %v2405 = vpop.f32.mrf.mxu0
      %v2406 = vadd.f32 %v2281, %v2405
      %2407 = vmatmul.f32.gmra.mxu0 %v1559
      %v2408 = vpop.f32.mrf.mxu0
      %v2409 = vadd.f32 %v2284, %v2408
      %2410 = vmatmul.f32.gmra.mxu0 %v1568
      %v2411 = vpop.f32.mrf.mxu0
      %v2412 = vadd.f32 %v2287, %v2411
      %2413 = vmatmul.f32.gmra.mxu0 %v1577
      %v2414 = vpop.f32.mrf.mxu0
      %v2415 = vadd.f32 %v2290, %v2414
      %2416 = vmatmul.f32.gmra.mxu0 %v1586
      %v2417 = vpop.f32.mrf.mxu0
      %v2418 = vadd.f32 %v2293, %v2417
      %2419 = vmatmul.f32.gmra.mxu0 %v1595
      %v2420 = vpop.f32.mrf.mxu0
      %v2421 = vadd.f32 %v2296, %v2420
      %2422 = vmatmul.f32.gmra.mxu0 %v1604
      %v2423 = vpop.f32.mrf.mxu0
      %v2424 = vadd.f32 %v2299, %v2423
      %2425 = vmatmul.f32.gmra.mxu0 %v1613
      %v2426 = vpop.f32.mrf.mxu0
      %v2427 = vadd.f32 %v2302, %v2426
      %2428 = vmatmul.f32.gmra.mxu0 %v1622
      %v2429 = vpop.f32.mrf.mxu0
      %v2430 = vadd.f32 %v2305, %v2429
      %2431 = vmatmul.f32.gmra.mxu0 %v1631
      %v2432 = vpop.f32.mrf.mxu0
      %v2433 = vadd.f32 %v2308, %v2432
      %2434 = vmatmul.f32.gmra.mxu0 %v1640
      %v2435 = vpop.f32.mrf.mxu0
      %v2436 = vadd.f32 %v2311, %v2435
      %2437 = vmatmul.f32.gmra.mxu0 %v1649
      %v2438 = vpop.f32.mrf.mxu0
      %v2439 = vadd.f32 %v2314, %v2438
      %2440 = vmatmul.f32.gmra.mxu0 %v1658
      %v2441 = vpop.f32.mrf.mxu0
      %v2442 = vadd.f32 %v2317, %v2441
      %2443 = vmatmul.f32.gmra.mxu0 %v1667
      %v2444 = vpop.f32.mrf.mxu0
      %v2445 = vadd.f32 %v2320, %v2444
      %2446 = vmatmul.f32.gmra.mxu0 %v1676
      %v2447 = vpop.f32.mrf.mxu0
      %v2448 = vadd.f32 %v2323, %v2447
      %2449 = vdwg.mxu0
      %2450 = vmatpush.msra.mxu0 %v1776
      %2451 = vmatpush.msra.mxu0 %v1775
      %2452 = vmatpush.msra.mxu0 %v1774
      %2453 = vmatpush.msra.mxu0 %v1773
      %2454 = vmatpush.msra.mxu0 %v1772
      %2455 = vmatpush.msra.mxu0 %v1771
      %2456 = vmatpush.msra.mxu0 %v1770
      %2457 = vmatpush.msra.mxu0 %v1769
      %2458 = vmatpush.msra.mxu0 %v1768
      %2459 = vmatpush.msra.mxu0 %v1767
      %2460 = vmatpush.msra.mxu0 %v1766
      %2461 = vmatpush.msra.mxu0 %v1765
      %2462 = vmatpush.msra.mxu0 %v1764
      %2463 = vmatpush.msra.mxu0 %v1763
      %2464 = vmatpush.msra.mxu0 %v1762
      %2465 = vmatpush.msra.mxu0 %v1761
      %2466 = vmatmul.f32.gmra.mxu0 %v1362
      %v2467 = vpop.f32.mrf.mxu0
      %v2468 = vadd.f32 %v2343, %v2467
      %2469 = vmatmul.f32.gmra.mxu0 %v1371
      %v2470 = vpop.f32.mrf.mxu0
      %v2471 = vadd.f32 %v2346, %v2470
      %2472 = vmatmul.f32.gmra.mxu0 %v1380
      %v2473 = vpop.f32.mrf.mxu0
      %v2474 = vadd.f32 %v2349, %v2473
      %2475 = vmatmul.f32.gmra.mxu0 %v1389
      %v2476 = vpop.f32.mrf.mxu0
      %v2477 = vadd.f32 %v2352, %v2476
      %2478 = vmatmul.f32.gmra.mxu0 %v1398
      %v2479 = vpop.f32.mrf.mxu0
      %v2480 = vadd.f32 %v2355, %v2479
      %2481 = vmatmul.f32.gmra.mxu0 %v1407
      %v2482 = vpop.f32.mrf.mxu0
      %v2483 = vadd.f32 %v2358, %v2482
      %2484 = vmatmul.f32.gmra.mxu0 %v1416
      %v2485 = vpop.f32.mrf.mxu0
      %v2486 = vadd.f32 %v2361, %v2485
      %2487 = vmatmul.f32.gmra.mxu0 %v1425
      %v2488 = vpop.f32.mrf.mxu0
      %v2489 = vadd.f32 %v2364, %v2488
      %2490 = vmatmul.f32.gmra.mxu0 %v1434
      %v2491 = vpop.f32.mrf.mxu0
      %v2492 = vadd.f32 %v2367, %v2491
      %2493 = vmatmul.f32.gmra.mxu0 %v1443
      %v2494 = vpop.f32.mrf.mxu0
      %v2495 = vadd.f32 %v2370, %v2494
      %2496 = vmatmul.f32.gmra.mxu0 %v1452
      %v2497 = vpop.f32.mrf.mxu0
      %v2498 = vadd.f32 %v2373, %v2497
      %2499 = vmatmul.f32.gmra.mxu0 %v1461
      %v2500 = vpop.f32.mrf.mxu0
      %v2501 = vadd.f32 %v2376, %v2500
      %2502 = vmatmul.f32.gmra.mxu0 %v1470
      %v2503 = vpop.f32.mrf.mxu0
      %v2504 = vadd.f32 %v2379, %v2503
      %2505 = vmatmul.f32.gmra.mxu0 %v1479
      %v2506 = vpop.f32.mrf.mxu0
      %v2507 = vadd.f32 %v2382, %v2506
      %2508 = vmatmul.f32.gmra.mxu0 %v1488
      %v2509 = vpop.f32.mrf.mxu0
      %v2510 = vadd.f32 %v2385, %v2509
      %2511 = vmatmul.f32.gmra.mxu0 %v1497
      %v2512 = vpop.f32.mrf.mxu0
      %v2513 = vadd.f32 %v2388, %v2512
      %2514 = vmatmul.f32.gmra.mxu0 %v1506
      %v2515 = vpop.f32.mrf.mxu0
      %v2516 = vadd.f32 %v2391, %v2515
      %2517 = vmatmul.f32.gmra.mxu0 %v1515
      %v2518 = vpop.f32.mrf.mxu0
      %v2519 = vadd.f32 %v2394, %v2518
      %2520 = vmatmul.f32.gmra.mxu0 %v1524
      %v2521 = vpop.f32.mrf.mxu0
      %v2522 = vadd.f32 %v2397, %v2521
      %2523 = vmatmul.f32.gmra.mxu0 %v1533
      %v2524 = vpop.f32.mrf.mxu0
      %v2525 = vadd.f32 %v2400, %v2524
      %2526 = vmatmul.f32.gmra.mxu0 %v1542
      %v2527 = vpop.f32.mrf.mxu0
      %v2528 = vadd.f32 %v2403, %v2527
      %2529 = vmatmul.f32.gmra.mxu0 %v1551
      %v2530 = vpop.f32.mrf.mxu0
      %v2531 = vadd.f32 %v2406, %v2530
      %2532 = vmatmul.f32.gmra.mxu0 %v1560
      %v2533 = vpop.f32.mrf.mxu0
      %v2534 = vadd.f32 %v2409, %v2533
      %2535 = vmatmul.f32.gmra.mxu0 %v1569
      %v2536 = vpop.f32.mrf.mxu0
      %v2537 = vadd.f32 %v2412, %v2536
      %2538 = vmatmul.f32.gmra.mxu0 %v1578
      %v2539 = vpop.f32.mrf.mxu0
      %v2540 = vadd.f32 %v2415, %v2539
      %2541 = vmatmul.f32.gmra.mxu0 %v1587
      %v2542 = vpop.f32.mrf.mxu0
      %v2543 = vadd.f32 %v2418, %v2542
      %2544 = vmatmul.f32.gmra.mxu0 %v1596
      %v2545 = vpop.f32.mrf.mxu0
      %v2546 = vadd.f32 %v2421, %v2545
      %2547 = vmatmul.f32.gmra.mxu0 %v1605
      %v2548 = vpop.f32.mrf.mxu0
      %v2549 = vadd.f32 %v2424, %v2548
      %2550 = vmatmul.f32.gmra.mxu0 %v1614
      %v2551 = vpop.f32.mrf.mxu0
      %v2552 = vadd.f32 %v2427, %v2551
      %2553 = vmatmul.f32.gmra.mxu0 %v1623
      %v2554 = vpop.f32.mrf.mxu0
      %v2555 = vadd.f32 %v2430, %v2554
      %2556 = vmatmul.f32.gmra.mxu0 %v1632
      %v2557 = vpop.f32.mrf.mxu0
      %v2558 = vadd.f32 %v2433, %v2557
      %2559 = vmatmul.f32.gmra.mxu0 %v1641
      %v2560 = vpop.f32.mrf.mxu0
      %v2561 = vadd.f32 %v2436, %v2560
      %2562 = vmatmul.f32.gmra.mxu0 %v1650
      %v2563 = vpop.f32.mrf.mxu0
      %v2564 = vadd.f32 %v2439, %v2563
      %2565 = vmatmul.f32.gmra.mxu0 %v1659
      %v2566 = vpop.f32.mrf.mxu0
      %v2567 = vadd.f32 %v2442, %v2566
      %2568 = vmatmul.f32.gmra.mxu0 %v1668
      %v2569 = vpop.f32.mrf.mxu0
      %v2570 = vadd.f32 %v2445, %v2569
      %2571 = vmatmul.f32.gmra.mxu0 %v1677
      %v2572 = vpop.f32.mrf.mxu0
      %v2573 = vadd.f32 %v2448, %v2572
      %2574 = vdwg.mxu0
      %2575 = vmatpush.msra.mxu0 %v1792
      %2576 = vmatpush.msra.mxu0 %v1791
      %2577 = vmatpush.msra.mxu0 %v1790
      %2578 = vmatpush.msra.mxu0 %v1789
      %2579 = vmatpush.msra.mxu0 %v1788
      %2580 = vmatpush.msra.mxu0 %v1787
      %2581 = vmatpush.msra.mxu0 %v1786
      %2582 = vmatpush.msra.mxu0 %v1785
      %2583 = vmatpush.msra.mxu0 %v1784
      %2584 = vmatpush.msra.mxu0 %v1783
      %2585 = vmatpush.msra.mxu0 %v1782
      %2586 = vmatpush.msra.mxu0 %v1781
      %2587 = vmatpush.msra.mxu0 %v1780
      %2588 = vmatpush.msra.mxu0 %v1779
      %2589 = vmatpush.msra.mxu0 %v1778
      %2590 = vmatpush.msra.mxu0 %v1777
      %2591 = vmatmul.f32.gmra.mxu0 %v1363
      %v2592 = vpop.f32.mrf.mxu0
      %v2593 = vadd.f32 %v2468, %v2592
      %2594 = vmatmul.f32.gmra.mxu0 %v1372
      %v2595 = vpop.f32.mrf.mxu0
      %v2596 = vadd.f32 %v2471, %v2595
      %2597 = vmatmul.f32.gmra.mxu0 %v1381
      %v2598 = vpop.f32.mrf.mxu0
      %v2599 = vadd.f32 %v2474, %v2598
      %2600 = vmatmul.f32.gmra.mxu0 %v1390
      %v2601 = vpop.f32.mrf.mxu0
      %v2602 = vadd.f32 %v2477, %v2601
      %2603 = vmatmul.f32.gmra.mxu0 %v1399
      %v2604 = vpop.f32.mrf.mxu0
      %v2605 = vadd.f32 %v2480, %v2604
      %2606 = vmatmul.f32.gmra.mxu0 %v1408
      %v2607 = vpop.f32.mrf.mxu0
      %v2608 = vadd.f32 %v2483, %v2607
      %2609 = vmatmul.f32.gmra.mxu0 %v1417
      %v2610 = vpop.f32.mrf.mxu0
      %v2611 = vadd.f32 %v2486, %v2610
      %2612 = vmatmul.f32.gmra.mxu0 %v1426
      %v2613 = vpop.f32.mrf.mxu0
      %v2614 = vadd.f32 %v2489, %v2613
      %2615 = vmatmul.f32.gmra.mxu0 %v1435
      %v2616 = vpop.f32.mrf.mxu0
      %v2617 = vadd.f32 %v2492, %v2616
      %2618 = vmatmul.f32.gmra.mxu0 %v1444
      %v2619 = vpop.f32.mrf.mxu0
      %v2620 = vadd.f32 %v2495, %v2619
      %2621 = vmatmul.f32.gmra.mxu0 %v1453
      %v2622 = vpop.f32.mrf.mxu0
      %v2623 = vadd.f32 %v2498, %v2622
      %2624 = vmatmul.f32.gmra.mxu0 %v1462
      %v2625 = vpop.f32.mrf.mxu0
      %v2626 = vadd.f32 %v2501, %v2625
      %2627 = vmatmul.f32.gmra.mxu0 %v1471
      %v2628 = vpop.f32.mrf.mxu0
      %v2629 = vadd.f32 %v2504, %v2628
      %2630 = vmatmul.f32.gmra.mxu0 %v1480
      %v2631 = vpop.f32.mrf.mxu0
      %v2632 = vadd.f32 %v2507, %v2631
      %2633 = vmatmul.f32.gmra.mxu0 %v1489
      %v2634 = vpop.f32.mrf.mxu0
      %v2635 = vadd.f32 %v2510, %v2634
      %2636 = vmatmul.f32.gmra.mxu0 %v1498
      %v2637 = vpop.f32.mrf.mxu0
      %v2638 = vadd.f32 %v2513, %v2637
      %2639 = vmatmul.f32.gmra.mxu0 %v1507
      %v2640 = vpop.f32.mrf.mxu0
      %v2641 = vadd.f32 %v2516, %v2640
      %2642 = vmatmul.f32.gmra.mxu0 %v1516
      %v2643 = vpop.f32.mrf.mxu0
      %v2644 = vadd.f32 %v2519, %v2643
      %2645 = vmatmul.f32.gmra.mxu0 %v1525
      %v2646 = vpop.f32.mrf.mxu0
      %v2647 = vadd.f32 %v2522, %v2646
      %2648 = vmatmul.f32.gmra.mxu0 %v1534
      %v2649 = vpop.f32.mrf.mxu0
      %v2650 = vadd.f32 %v2525, %v2649
      %2651 = vmatmul.f32.gmra.mxu0 %v1543
      %v2652 = vpop.f32.mrf.mxu0
      %v2653 = vadd.f32 %v2528, %v2652
      %2654 = vmatmul.f32.gmra.mxu0 %v1552
      %v2655 = vpop.f32.mrf.mxu0
      %v2656 = vadd.f32 %v2531, %v2655
      %2657 = vmatmul.f32.gmra.mxu0 %v1561
      %v2658 = vpop.f32.mrf.mxu0
      %v2659 = vadd.f32 %v2534, %v2658
      %2660 = vmatmul.f32.gmra.mxu0 %v1570
      %v2661 = vpop.f32.mrf.mxu0
      %v2662 = vadd.f32 %v2537, %v2661
      %2663 = vmatmul.f32.gmra.mxu0 %v1579
      %v2664 = vpop.f32.mrf.mxu0
      %v2665 = vadd.f32 %v2540, %v2664
      %2666 = vmatmul.f32.gmra.mxu0 %v1588
      %v2667 = vpop.f32.mrf.mxu0
      %v2668 = vadd.f32 %v2543, %v2667
      %2669 = vmatmul.f32.gmra.mxu0 %v1597
      %v2670 = vpop.f32.mrf.mxu0
      %v2671 = vadd.f32 %v2546, %v2670
      %2672 = vmatmul.f32.gmra.mxu0 %v1606
      %v2673 = vpop.f32.mrf.mxu0
      %v2674 = vadd.f32 %v2549, %v2673
      %2675 = vmatmul.f32.gmra.mxu0 %v1615
      %v2676 = vpop.f32.mrf.mxu0
      %v2677 = vadd.f32 %v2552, %v2676
      %2678 = vmatmul.f32.gmra.mxu0 %v1624
      %v2679 = vpop.f32.mrf.mxu0
      %v2680 = vadd.f32 %v2555, %v2679
      %2681 = vmatmul.f32.gmra.mxu0 %v1633
      %v2682 = vpop.f32.mrf.mxu0
      %v2683 = vadd.f32 %v2558, %v2682
      %2684 = vmatmul.f32.gmra.mxu0 %v1642
      %v2685 = vpop.f32.mrf.mxu0
      %v2686 = vadd.f32 %v2561, %v2685
      %2687 = vmatmul.f32.gmra.mxu0 %v1651
      %v2688 = vpop.f32.mrf.mxu0
      %v2689 = vadd.f32 %v2564, %v2688
      %2690 = vmatmul.f32.gmra.mxu0 %v1660
      %v2691 = vpop.f32.mrf.mxu0
      %v2692 = vadd.f32 %v2567, %v2691
      %2693 = vmatmul.f32.gmra.mxu0 %v1669
      %v2694 = vpop.f32.mrf.mxu0
      %v2695 = vadd.f32 %v2570, %v2694
      %2696 = vmatmul.f32.gmra.mxu0 %v1678
      %v2697 = vpop.f32.mrf.mxu0
      %v2698 = vadd.f32 %v2573, %v2697
      %2699 = vdwg.mxu0
      %2700 = vmatpush.msra.mxu0 %v1808
      %2701 = vmatpush.msra.mxu0 %v1807
      %2702 = vmatpush.msra.mxu0 %v1806
      %2703 = vmatpush.msra.mxu0 %v1805
      %2704 = vmatpush.msra.mxu0 %v1804
      %2705 = vmatpush.msra.mxu0 %v1803
      %2706 = vmatpush.msra.mxu0 %v1802
      %2707 = vmatpush.msra.mxu0 %v1801
      %2708 = vmatpush.msra.mxu0 %v1800
      %2709 = vmatpush.msra.mxu0 %v1799
      %2710 = vmatpush.msra.mxu0 %v1798
      %2711 = vmatpush.msra.mxu0 %v1797
      %2712 = vmatpush.msra.mxu0 %v1796
      %2713 = vmatpush.msra.mxu0 %v1795
      %2714 = vmatpush.msra.mxu0 %v1794
      %2715 = vmatpush.msra.mxu0 %v1793
      %2716 = vmatmul.f32.gmra.mxu0 %v1364
      %v2717 = vpop.f32.mrf.mxu0
      %v2718 = vadd.f32 %v2593, %v2717
      %2719 = vmatmul.f32.gmra.mxu0 %v1373
      %v2720 = vpop.f32.mrf.mxu0
      %v2721 = vadd.f32 %v2596, %v2720
      %2722 = vmatmul.f32.gmra.mxu0 %v1382
      %v2723 = vpop.f32.mrf.mxu0
      %v2724 = vadd.f32 %v2599, %v2723
      %2725 = vmatmul.f32.gmra.mxu0 %v1391
      %v2726 = vpop.f32.mrf.mxu0
      %v2727 = vadd.f32 %v2602, %v2726
      %2728 = vmatmul.f32.gmra.mxu0 %v1400
      %v2729 = vpop.f32.mrf.mxu0
      %v2730 = vadd.f32 %v2605, %v2729
      %2731 = vmatmul.f32.gmra.mxu0 %v1409
      %v2732 = vpop.f32.mrf.mxu0
      %v2733 = vadd.f32 %v2608, %v2732
      %2734 = vmatmul.f32.gmra.mxu0 %v1418
      %v2735 = vpop.f32.mrf.mxu0
      %v2736 = vadd.f32 %v2611, %v2735
      %2737 = vmatmul.f32.gmra.mxu0 %v1427
      %v2738 = vpop.f32.mrf.mxu0
      %v2739 = vadd.f32 %v2614, %v2738
      %2740 = vmatmul.f32.gmra.mxu0 %v1436
      %v2741 = vpop.f32.mrf.mxu0
      %v2742 = vadd.f32 %v2617, %v2741
      %2743 = vmatmul.f32.gmra.mxu0 %v1445
      %v2744 = vpop.f32.mrf.mxu0
      %v2745 = vadd.f32 %v2620, %v2744
      %2746 = vmatmul.f32.gmra.mxu0 %v1454
      %v2747 = vpop.f32.mrf.mxu0
      %v2748 = vadd.f32 %v2623, %v2747
      %2749 = vmatmul.f32.gmra.mxu0 %v1463
      %v2750 = vpop.f32.mrf.mxu0
      %v2751 = vadd.f32 %v2626, %v2750
      %2752 = vmatmul.f32.gmra.mxu0 %v1472
      %v2753 = vpop.f32.mrf.mxu0
      %v2754 = vadd.f32 %v2629, %v2753
      %2755 = vmatmul.f32.gmra.mxu0 %v1481
      %v2756 = vpop.f32.mrf.mxu0
      %v2757 = vadd.f32 %v2632, %v2756
      %2758 = vmatmul.f32.gmra.mxu0 %v1490
      %v2759 = vpop.f32.mrf.mxu0
      %v2760 = vadd.f32 %v2635, %v2759
      %2761 = vmatmul.f32.gmra.mxu0 %v1499
      %v2762 = vpop.f32.mrf.mxu0
      %v2763 = vadd.f32 %v2638, %v2762
      %2764 = vmatmul.f32.gmra.mxu0 %v1508
      %v2765 = vpop.f32.mrf.mxu0
      %v2766 = vadd.f32 %v2641, %v2765
      %2767 = vmatmul.f32.gmra.mxu0 %v1517
      %v2768 = vpop.f32.mrf.mxu0
      %v2769 = vadd.f32 %v2644, %v2768
      %2770 = vmatmul.f32.gmra.mxu0 %v1526
      %v2771 = vpop.f32.mrf.mxu0
      %v2772 = vadd.f32 %v2647, %v2771
      %2773 = vmatmul.f32.gmra.mxu0 %v1535
      %v2774 = vpop.f32.mrf.mxu0
      %v2775 = vadd.f32 %v2650, %v2774
      %2776 = vmatmul.f32.gmra.mxu0 %v1544
      %v2777 = vpop.f32.mrf.mxu0
      %v2778 = vadd.f32 %v2653, %v2777
      %2779 = vmatmul.f32.gmra.mxu0 %v1553
      %v2780 = vpop.f32.mrf.mxu0
      %v2781 = vadd.f32 %v2656, %v2780
      %2782 = vmatmul.f32.gmra.mxu0 %v1562
      %v2783 = vpop.f32.mrf.mxu0
      %v2784 = vadd.f32 %v2659, %v2783
      %2785 = vmatmul.f32.gmra.mxu0 %v1571
      %v2786 = vpop.f32.mrf.mxu0
      %v2787 = vadd.f32 %v2662, %v2786
      %2788 = vmatmul.f32.gmra.mxu0 %v1580
      %v2789 = vpop.f32.mrf.mxu0
      %v2790 = vadd.f32 %v2665, %v2789
      %2791 = vmatmul.f32.gmra.mxu0 %v1589
      %v2792 = vpop.f32.mrf.mxu0
      %v2793 = vadd.f32 %v2668, %v2792
      %2794 = vmatmul.f32.gmra.mxu0 %v1598
      %v2795 = vpop.f32.mrf.mxu0
      %v2796 = vadd.f32 %v2671, %v2795
      %2797 = vmatmul.f32.gmra.mxu0 %v1607
      %v2798 = vpop.f32.mrf.mxu0
      %v2799 = vadd.f32 %v2674, %v2798
      %2800 = vmatmul.f32.gmra.mxu0 %v1616
      %v2801 = vpop.f32.mrf.mxu0
      %v2802 = vadd.f32 %v2677, %v2801
      %2803 = vmatmul.f32.gmra.mxu0 %v1625
      %v2804 = vpop.f32.mrf.mxu0
      %v2805 = vadd.f32 %v2680, %v2804
      %2806 = vmatmul.f32.gmra.mxu0 %v1634
      %v2807 = vpop.f32.mrf.mxu0
      %v2808 = vadd.f32 %v2683, %v2807
      %2809 = vmatmul.f32.gmra.mxu0 %v1643
      %v2810 = vpop.f32.mrf.mxu0
      %v2811 = vadd.f32 %v2686, %v2810
      %2812 = vmatmul.f32.gmra.mxu0 %v1652
      %v2813 = vpop.f32.mrf.mxu0
      %v2814 = vadd.f32 %v2689, %v2813
      %2815 = vmatmul.f32.gmra.mxu0 %v1661
      %v2816 = vpop.f32.mrf.mxu0
      %v2817 = vadd.f32 %v2692, %v2816
      %2818 = vmatmul.f32.gmra.mxu0 %v1670
      %v2819 = vpop.f32.mrf.mxu0
      %v2820 = vadd.f32 %v2695, %v2819
      %2821 = vmatmul.f32.gmra.mxu0 %v1679
      %v2822 = vpop.f32.mrf.mxu0
      %v2823 = vadd.f32 %v2698, %v2822
      %2824 = vdwg.mxu0
      %2825 = vmatpush.msra.mxu0 %v1824
      %2826 = vmatpush.msra.mxu0 %v1823
      %2827 = vmatpush.msra.mxu0 %v1822
      %2828 = vmatpush.msra.mxu0 %v1821
      %2829 = vmatpush.msra.mxu0 %v1820
      %2830 = vmatpush.msra.mxu0 %v1819
      %2831 = vmatpush.msra.mxu0 %v1818
      %2832 = vmatpush.msra.mxu0 %v1817
      %2833 = vmatpush.msra.mxu0 %v1816
      %2834 = vmatpush.msra.mxu0 %v1815
      %2835 = vmatpush.msra.mxu0 %v1814
      %2836 = vmatpush.msra.mxu0 %v1813
      %2837 = vmatpush.msra.mxu0 %v1812
      %2838 = vmatpush.msra.mxu0 %v1811
      %2839 = vmatpush.msra.mxu0 %v1810
      %2840 = vmatpush.msra.mxu0 %v1809
      %2841 = vmatmul.f32.gmra.mxu0 %v1365
      %v2842 = vpop.f32.mrf.mxu0
      %v2843 = vadd.f32 %v2718, %v2842
      %2844 = vmatmul.f32.gmra.mxu0 %v1374
      %v2845 = vpop.f32.mrf.mxu0
      %v2846 = vadd.f32 %v2721, %v2845
      %2847 = vmatmul.f32.gmra.mxu0 %v1383
      %v2848 = vpop.f32.mrf.mxu0
      %v2849 = vadd.f32 %v2724, %v2848
      %2850 = vmatmul.f32.gmra.mxu0 %v1392
      %v2851 = vpop.f32.mrf.mxu0
      %v2852 = vadd.f32 %v2727, %v2851
      %2853 = vmatmul.f32.gmra.mxu0 %v1401
      %v2854 = vpop.f32.mrf.mxu0
      %v2855 = vadd.f32 %v2730, %v2854
      %2856 = vmatmul.f32.gmra.mxu0 %v1410
      %v2857 = vpop.f32.mrf.mxu0
      %v2858 = vadd.f32 %v2733, %v2857
      %2859 = vmatmul.f32.gmra.mxu0 %v1419
      %v2860 = vpop.f32.mrf.mxu0
      %v2861 = vadd.f32 %v2736, %v2860
      %2862 = vmatmul.f32.gmra.mxu0 %v1428
      %v2863 = vpop.f32.mrf.mxu0
      %v2864 = vadd.f32 %v2739, %v2863
      %2865 = vmatmul.f32.gmra.mxu0 %v1437
      %v2866 = vpop.f32.mrf.mxu0
      %v2867 = vadd.f32 %v2742, %v2866
      %2868 = vmatmul.f32.gmra.mxu0 %v1446
      %v2869 = vpop.f32.mrf.mxu0
      %v2870 = vadd.f32 %v2745, %v2869
      %2871 = vmatmul.f32.gmra.mxu0 %v1455
      %v2872 = vpop.f32.mrf.mxu0
      %v2873 = vadd.f32 %v2748, %v2872
      %2874 = vmatmul.f32.gmra.mxu0 %v1464
      %v2875 = vpop.f32.mrf.mxu0
      %v2876 = vadd.f32 %v2751, %v2875
      %2877 = vmatmul.f32.gmra.mxu0 %v1473
      %v2878 = vpop.f32.mrf.mxu0
      %v2879 = vadd.f32 %v2754, %v2878
      %2880 = vmatmul.f32.gmra.mxu0 %v1482
      %v2881 = vpop.f32.mrf.mxu0
      %v2882 = vadd.f32 %v2757, %v2881
      %2883 = vmatmul.f32.gmra.mxu0 %v1491
      %v2884 = vpop.f32.mrf.mxu0
      %v2885 = vadd.f32 %v2760, %v2884
      %2886 = vmatmul.f32.gmra.mxu0 %v1500
      %v2887 = vpop.f32.mrf.mxu0
      %v2888 = vadd.f32 %v2763, %v2887
      %2889 = vmatmul.f32.gmra.mxu0 %v1509
      %v2890 = vpop.f32.mrf.mxu0
      %v2891 = vadd.f32 %v2766, %v2890
      %2892 = vmatmul.f32.gmra.mxu0 %v1518
      %v2893 = vpop.f32.mrf.mxu0
      %v2894 = vadd.f32 %v2769, %v2893
      %2895 = vmatmul.f32.gmra.mxu0 %v1527
      %v2896 = vpop.f32.mrf.mxu0
      %v2897 = vadd.f32 %v2772, %v2896
      %2898 = vmatmul.f32.gmra.mxu0 %v1536
      %v2899 = vpop.f32.mrf.mxu0
      %v2900 = vadd.f32 %v2775, %v2899
      %2901 = vmatmul.f32.gmra.mxu0 %v1545
      %v2902 = vpop.f32.mrf.mxu0
      %v2903 = vadd.f32 %v2778, %v2902
      %2904 = vmatmul.f32.gmra.mxu0 %v1554
      %v2905 = vpop.f32.mrf.mxu0
      %v2906 = vadd.f32 %v2781, %v2905
      %2907 = vmatmul.f32.gmra.mxu0 %v1563
      %v2908 = vpop.f32.mrf.mxu0
      %v2909 = vadd.f32 %v2784, %v2908
      %2910 = vmatmul.f32.gmra.mxu0 %v1572
      %v2911 = vpop.f32.mrf.mxu0
      %v2912 = vadd.f32 %v2787, %v2911
      %2913 = vmatmul.f32.gmra.mxu0 %v1581
      %v2914 = vpop.f32.mrf.mxu0
      %v2915 = vadd.f32 %v2790, %v2914
      %2916 = vmatmul.f32.gmra.mxu0 %v1590
      %v2917 = vpop.f32.mrf.mxu0
      %v2918 = vadd.f32 %v2793, %v2917
      %2919 = vmatmul.f32.gmra.mxu0 %v1599
      %v2920 = vpop.f32.mrf.mxu0
      %v2921 = vadd.f32 %v2796, %v2920
      %2922 = vmatmul.f32.gmra.mxu0 %v1608
      %v2923 = vpop.f32.mrf.mxu0
      %v2924 = vadd.f32 %v2799, %v2923
      %2925 = vmatmul.f32.gmra.mxu0 %v1617
      %v2926 = vpop.f32.mrf.mxu0
      %v2927 = vadd.f32 %v2802, %v2926
      %2928 = vmatmul.f32.gmra.mxu0 %v1626
      %v2929 = vpop.f32.mrf.mxu0
      %v2930 = vadd.f32 %v2805, %v2929
      %2931 = vmatmul.f32.gmra.mxu0 %v1635
      %v2932 = vpop.f32.mrf.mxu0
      %v2933 = vadd.f32 %v2808, %v2932
      %2934 = vmatmul.f32.gmra.mxu0 %v1644
      %v2935 = vpop.f32.mrf.mxu0
      %v2936 = vadd.f32 %v2811, %v2935
      %2937 = vmatmul.f32.gmra.mxu0 %v1653
      %v2938 = vpop.f32.mrf.mxu0
      %v2939 = vadd.f32 %v2814, %v2938
      %2940 = vmatmul.f32.gmra.mxu0 %v1662
      %v2941 = vpop.f32.mrf.mxu0
      %v2942 = vadd.f32 %v2817, %v2941
      %2943 = vmatmul.f32.gmra.mxu0 %v1671
      %v2944 = vpop.f32.mrf.mxu0
      %v2945 = vadd.f32 %v2820, %v2944
      %2946 = vmatmul.f32.gmra.mxu0 %v1680
      %v2947 = vpop.f32.mrf.mxu0
      %v2948 = vadd.f32 %v2823, %v2947
      %2949 = vdwg.mxu0
      %2950 = vst [vmem:[%s258] sm:$0xff] %v2843
      %2951 = vst [vmem:[%s258 + $0x8] sm:$0xff] %v2846
      %2952 = vst [vmem:[%s258 + $0x10] sm:$0xff] %v2849
      %2953 = vst [vmem:[%s258 + $0x18] sm:$0xff] %v2852
      %2954 = vst [vmem:[%s258 + $0x20] sm:$0xff] %v2855
      %2955 = vst [vmem:[%s258 + $0x28] sm:$0xff] %v2858
      %2956 = vst [vmem:[%s258 + $0x30] sm:$0xff] %v2861
      %2957 = vst [vmem:[%s258 + $0x38] sm:$0xff] %v2864
      %2958 = vst [vmem:[%s258 + $0x40] sm:$0xff] %v2867
      %2959 = vst [vmem:[%s258 + $0x48] sm:$0xff] %v2870
      %2960 = vst [vmem:[%s258 + $0x50] sm:$0xff] %v2873
      %2961 = vst [vmem:[%s258 + $0x58] sm:$0xff] %v2876
      %2962 = vst [vmem:[%s258 + $0x60] sm:$0xff] %v2879
      %2963 = vst [vmem:[%s258 + $0x68] sm:$0xff] %v2882
      %2964 = vst [vmem:[%s258 + $0x70] sm:$0xff] %v2885
      %2965 = vst [vmem:[%s258 + $0x78] sm:$0xff] %v2888
      %2966 = vst [vmem:[%s258 + $0x80] sm:$0xff] %v2891
      %2967 = vst [vmem:[%s258 + $0x88] sm:$0xff] %v2894
      %2968 = vst [vmem:[%s258 + $0x90] sm:$0xff] %v2897
      %2969 = vst [vmem:[%s258 + $0x98] sm:$0xff] %v2900
      %2970 = vst [vmem:[%s258 + $0xa0] sm:$0xff] %v2903
      %2971 = vst [vmem:[%s258 + $0xa8] sm:$0xff] %v2906
      %2972 = vst [vmem:[%s258 + $0xb0] sm:$0xff] %v2909
      %2973 = vst [vmem:[%s258 + $0xb8] sm:$0xff] %v2912
      %2974 = vst [vmem:[%s258 + $0xc0] sm:$0xff] %v2915
      %2975 = vst [vmem:[%s258 + $0xc8] sm:$0xff] %v2918
      %2976 = vst [vmem:[%s258 + $0xd0] sm:$0xff] %v2921
      %2977 = vst [vmem:[%s258 + $0xd8] sm:$0xff] %v2924
      %2978 = vst [vmem:[%s258 + $0xe0] sm:$0xff] %v2927
      %2979 = vst [vmem:[%s258 + $0xe8] sm:$0xff] %v2930
      %2980 = vst [vmem:[%s258 + $0xf0] sm:$0xff] %v2933
      %2981 = vst [vmem:[%s258 + $0xf8] sm:$0xff] %v2936
      %2982 = vst [vmem:[%s258 + $0x100] sm:$0xff] %v2939
      %2983 = vst [vmem:[%s258 + $0x108] sm:$0xff] %v2942
      %2984 = vst [vmem:[%s258 + $0x110] sm:$0xff] %v2945
      %2985 = vst [vmem:[%s258 + $0x118] sm:$0xff] %v2948
      %v2986 = vld [vmem:[%s0] sm:$0xff]
      %v2987 = vld [vmem:[%s0 + $0x8] sm:$0xff]
      %v2988 = vld [vmem:[%s0 + $0x10] sm:$0xff]
      %v2989 = vld [vmem:[%s0 + $0x18] sm:$0xff]
      %v2990 = vld [vmem:[%s0 + $0x20] sm:$0xff]
      %v2991 = vld [vmem:[%s0 + $0x28] sm:$0xff]
      %v2992 = vld [vmem:[%s0 + $0x30] sm:$0xff]
      %v2993 = vld [vmem:[%s0 + $0x38] sm:$0xff]
      %v2994 = vld [vmem:[%s0 + $0x40] sm:$0xff]
      %v2995 = vld [vmem:[%s0 + $0x48] sm:$0xff]
      %v2996 = vld [vmem:[%s0 + $0x50] sm:$0xff]
      %v2997 = vld [vmem:[%s0 + $0x58] sm:$0xff]
      %v2998 = vld [vmem:[%s0 + $0x60] sm:$0xff]
      %v2999 = vld [vmem:[%s0 + $0x68] sm:$0xff]
      %v3000 = vld [vmem:[%s0 + $0x70] sm:$0xff]
      %v3001 = vld [vmem:[%s0 + $0x78] sm:$0xff]
      %v3002 = vld [vmem:[%s0 + $0x80] sm:$0xff]
      %v3003 = vld [vmem:[%s0 + $0x88] sm:$0xff]
      %v3004 = vld [vmem:[%s0 + $0x90] sm:$0xff]
      %v3005 = vld [vmem:[%s0 + $0x98] sm:$0xff]
      %v3006 = vld [vmem:[%s0 + $0xa0] sm:$0xff]
      %v3007 = vld [vmem:[%s0 + $0xa8] sm:$0xff]
      %v3008 = vld [vmem:[%s0 + $0xb0] sm:$0xff]
      %v3009 = vld [vmem:[%s0 + $0xb8] sm:$0xff]
      %v3010 = vld [vmem:[%s0 + $0xc0] sm:$0xff]
      %v3011 = vld [vmem:[%s0 + $0xc8] sm:$0xff]
      %v3012 = vld [vmem:[%s0 + $0xd0] sm:$0xff]
      %v3013 = vld [vmem:[%s0 + $0xd8] sm:$0xff]
      %v3014 = vld [vmem:[%s0 + $0xe0] sm:$0xff]
      %v3015 = vld [vmem:[%s0 + $0xe8] sm:$0xff]
      %v3016 = vld [vmem:[%s0 + $0xf0] sm:$0xff]
      %v3017 = vld [vmem:[%s0 + $0xf8] sm:$0xff]
      %v3018 = vld [vmem:[%s0 + $0x100] sm:$0xff]
      %v3019 = vld [vmem:[%s0 + $0x108] sm:$0xff]
      %v3020 = vld [vmem:[%s0 + $0x110] sm:$0xff]
      %v3021 = vld [vmem:[%s0 + $0x118] sm:$0xff]
      %3023 = vset.pattern.permute.xlu0 0
      %3024 = vperm.xlu0 %3023, %v2986
      %v3025 = vpop.permute.xlu0 %3024
      %3028 = vset.pattern.permute.xlu0 0
      %3029 = vperm.xlu0 %3028, %v2987
      %v3030 = vpop.permute.xlu0 %3029
      %3033 = vset.pattern.permute.xlu0 0
      %3034 = vperm.xlu0 %3033, %v2988
      %v3035 = vpop.permute.xlu0 %3034
      %3038 = vset.pattern.permute.xlu0 0
      %3039 = vperm.xlu0 %3038, %v2989
      %v3040 = vpop.permute.xlu0 %3039
      %3043 = vset.pattern.permute.xlu0 0
      %3044 = vperm.xlu0 %3043, %v2990
      %v3045 = vpop.permute.xlu0 %3044
      %3048 = vset.pattern.permute.xlu0 0
      %3049 = vperm.xlu0 %3048, %v2991
      %v3050 = vpop.permute.xlu0 %3049
      %3053 = vset.pattern.permute.xlu0 0
      %3054 = vperm.xlu0 %3053, %v2992
      %v3055 = vpop.permute.xlu0 %3054
      %3058 = vset.pattern.permute.xlu0 0
      %3059 = vperm.xlu0 %3058, %v2993
      %v3060 = vpop.permute.xlu0 %3059
      %3063 = vset.pattern.permute.xlu0 0
      %3064 = vperm.xlu0 %3063, %v2994
      %v3065 = vpop.permute.xlu0 %3064
      %3068 = vset.pattern.permute.xlu0 0
      %3069 = vperm.xlu0 %3068, %v2995
      %v3070 = vpop.permute.xlu0 %3069
      %3073 = vset.pattern.permute.xlu0 0
      %3074 = vperm.xlu0 %3073, %v2996
      %v3075 = vpop.permute.xlu0 %3074
      %3078 = vset.pattern.permute.xlu0 0
      %3079 = vperm.xlu0 %3078, %v2997
      %v3080 = vpop.permute.xlu0 %3079
      %3083 = vset.pattern.permute.xlu0 0
      %3084 = vperm.xlu0 %3083, %v2998
      %v3085 = vpop.permute.xlu0 %3084
      %3088 = vset.pattern.permute.xlu0 0
      %3089 = vperm.xlu0 %3088, %v2999
      %v3090 = vpop.permute.xlu0 %3089
      %3093 = vset.pattern.permute.xlu0 0
      %3094 = vperm.xlu0 %3093, %v3000
      %v3095 = vpop.permute.xlu0 %3094
      %3098 = vset.pattern.permute.xlu0 0
      %3099 = vperm.xlu0 %3098, %v3001
      %v3100 = vpop.permute.xlu0 %3099
      %3103 = vset.pattern.permute.xlu0 0
      %3104 = vperm.xlu0 %3103, %v3002
      %v3105 = vpop.permute.xlu0 %3104
      %3108 = vset.pattern.permute.xlu0 0
      %3109 = vperm.xlu0 %3108, %v3003
      %v3110 = vpop.permute.xlu0 %3109
      %3113 = vset.pattern.permute.xlu0 0
      %3114 = vperm.xlu0 %3113, %v3004
      %v3115 = vpop.permute.xlu0 %3114
      %3118 = vset.pattern.permute.xlu0 0
      %3119 = vperm.xlu0 %3118, %v3005
      %v3120 = vpop.permute.xlu0 %3119
      %3123 = vset.pattern.permute.xlu0 0
      %3124 = vperm.xlu0 %3123, %v3006
      %v3125 = vpop.permute.xlu0 %3124
      %3128 = vset.pattern.permute.xlu0 0
      %3129 = vperm.xlu0 %3128, %v3007
      %v3130 = vpop.permute.xlu0 %3129
      %3133 = vset.pattern.permute.xlu0 0
      %3134 = vperm.xlu0 %3133, %v3008
      %v3135 = vpop.permute.xlu0 %3134
      %3138 = vset.pattern.permute.xlu0 0
      %3139 = vperm.xlu0 %3138, %v3009
      %v3140 = vpop.permute.xlu0 %3139
      %3143 = vset.pattern.permute.xlu0 0
      %3144 = vperm.xlu0 %3143, %v3010
      %v3145 = vpop.permute.xlu0 %3144
      %3148 = vset.pattern.permute.xlu0 0
      %3149 = vperm.xlu0 %3148, %v3011
      %v3150 = vpop.permute.xlu0 %3149
      %3153 = vset.pattern.permute.xlu0 0
      %3154 = vperm.xlu0 %3153, %v3012
      %v3155 = vpop.permute.xlu0 %3154
      %3158 = vset.pattern.permute.xlu0 0
      %3159 = vperm.xlu0 %3158, %v3013
      %v3160 = vpop.permute.xlu0 %3159
      %3163 = vset.pattern.permute.xlu0 0
      %3164 = vperm.xlu0 %3163, %v3014
      %v3165 = vpop.permute.xlu0 %3164
      %3168 = vset.pattern.permute.xlu0 0
      %3169 = vperm.xlu0 %3168, %v3015
      %v3170 = vpop.permute.xlu0 %3169
      %3173 = vset.pattern.permute.xlu0 0
      %3174 = vperm.xlu0 %3173, %v3016
      %v3175 = vpop.permute.xlu0 %3174
      %3178 = vset.pattern.permute.xlu0 0
      %3179 = vperm.xlu0 %3178, %v3017
      %v3180 = vpop.permute.xlu0 %3179
      %3183 = vset.pattern.permute.xlu0 0
      %3184 = vperm.xlu0 %3183, %v3018
      %v3185 = vpop.permute.xlu0 %3184
      %3188 = vset.pattern.permute.xlu0 0
      %3189 = vperm.xlu0 %3188, %v3019
      %v3190 = vpop.permute.xlu0 %3189
      %3193 = vset.pattern.permute.xlu0 0
      %3194 = vperm.xlu0 %3193, %v3020
      %v3195 = vpop.permute.xlu0 %3194
      %3198 = vset.pattern.permute.xlu0 0
      %3199 = vperm.xlu0 %3198, %v3021
      %v3200 = vpop.permute.xlu0 %3199
      %v3202 = vmul.f32 %v2843, %v3025
      %v3203 = vmul.f32 %v2846, %v3030
      %v3204 = vmul.f32 %v2849, %v3035
      %v3205 = vmul.f32 %v2852, %v3040
      %v3206 = vmul.f32 %v2855, %v3045
      %v3207 = vmul.f32 %v2858, %v3050
      %v3208 = vmul.f32 %v2861, %v3055
      %v3209 = vmul.f32 %v2864, %v3060
      %v3210 = vmul.f32 %v2867, %v3065
      %v3211 = vmul.f32 %v2870, %v3070
      %v3212 = vmul.f32 %v2873, %v3075
      %v3213 = vmul.f32 %v2876, %v3080
      %v3214 = vmul.f32 %v2879, %v3085
      %v3215 = vmul.f32 %v2882, %v3090
      %v3216 = vmul.f32 %v2885, %v3095
      %v3217 = vmul.f32 %v2888, %v3100
      %v3218 = vmul.f32 %v2891, %v3105
      %v3219 = vmul.f32 %v2894, %v3110
      %v3220 = vmul.f32 %v2897, %v3115
      %v3221 = vmul.f32 %v2900, %v3120
      %v3222 = vmul.f32 %v2903, %v3125
      %v3223 = vmul.f32 %v2906, %v3130
      %v3224 = vmul.f32 %v2909, %v3135
      %v3225 = vmul.f32 %v2912, %v3140
      %v3226 = vmul.f32 %v2915, %v3145
      %v3227 = vmul.f32 %v2918, %v3150
      %v3228 = vmul.f32 %v2921, %v3155
      %v3229 = vmul.f32 %v2924, %v3160
      %v3230 = vmul.f32 %v2927, %v3165
      %v3231 = vmul.f32 %v2930, %v3170
      %v3232 = vmul.f32 %v2933, %v3175
      %v3233 = vmul.f32 %v2936, %v3180
      %v3234 = vmul.f32 %v2939, %v3185
      %v3235 = vmul.f32 %v2942, %v3190
      %v3236 = vmul.f32 %v2945, %v3195
      %v3237 = vmul.f32 %v2948, %v3200
      %v3238 = vadd.f32 %v3202, %v3203
      %v3239 = vadd.f32 %v3238, %v3204
      %v3240 = vadd.f32 %v3239, %v3205
      %v3241 = vadd.f32 %v3240, %v3206
      %v3242 = vadd.f32 %v3241, %v3207
      %v3243 = vadd.f32 %v3242, %v3208
      %v3244 = vadd.f32 %v3243, %v3209
      %v3245 = vadd.f32 %v3244, %v3210
      %v3246 = vadd.f32 %v3245, %v3211
      %v3247 = vadd.f32 %v3246, %v3212
      %v3248 = vadd.f32 %v3247, %v3213
      %v3249 = vadd.f32 %v3248, %v3214
      %v3250 = vadd.f32 %v3249, %v3215
      %v3251 = vadd.f32 %v3250, %v3216
      %v3252 = vadd.f32 %v3251, %v3217
      %v3253 = vadd.f32 %v3252, %v3218
      %v3254 = vadd.f32 %v3253, %v3219
      %v3255 = vadd.f32 %v3254, %v3220
      %v3256 = vadd.f32 %v3255, %v3221
      %v3257 = vadd.f32 %v3256, %v3222
      %v3258 = vadd.f32 %v3257, %v3223
      %v3259 = vadd.f32 %v3258, %v3224
      %v3260 = vadd.f32 %v3259, %v3225
      %v3261 = vadd.f32 %v3260, %v3226
      %v3262 = vadd.f32 %v3261, %v3227
      %v3263 = vadd.f32 %v3262, %v3228
      %v3264 = vadd.f32 %v3263, %v3229
      %v3265 = vadd.f32 %v3264, %v3230
      %v3266 = vadd.f32 %v3265, %v3231
      %v3267 = vadd.f32 %v3266, %v3232
      %v3268 = vadd.f32 %v3267, %v3233
      %v3269 = vadd.f32 %v3268, %v3234
      %v3270 = vadd.f32 %v3269, %v3235
      %v3271 = vadd.f32 %v3270, %v3236
      %v3272 = vadd.f32 %v3271, %v3237
      %v3273 = vrot.slane %v3272, 4
      %v3274 = vadd.f32 %v3272, %v3273
      %v3275 = vrot.slane %v3274, 2
      %v3276 = vadd.f32 %v3274, %v3275
      %v3277 = vrot.slane %v3276, 1
      %v3278 = vadd.f32 %v3276, %v3277
      %3279 = vst [vmem:[%s262] sm:$0x1] %v3278
      %v3280 = vmul.f32 %v3202, %v2843
      %v3281 = vmul.f32 %v3203, %v2846
      %v3282 = vmul.f32 %v3204, %v2849
      %v3283 = vmul.f32 %v3205, %v2852
      %v3284 = vmul.f32 %v3206, %v2855
      %v3285 = vmul.f32 %v3207, %v2858
      %v3286 = vmul.f32 %v3208, %v2861
      %v3287 = vmul.f32 %v3209, %v2864
      %v3288 = vmul.f32 %v3210, %v2867
      %v3289 = vmul.f32 %v3211, %v2870
      %v3290 = vmul.f32 %v3212, %v2873
      %v3291 = vmul.f32 %v3213, %v2876
      %v3292 = vmul.f32 %v3214, %v2879
      %v3293 = vmul.f32 %v3215, %v2882
      %v3294 = vmul.f32 %v3216, %v2885
      %v3295 = vmul.f32 %v3217, %v2888
      %v3296 = vmul.f32 %v3218, %v2891
      %v3297 = vmul.f32 %v3219, %v2894
      %v3298 = vmul.f32 %v3220, %v2897
      %v3299 = vmul.f32 %v3221, %v2900
      %v3300 = vmul.f32 %v3222, %v2903
      %v3301 = vmul.f32 %v3223, %v2906
      %v3302 = vmul.f32 %v3224, %v2909
      %v3303 = vmul.f32 %v3225, %v2912
      %v3304 = vmul.f32 %v3226, %v2915
      %v3305 = vmul.f32 %v3227, %v2918
      %v3306 = vmul.f32 %v3228, %v2921
      %v3307 = vmul.f32 %v3229, %v2924
      %v3308 = vmul.f32 %v3230, %v2927
      %v3309 = vmul.f32 %v3231, %v2930
      %v3310 = vmul.f32 %v3232, %v2933
      %v3311 = vmul.f32 %v3233, %v2936
      %v3312 = vmul.f32 %v3234, %v2939
      %v3313 = vmul.f32 %v3235, %v2942
      %v3314 = vmul.f32 %v3236, %v2945
      %v3315 = vmul.f32 %v3237, %v2948
      %v3316 = vadd.f32 %v3280, %v3281
      %v3317 = vadd.f32 %v3316, %v3282
      %v3318 = vadd.f32 %v3317, %v3283
      %v3319 = vadd.f32 %v3318, %v3284
      %v3320 = vadd.f32 %v3319, %v3285
      %v3321 = vadd.f32 %v3320, %v3286
      %v3322 = vadd.f32 %v3321, %v3287
      %v3323 = vadd.f32 %v3322, %v3288
      %v3324 = vadd.f32 %v3323, %v3289
      %v3325 = vadd.f32 %v3324, %v3290
      %v3326 = vadd.f32 %v3325, %v3291
      %v3327 = vadd.f32 %v3326, %v3292
      %v3328 = vadd.f32 %v3327, %v3293
      %v3329 = vadd.f32 %v3328, %v3294
      %v3330 = vadd.f32 %v3329, %v3295
      %v3331 = vadd.f32 %v3330, %v3296
      %v3332 = vadd.f32 %v3331, %v3297
      %v3333 = vadd.f32 %v3332, %v3298
      %v3334 = vadd.f32 %v3333, %v3299
      %v3335 = vadd.f32 %v3334, %v3300
      %v3336 = vadd.f32 %v3335, %v3301
      %v3337 = vadd.f32 %v3336, %v3302
      %v3338 = vadd.f32 %v3337, %v3303
      %v3339 = vadd.f32 %v3338, %v3304
      %v3340 = vadd.f32 %v3339, %v3305
      %v3341 = vadd.f32 %v3340, %v3306
      %v3342 = vadd.f32 %v3341, %v3307
      %v3343 = vadd.f32 %v3342, %v3308
      %v3344 = vadd.f32 %v3343, %v3309
      %v3345 = vadd.f32 %v3344, %v3310
      %v3346 = vadd.f32 %v3345, %v3311
      %v3347 = vadd.f32 %v3346, %v3312
      %v3348 = vadd.f32 %v3347, %v3313
      %v3349 = vadd.f32 %v3348, %v3314
      %v3350 = vadd.f32 %v3349, %v3315
      %v3351 = vrot.slane %v3350, 4
      %v3352 = vadd.f32 %v3350, %v3351
      %v3353 = vrot.slane %v3352, 2
      %v3354 = vadd.f32 %v3352, %v3353
      %v3355 = vrot.slane %v3354, 1
      %v3356 = vadd.f32 %v3354, %v3355
      %3357 = vst [vmem:[%s262 + $0x1] sm:$0x1] %v3356
      %p3358 = scmp.lt.s32.totalorder %s18, 1
      %s3359 = scalar_select %p3358, %s18, 1
      %s3360 = smul.addr %s3359, 36
      %s3361 = smul.addr %s3360, 8
      %s3362 = scalar_lea.vmem %s5, %s3361
      %p3363 = scmp.lt.s32.totalorder %s18, 1
      %s3364 = scalar_select %p3363, %s18, 1
      %s3365 = smul.addr %s3364, 2
      %s3366 = scalar_lea.vmem %s6, %s3365
      // Predicated region
      $region41: #{double_conv_pallas.3} parent=39 // pred_check
        %p3367 = pneg %p146
      $region42: #{double_conv_pallas.3} parent=39 // pred_check_branch
        %3369 = sbr.rel (%p3367) target = $region44
      $region43: #{double_conv_pallas.3} parent=39 // pred_region
        _
      $region44: #{double_conv_pallas.3} parent=39 // pred_fallthru
        _
      // Predicated region
      $region45: #{double_conv_pallas.3} parent=39 // pred_check
        %p3370 = pneg %p172
      $region46: #{double_conv_pallas.3} parent=39 // pred_check_branch
        %3372 = sbr.rel (%p3370) target = $region48
      $region47: #{double_conv_pallas.3} parent=39 // pred_region
        _
      $region48: #{double_conv_pallas.3} parent=39 // pred_fallthru
        _
    $region40: #{double_conv_pallas.3} parent=5 // pred_fallthru
      _
    %p3373 = scmp.le.s32.totalorder 2, %s13
    // Predicated region
    $region49: #{double_conv_pallas.3} parent=5 // pred_check
      %p3374 = pneg %p3373
    $region50: #{double_conv_pallas.3} parent=5 // pred_check_branch
      %3376 = sbr.rel (%p3374) target = $region52
    $region51: #{double_conv_pallas.3} parent=5 // pred_region
      %s3377 = ssub.s32 %s13, 2
      // Predicated region
      $region53: #{double_conv_pallas.3} parent=51 // pred_check
        %p3378 = pneg %p152
      $region54: #{double_conv_pallas.3} parent=51 // pred_check_branch
        %3380 = sbr.rel (%p3378) target = $region56
      $region55: #{double_conv_pallas.3} parent=51 // pred_region
        %p3381 = scmp.lt.s32.totalorder %s19, 1
        %s3382 = scalar_select %p3381, %s19, 1
        %s3383 = smul.addr %s3382, 36
        %s3384 = smul.addr %s3383, 8
        %s3385 = scalar_lea.vmem %s5, %s3384
      $region56: #{double_conv_pallas.3} parent=51 // pred_fallthru
        _
      // Predicated region
      $region57: #{double_conv_pallas.3} parent=51 // pred_check
        %p3386 = pneg %p178
      $region58: #{double_conv_pallas.3} parent=51 // pred_check_branch
        %3388 = sbr.rel (%p3386) target = $region60
      $region59: #{double_conv_pallas.3} parent=51 // pred_region
        %p3389 = scmp.lt.s32.totalorder %s19, 1
        %s3390 = scalar_select %p3389, %s19, 1
        %s3391 = smul.addr %s3390, 2
        %s3392 = scalar_lea.vmem %s6, %s3391
      $region60: #{double_conv_pallas.3} parent=51 // pred_fallthru
        _
    $region52: #{double_conv_pallas.3} parent=5 // pred_fallthru
      _
  $region6: #{double_conv_pallas.3} parent=0 // loop_footer
    %s17 = sadd.s32 1, %s13
  $region7: #{double_conv_pallas.3} parent=0 // loop_footer_branch
    %12 = sbr.rel target = $region3
  $region8: #{double_conv_pallas.3} parent=0 // loop_exit
    _

</llo_original>
